<compile_context>
chip_gen: v5e
topology: v5e:2x2
jax: 0.10.0
libtpu: 0.0.40
codegen_flags: <defaults>
</compile_context>

<pallas_src>
import jax
import jax.numpy as jnp
from jax.experimental import pallas as pl
from jax.experimental.pallas import tpu as pltpu


def vae_kernel(x_ref, eps_ref,
               w1_ref, b1_ref,
               w2mu_ref, b2mu_ref, w2lv_ref, b2lv_ref,
               w3_ref, b3_ref, w4_ref, b4_ref,
               recon_ref, mu_ref, logvar_ref):
    """One batch tile of the fused VAE forward pass."""
    x = x_ref[...]                                   # bf16 [TB, D]

    # ---- encoder: Linear(D, H) -> LeakyReLU(0.2) ----
    h = jnp.dot(x, w1_ref[...], preferred_element_type=jnp.float32) + b1_ref[...]
    h = jnp.where(h > 0, h, 0.2 * h)                 # LeakyReLU(0.2), f32
    h_bf = h.astype(jnp.bfloat16)

    # ---- encoder head: Linear(H, 2Z) split into mu / logvar (== torch.chunk dim=1)
    mu = jnp.dot(h_bf, w2mu_ref[...], preferred_element_type=jnp.float32) + b2mu_ref[...]
    logvar = jnp.dot(h_bf, w2lv_ref[...], preferred_element_type=jnp.float32) + b2lv_ref[...]

    # ---- reparameterize: z = mu + exp(0.5 * logvar) * eps ----
    std = jnp.exp(0.5 * logvar)
    z = mu + std * eps_ref[...]
    z_bf = z.astype(jnp.bfloat16)

    # ---- decoder: Linear(Z, H) -> ReLU -> Linear(H, D) -> Sigmoid ----
    d = jnp.dot(z_bf, w3_ref[...], preferred_element_type=jnp.float32) + b3_ref[...]
    d = jnp.maximum(d, 0.0)                          # ReLU
    out = jnp.dot(d.astype(jnp.bfloat16), w4_ref[...],
                  preferred_element_type=jnp.float32) + b4_ref[...]

    # sigmoid(x) = 1 / (1 + exp(-x)); divide pushed onto the EUP slot.
    recon_ref[...] = pl.reciprocal(1.0 + jnp.exp(-out), approx=True)
    mu_ref[...] = mu
    logvar_ref[...] = logvar


def vae_forward(x, params, eps, *, batch_tile=128):
    """Runs the fused VAE kernel with a batch-tiled grid and VMEM-resident weights."""
    w1, b1, w2mu, b2mu, w2lv, b2lv, w3, b3, w4, b4 = params
    B, D = x.shape
    Z = eps.shape[1]
    H = w1.shape[1]

    TB = batch_tile
    n_tiles = pl.cdiv(B, TB)
    B_pad = n_tiles * TB

    # Cast matmul operands to bf16 (weights already bf16 from init); keep noise in f32.
    x_bf = x.astype(jnp.bfloat16)
    eps_f32 = eps.astype(jnp.float32)
    if B_pad != B:
        x_bf = jnp.pad(x_bf, ((0, B_pad - B), (0, 0)))
        eps_f32 = jnp.pad(eps_f32, ((0, B_pad - B), (0, 0)))

    # Batch-tiled specs for activations / outputs.
    x_spec = pl.BlockSpec((TB, D), lambda i: (i, 0))
    eps_spec = pl.BlockSpec((TB, Z), lambda i: (i, 0))
    recon_spec = pl.BlockSpec((TB, D), lambda i: (i, 0))
    lat_spec = pl.BlockSpec((TB, Z), lambda i: (i, 0))

    # Weights / biases: constant index_map -> resident in VMEM, DMA'd once.
    def resident(arr):
        return pl.BlockSpec(arr.shape, lambda i: (0, 0))

    weight_args = (w1, b1, w2mu, b2mu, w2lv, b2lv, w3, b3, w4, b4)
    weight_specs = [resident(a) for a in weight_args]

    def nbytes(a):
        return a.size * a.dtype.itemsize

    flops = 2 * B_pad * (D * H + 2 * H * Z + Z * H + H * D)
    transcendentals = B_pad * (Z + D)                     # exp(reparam) + exp(sigmoid)
    bytes_accessed = (sum(nbytes(a) for a in weight_args)
                      + nbytes(x_bf) + nbytes(eps_f32)
                      + B_pad * D * 4 + 2 * B_pad * Z * 4)

    recon, mu, logvar = pl.pallas_call(
        vae_kernel,
        out_shape=(
            jax.ShapeDtypeStruct((B_pad, D), jnp.float32),   # reconstruction
            jax.ShapeDtypeStruct((B_pad, Z), jnp.float32),   # mu
            jax.ShapeDtypeStruct((B_pad, Z), jnp.float32),   # logvar
        ),
        grid=(n_tiles,),
        in_specs=[x_spec, eps_spec] + weight_specs,
        out_specs=(recon_spec, lat_spec, lat_spec),
        compiler_params=pltpu.CompilerParams(
            dimension_semantics=("parallel",),            # megacore on v7x
            vmem_limit_bytes=48 * 1024 * 1024,            # safe on v5e/v6e/v7x
        ),
        cost_estimate=pl.CostEstimate(
            flops=flops,
            transcendentals=transcendentals,
            bytes_accessed=bytes_accessed,
        ),
    )(x_bf, eps_f32, *weight_args)

    if B_pad != B:
        recon, mu, logvar = recon[:B], mu[:B], logvar[:B]
    return recon, mu, logvar


def init_params(key, image_size, h_dim, z_dim):
    """PyTorch-style Linear init (uniform +/- 1/sqrt(fan_in)); weights stored [in, out]
    in bf16, biases [1, out] in f32. The encoder head is split into mu/logvar halves,
    matching torch.chunk(h, 2, dim=1) on a single Linear(h_dim, 2*z_dim)."""
    def linear(k, fan_in, fan_out):
        kw, kb = jax.random.split(k)
        bound = 1.0 / jnp.sqrt(fan_in)
        w = jax.random.uniform(kw, (fan_in, fan_out), jnp.float32, -bound, bound)
        b = jax.random.uniform(kb, (1, fan_out), jnp.float32, -bound, bound)
        return w.astype(jnp.bfloat16), b

    k1, k2, k3, k4 = jax.random.split(key, 4)
    w1, b1 = linear(k1, image_size, h_dim)            # encoder[0]
    w2, b2 = linear(k2, h_dim, 2 * z_dim)             # encoder[2]
    w3, b3 = linear(k3, z_dim, h_dim)                 # decoder[0]
    w4, b4 = linear(k4, h_dim, image_size)            # decoder[2]

    # Split the [H, 2Z] head: first Z columns -> mu, last Z columns -> logvar.
    w2mu, w2lv = w2[:, :z_dim], w2[:, z_dim:]
    b2mu, b2lv = b2[:, :z_dim], b2[:, z_dim:]
    return (w1, b1, w2mu, b2mu, w2lv, b2lv, w3, b3, w4, b4)


if __name__ == "__main__":
    # Small, TPU-friendly shapes consistent with the module's forward.
    # (Original defaults image_size=4490, h_dim=400, z_dim=400 would be padded to
    #  4608/512/512; here we use already-128-aligned small dims.)
    B, IMAGE_SIZE, H_DIM, Z_DIM = 256, 512, 256, 128

    key = jax.random.PRNGKey(0)
    k_x, k_eps, k_p = jax.random.split(key, 3)

    x = jax.random.uniform(k_x, (B, IMAGE_SIZE), jnp.float32)     # inputs in [0,1]
    eps = jax.random.normal(k_eps, (B, Z_DIM), jnp.float32)       # reparam noise
    params = init_params(k_p, IMAGE_SIZE, H_DIM, Z_DIM)

    recon, mu, logvar = vae_forward(x, params, eps, batch_tile=128)
    jax.block_until_ready((recon, mu, logvar))

    assert recon.shape == (B, IMAGE_SIZE)
    assert mu.shape == (B, Z_DIM) and logvar.shape == (B, Z_DIM)
    assert bool(jnp.all(jnp.isfinite(recon)))
    assert bool(jnp.all((recon >= 0.0) & (recon <= 1.0)))
    print("KERNEL_OK")
</pallas_src>

<mosaic_0001>
module attributes {stable_mosaic.version = 11 : i64} {
  func.func @vae_kernel(%arg0: i32, %arg1: memref<128x512xbf16, #tpu.memory_space<vmem>>, %arg2: memref<128x128xf32, #tpu.memory_space<vmem>>, %arg3: memref<512x256xbf16, #tpu.memory_space<vmem>>, %arg4: memref<1x256xf32, #tpu.memory_space<vmem>>, %arg5: memref<256x128xbf16, #tpu.memory_space<vmem>>, %arg6: memref<1x128xf32, #tpu.memory_space<vmem>>, %arg7: memref<256x128xbf16, #tpu.memory_space<vmem>>, %arg8: memref<1x128xf32, #tpu.memory_space<vmem>>, %arg9: memref<128x256xbf16, #tpu.memory_space<vmem>>, %arg10: memref<1x256xf32, #tpu.memory_space<vmem>>, %arg11: memref<256x512xbf16, #tpu.memory_space<vmem>>, %arg12: memref<1x512xf32, #tpu.memory_space<vmem>>, %arg13: memref<128x512xf32, #tpu.memory_space<vmem>>, %arg14: memref<128x128xf32, #tpu.memory_space<vmem>>, %arg15: memref<128x128xf32, #tpu.memory_space<vmem>>) attributes {dimension_semantics = [#tpu.dimension_semantics<parallel>], iteration_bounds = array<i64: 2>, scalar_prefetch = 0 : i64, scratch_operands = 0 : i64, tpu.core_type = #tpu.core_type<tc>, window_params = [{transform_indices = @transform_0, window_bounds = array<i64: 128, 512>}, {transform_indices = @transform_1, window_bounds = array<i64: 128, 128>}, {pipeline_mode = #tpu.pipeline_mode<synchronous>, transform_indices = @transform_2, window_bounds = array<i64: 512, 256>}, {pipeline_mode = #tpu.pipeline_mode<synchronous>, transform_indices = @transform_3, window_bounds = array<i64: 1, 256>}, {pipeline_mode = #tpu.pipeline_mode<synchronous>, transform_indices = @transform_4, window_bounds = array<i64: 256, 128>}, {pipeline_mode = #tpu.pipeline_mode<synchronous>, transform_indices = @transform_5, window_bounds = array<i64: 1, 128>}, {pipeline_mode = #tpu.pipeline_mode<synchronous>, transform_indices = @transform_6, window_bounds = array<i64: 256, 128>}, {pipeline_mode = #tpu.pipeline_mode<synchronous>, transform_indices = @transform_7, window_bounds = array<i64: 1, 128>}, {pipeline_mode = #tpu.pipeline_mode<synchronous>, transform_indices = @transform_8, window_bounds = array<i64: 128, 256>}, {pipeline_mode = #tpu.pipeline_mode<synchronous>, transform_indices = @transform_9, window_bounds = array<i64: 1, 256>}, {pipeline_mode = #tpu.pipeline_mode<synchronous>, transform_indices = @transform_10, window_bounds = array<i64: 256, 512>}, {pipeline_mode = #tpu.pipeline_mode<synchronous>, transform_indices = @transform_11, window_bounds = array<i64: 1, 512>}, {transform_indices = @transform_12, window_bounds = array<i64: 128, 512>}, {transform_indices = @transform_13, window_bounds = array<i64: 128, 128>}, {transform_indices = @transform_14, window_bounds = array<i64: 128, 128>}]} {
    %c0 = arith.constant 0 : index
    %c0_0 = arith.constant 0 : index
    %0 = vector.load %arg1[%c0, %c0_0] : memref<128x512xbf16, #tpu.memory_space<vmem>>, vector<128x512xbf16>
    %c0_1 = arith.constant 0 : index
    %c0_2 = arith.constant 0 : index
    %1 = vector.load %arg3[%c0_1, %c0_2] : memref<512x256xbf16, #tpu.memory_space<vmem>>, vector<512x256xbf16>
    %cst = arith.constant dense<0.000000e+00> : vector<128x256xf32>
    %2 = tpu.matmul %0, %1, %cst {dimension_numbers = #tpu.dot_dimension_numbers<[1], [0], [0], [1], [0, 0, 1, 1], [], []>} : vector<128x512xbf16>, vector<512x256xbf16>, vector<128x256xf32> -> vector<128x256xf32>
    %c0_3 = arith.constant 0 : index
    %c0_4 = arith.constant 0 : index
    %3 = vector.load %arg4[%c0_3, %c0_4] : memref<1x256xf32, #tpu.memory_space<vmem>>, vector<1x256xf32>
    %4 = vector.broadcast %3 : vector<1x256xf32> to vector<128x256xf32>
    %5 = arith.addf %2, %4 : vector<128x256xf32>
    %cst_5 = arith.constant 0.000000e+00 : f32
    %6 = vector.broadcast %cst_5 : f32 to vector<128x256xf32>
    %7 = arith.cmpf ogt, %5, %6 : vector<128x256xf32>
    %cst_6 = arith.constant 2.000000e-01 : f32
    %8 = vector.broadcast %cst_6 : f32 to vector<128x256xf32>
    %9 = arith.mulf %8, %5 : vector<128x256xf32>
    %10 = arith.select %7, %5, %9 : vector<128x256xi1>, vector<128x256xf32>
    %11 = arith.truncf %10 : vector<128x256xf32> to vector<128x256xbf16>
    %c0_7 = arith.constant 0 : index
    %c0_8 = arith.constant 0 : index
    %12 = vector.load %arg5[%c0_7, %c0_8] : memref<256x128xbf16, #tpu.memory_space<vmem>>, vector<256x128xbf16>
    %cst_9 = arith.constant dense<0.000000e+00> : vector<128x128xf32>
    %13 = tpu.matmul %11, %12, %cst_9 {dimension_numbers = #tpu.dot_dimension_numbers<[1], [0], [0], [1], [0, 0, 1, 1], [], []>} : vector<128x256xbf16>, vector<256x128xbf16>, vector<128x128xf32> -> vector<128x128xf32>
    %c0_10 = arith.constant 0 : index
    %c0_11 = arith.constant 0 : index
    %14 = vector.load %arg6[%c0_10, %c0_11] : memref<1x128xf32, #tpu.memory_space<vmem>>, vector<1x128xf32>
    %15 = vector.broadcast %14 : vector<1x128xf32> to vector<128x128xf32>
    %16 = arith.addf %13, %15 : vector<128x128xf32>
    %c0_12 = arith.constant 0 : index
    %c0_13 = arith.constant 0 : index
    %17 = vector.load %arg7[%c0_12, %c0_13] : memref<256x128xbf16, #tpu.memory_space<vmem>>, vector<256x128xbf16>
    %cst_14 = arith.constant dense<0.000000e+00> : vector<128x128xf32>
    %18 = tpu.matmul %11, %17, %cst_14 {dimension_numbers = #tpu.dot_dimension_numbers<[1], [0], [0], [1], [0, 0, 1, 1], [], []>} : vector<128x256xbf16>, vector<256x128xbf16>, vector<128x128xf32> -> vector<128x128xf32>
    %c0_15 = arith.constant 0 : index
    %c0_16 = arith.constant 0 : index
    %19 = vector.load %arg8[%c0_15, %c0_16] : memref<1x128xf32, #tpu.memory_space<vmem>>, vector<1x128xf32>
    %20 = vector.broadcast %19 : vector<1x128xf32> to vector<128x128xf32>
    %21 = arith.addf %18, %20 : vector<128x128xf32>
    %cst_17 = arith.constant 5.000000e-01 : f32
    %22 = vector.broadcast %cst_17 : f32 to vector<128x128xf32>
    %23 = arith.mulf %22, %21 : vector<128x128xf32>
    %24 = math.exp %23 : vector<128x128xf32>
    %c0_18 = arith.constant 0 : index
    %c0_19 = arith.constant 0 : index
    %25 = vector.load %arg2[%c0_18, %c0_19] : memref<128x128xf32, #tpu.memory_space<vmem>>, vector<128x128xf32>
    %26 = arith.mulf %24, %25 : vector<128x128xf32>
    %27 = arith.addf %16, %26 : vector<128x128xf32>
    %28 = arith.truncf %27 : vector<128x128xf32> to vector<128x128xbf16>
    %c0_20 = arith.constant 0 : index
    %c0_21 = arith.constant 0 : index
    %29 = vector.load %arg9[%c0_20, %c0_21] : memref<128x256xbf16, #tpu.memory_space<vmem>>, vector<128x256xbf16>
    %cst_22 = arith.constant dense<0.000000e+00> : vector<128x256xf32>
    %30 = tpu.matmul %28, %29, %cst_22 {dimension_numbers = #tpu.dot_dimension_numbers<[1], [0], [0], [1], [0, 0, 1, 1], [], []>} : vector<128x128xbf16>, vector<128x256xbf16>, vector<128x256xf32> -> vector<128x256xf32>
    %c0_23 = arith.constant 0 : index
    %c0_24 = arith.constant 0 : index
    %31 = vector.load %arg10[%c0_23, %c0_24] : memref<1x256xf32, #tpu.memory_space<vmem>>, vector<1x256xf32>
    %32 = vector.broadcast %31 : vector<1x256xf32> to vector<128x256xf32>
    %33 = arith.addf %30, %32 : vector<128x256xf32>
    %cst_25 = arith.constant 0.000000e+00 : f32
    %34 = vector.broadcast %cst_25 : f32 to vector<128x256xf32>
    %35 = arith.maximumf %33, %34 : vector<128x256xf32>
    %36 = arith.truncf %35 : vector<128x256xf32> to vector<128x256xbf16>
    %c0_26 = arith.constant 0 : index
    %c0_27 = arith.constant 0 : index
    %37 = vector.load %arg11[%c0_26, %c0_27] : memref<256x512xbf16, #tpu.memory_space<vmem>>, vector<256x512xbf16>
    %cst_28 = arith.constant dense<0.000000e+00> : vector<128x512xf32>
    %38 = tpu.matmul %36, %37, %cst_28 {dimension_numbers = #tpu.dot_dimension_numbers<[1], [0], [0], [1], [0, 0, 1, 1], [], []>} : vector<128x256xbf16>, vector<256x512xbf16>, vector<128x512xf32> -> vector<128x512xf32>
    %c0_29 = arith.constant 0 : index
    %c0_30 = arith.constant 0 : index
    %39 = vector.load %arg12[%c0_29, %c0_30] : memref<1x512xf32, #tpu.memory_space<vmem>>, vector<1x512xf32>
    %40 = vector.broadcast %39 : vector<1x512xf32> to vector<128x512xf32>
    %41 = arith.addf %38, %40 : vector<128x512xf32>
    %cst_31 = arith.constant 0.000000e+00 : f32
    %42 = vector.broadcast %cst_31 : f32 to vector<128x512xf32>
    %43 = arith.subf %42, %41 : vector<128x512xf32>
    %44 = math.exp %43 : vector<128x512xf32>
    %cst_32 = arith.constant 1.000000e+00 : f32
    %45 = vector.broadcast %cst_32 : f32 to vector<128x512xf32>
    %46 = arith.addf %45, %44 : vector<128x512xf32>
    %47 = tpu.reciprocal %46 {approx = true} : vector<128x512xf32> -> vector<128x512xf32>
    %c0_33 = arith.constant 0 : index
    %c0_34 = arith.constant 0 : index
    %48 = vector.load %arg13[%c0_33, %c0_34] : memref<128x512xf32, #tpu.memory_space<vmem>>, vector<128x512xf32>
    tpu.vector_store %arg13[%c0_33, %c0_34], %47 {strides = array<i32>} : memref<128x512xf32, #tpu.memory_space<vmem>>, vector<128x512xf32>,
    %c0_35 = arith.constant 0 : index
    %c0_36 = arith.constant 0 : index
    %49 = vector.load %arg14[%c0_35, %c0_36] : memref<128x128xf32, #tpu.memory_space<vmem>>, vector<128x128xf32>
    tpu.vector_store %arg14[%c0_35, %c0_36], %16 {strides = array<i32>} : memref<128x128xf32, #tpu.memory_space<vmem>>, vector<128x128xf32>,
    %c0_37 = arith.constant 0 : index
    %c0_38 = arith.constant 0 : index
    %50 = vector.load %arg15[%c0_37, %c0_38] : memref<128x128xf32, #tpu.memory_space<vmem>>, vector<128x128xf32>
    tpu.vector_store %arg15[%c0_37, %c0_38], %21 {strides = array<i32>} : memref<128x128xf32, #tpu.memory_space<vmem>>, vector<128x128xf32>,
    return
  }
  func.func @transform_0(%arg0: i32) -> (i32, i32) {
    %c0_i32 = arith.constant 0 : i32
    %c0_i32_0 = arith.constant 0 : i32
    return %arg0, %c0_i32 : i32, i32
  }
  func.func @transform_1(%arg0: i32) -> (i32, i32) {
    %c0_i32 = arith.constant 0 : i32
    %c0_i32_0 = arith.constant 0 : i32
    return %arg0, %c0_i32 : i32, i32
  }
  func.func @transform_2(%arg0: i32) -> (i32, i32) {
    %c0_i32 = arith.constant 0 : i32
    %c0_i32_0 = arith.constant 0 : i32
    %c0_i32_1 = arith.constant 0 : i32
    return %c0_i32, %c0_i32_0 : i32, i32
  }
  func.func @transform_3(%arg0: i32) -> (i32, i32) {
    %c0_i32 = arith.constant 0 : i32
    %c0_i32_0 = arith.constant 0 : i32
    %c0_i32_1 = arith.constant 0 : i32
    return %c0_i32, %c0_i32_0 : i32, i32
  }
  func.func @transform_4(%arg0: i32) -> (i32, i32) {
    %c0_i32 = arith.constant 0 : i32
    %c0_i32_0 = arith.constant 0 : i32
    %c0_i32_1 = arith.constant 0 : i32
    return %c0_i32, %c0_i32_0 : i32, i32
  }
  func.func @transform_5(%arg0: i32) -> (i32, i32) {
    %c0_i32 = arith.constant 0 : i32
    %c0_i32_0 = arith.constant 0 : i32
    %c0_i32_1 = arith.constant 0 : i32
    return %c0_i32, %c0_i32_0 : i32, i32
  }
  func.func @transform_6(%arg0: i32) -> (i32, i32) {
    %c0_i32 = arith.constant 0 : i32
    %c0_i32_0 = arith.constant 0 : i32
    %c0_i32_1 = arith.constant 0 : i32
    return %c0_i32, %c0_i32_0 : i32, i32
  }
  func.func @transform_7(%arg0: i32) -> (i32, i32) {
    %c0_i32 = arith.constant 0 : i32
    %c0_i32_0 = arith.constant 0 : i32
    %c0_i32_1 = arith.constant 0 : i32
    return %c0_i32, %c0_i32_0 : i32, i32
  }
  func.func @transform_8(%arg0: i32) -> (i32, i32) {
    %c0_i32 = arith.constant 0 : i32
    %c0_i32_0 = arith.constant 0 : i32
    %c0_i32_1 = arith.constant 0 : i32
    return %c0_i32, %c0_i32_0 : i32, i32
  }
  func.func @transform_9(%arg0: i32) -> (i32, i32) {
    %c0_i32 = arith.constant 0 : i32
    %c0_i32_0 = arith.constant 0 : i32
    %c0_i32_1 = arith.constant 0 : i32
    return %c0_i32, %c0_i32_0 : i32, i32
  }
  func.func @transform_10(%arg0: i32) -> (i32, i32) {
    %c0_i32 = arith.constant 0 : i32
    %c0_i32_0 = arith.constant 0 : i32
    %c0_i32_1 = arith.constant 0 : i32
    return %c0_i32, %c0_i32_0 : i32, i32
  }
  func.func @transform_11(%arg0: i32) -> (i32, i32) {
    %c0_i32 = arith.constant 0 : i32
    %c0_i32_0 = arith.constant 0 : i32
    %c0_i32_1 = arith.constant 0 : i32
    return %c0_i32, %c0_i32_0 : i32, i32
  }
  func.func @transform_12(%arg0: i32) -> (i32, i32) {
    %c0_i32 = arith.constant 0 : i32
    %c0_i32_0 = arith.constant 0 : i32
    return %arg0, %c0_i32 : i32, i32
  }
  func.func @transform_13(%arg0: i32) -> (i32, i32) {
    %c0_i32 = arith.constant 0 : i32
    %c0_i32_0 = arith.constant 0 : i32
    return %arg0, %c0_i32 : i32, i32
  }
  func.func @transform_14(%arg0: i32) -> (i32, i32) {
    %c0_i32 = arith.constant 0 : i32
    %c0_i32_0 = arith.constant 0 : i32
    return %arg0, %c0_i32 : i32, i32
  }
}

</mosaic_0001>

<llo_original>
// kernel: tpu_custom_call.1
$region0: #{tpu_custom_call.1}
  #allocation0 [shape = 'u32[]', space=smem, size = 0x4, offset = 0x4, fixed_abs, tag = 'smem constant byte address 0x4 - core index']
  #allocation1 [shape = 'u32[72,128]{1,0:T(1,128)}', space=vmem, size = 0x9000, scoped, tag = 'internal scratch']
  %s0 = inlined_call_operand.hbm [shape: bf16[256,512], index: 0, kind: input, shape index: {}]
  %s1 = inlined_call_operand.hbm [shape: f32[256,128], index: 1, kind: input, shape index: {}]
  %s2 = inlined_call_operand.hbm [shape: bf16[512,256], index: 2, kind: input, shape index: {}]
  %s3 = inlined_call_operand.vmem [shape: f32[1,256], index: 3, kind: input, shape index: {}]
  %s4 = inlined_call_operand.hbm [shape: bf16[256,128], index: 4, kind: input, shape index: {}]
  %s5 = inlined_call_operand.hbm [shape: f32[1,128], index: 5, kind: input, shape index: {}]
  %s6 = inlined_call_operand.hbm [shape: bf16[256,128], index: 6, kind: input, shape index: {}]
  %s7 = inlined_call_operand.hbm [shape: f32[1,128], index: 7, kind: input, shape index: {}]
  %s8 = inlined_call_operand.hbm [shape: bf16[128,256], index: 8, kind: input, shape index: {}]
  %s9 = inlined_call_operand.vmem [shape: f32[1,256], index: 9, kind: input, shape index: {}]
  %s10 = inlined_call_operand.hbm [shape: bf16[256,512], index: 10, kind: input, shape index: {}]
  %s11 = inlined_call_operand.vmem [shape: f32[1,512], index: 11, kind: input, shape index: {}]
  %s12 = inlined_call_operand.hbm [shape: f32[256,512], index: 12, kind: output, shape index: {0}]
  %s13 = inlined_call_operand.hbm [shape: f32[256,128], index: 13, kind: output, shape index: {1}]
  %s14 = inlined_call_operand.hbm [shape: f32[256,128], index: 14, kind: output, shape index: {2}]
  %15 = xla_tuple %s12, %s13, %s14
  %s16 = sld [smem:[#allocation0]]
  $region133: #{tpu_custom_call.1} parent=0
    _
  %s18 = ssub.s32 1, %s16
  %s19 = scalar_select 0, %s18, %s16
  $region1: #{tpu_custom_call.1} parent=0
    #allocation2 [shape = 'u8[262144]{0}', space=vmem, size = 0x40000, scoped, tag = 'input window, operand 0']
    #allocation3 [shape = 's32[2]{0}', space=sflag, size = 0x8, scoped, tag = 'scoped memory for tpu_custom_call.1']
    #allocation4 [shape = 's32[2]{0}', space=sflag, size = 0x8, scoped, tag = 'scoped memory for tpu_custom_call.1']
    #allocation5 [shape = 'u8[131072]{0}', space=vmem, size = 0x20000, scoped, tag = 'input window, operand 1']
    #allocation6 [shape = 's32[2]{0}', space=sflag, size = 0x8, scoped, tag = 'scoped memory for tpu_custom_call.1']
    #allocation7 [shape = 'u8[262144]{0}', space=vmem, size = 0x40000, scoped, tag = 'input window, operand 2, single buffered']
    #allocation8 [shape = 'u8[65536]{0}', space=vmem, size = 0x10000, scoped, tag = 'input window, operand 4, single buffered']
    #allocation9 [shape = 's32[1]{0}', space=sflag, size = 0x4, scoped, tag = 'scoped memory for tpu_custom_call.1']
    #allocation10 [shape = 'u8[512]{0}', space=vmem, size = 0x400, scoped, tag = 'input window, operand 5, single buffered']
    #allocation11 [shape = 'u8[65536]{0}', space=vmem, size = 0x10000, scoped, tag = 'input window, operand 6, single buffered']
    #allocation12 [shape = 's32[1]{0}', space=sflag, size = 0x4, scoped, tag = 'scoped memory for tpu_custom_call.1']
    #allocation13 [shape = 'u8[512]{0}', space=vmem, size = 0x400, scoped, tag = 'input window, operand 7, single buffered']
    #allocation14 [shape = 'u8[65536]{0}', space=vmem, size = 0x10000, scoped, tag = 'input window, operand 8, single buffered']
    #allocation15 [shape = 's32[1]{0}', space=sflag, size = 0x4, scoped, tag = 'scoped memory for tpu_custom_call.1']
    #allocation16 [shape = 'u8[262144]{0}', space=vmem, size = 0x40000, scoped, tag = 'input window, operand 10, single buffered']
    #allocation17 [shape = 'u8[524288]{0}', space=vmem, size = 0x80000, scoped, tag = 'output window, operand 0']
    #allocation18 [shape = 'u8[131072]{0}', space=vmem, size = 0x20000, scoped, tag = 'output window, operand 1']
    #allocation19 [shape = 's32[2]{0}', space=sflag, size = 0x8, scoped, tag = 'scoped memory for tpu_custom_call.1']
    #allocation20 [shape = 'u8[131072]{0}', space=vmem, size = 0x20000, scoped, tag = 'output window, operand 2']
    %20 = vsyncpa [#allocation3], 0
    %s21 = scalar_lea.sflag [#allocation3], 1
    %22 = vsyncpa %s21, 0
    %23 = vsyncpa [#allocation6], 0
    %s24 = scalar_lea.sflag [#allocation6], 1
    %25 = vsyncpa %s24, 0
    %26 = vsyncpa [#allocation9], 0
    %27 = vsyncpa [#allocation12], 0
    %28 = vsyncpa [#allocation15], 0
    %29 = vsyncpa [#allocation4], 0
    %s30 = scalar_lea.sflag [#allocation4], 1
    %31 = vsyncpa %s30, 0
    %32 = vsyncpa [#allocation19], 0
    %s33 = scalar_lea.sflag [#allocation19], 1
    %34 = vsyncpa %s33, 0
    loop: start=0, step=1, limit=4
    $region2: #{tpu_custom_call.1} parent=1 // loop_pre_header
      _
    $region3: #{tpu_custom_call.1} parent=1 // loop_header
      %s36 = sphi 0, %s40
      %p37 = scmp.ge.s32.totalorder %s36, 4
      %s46 = sphi 0, %s48
      %s49 = sphi 0, %s46
      %s50 = sphi 0, %s49
      %s66 = sphi 0, %s50
      %s72 = sphi 0, %s74
      %s75 = sphi 0, %s72
      %s76 = sphi 0, %s75
      %s92 = sphi 0, %s76
      %s96 = sphi 0, %s96
      %s98 = sphi 0, %s96
      %s99 = sphi 0, %s98
      %s113 = sphi 0, %s99
      %s117 = sphi 0, %s117
      %s119 = sphi 0, %s117
      %s120 = sphi 0, %s119
      %s134 = sphi 0, %s120
      %s138 = sphi 0, %s138
      %s140 = sphi 0, %s138
      %s141 = sphi 0, %s140
      %s155 = sphi 0, %s141
      %s159 = sphi 0, %s159
      %s161 = sphi 0, %s159
      %s162 = sphi 0, %s161
      %s176 = sphi 0, %s162
      %s180 = sphi 0, %s180
      %s182 = sphi 0, %s180
      %s183 = sphi 0, %s182
      %s197 = sphi 0, %s183
      %s201 = sphi 0, %s201
      %s203 = sphi 0, %s201
      %s204 = sphi 0, %s203
      %s218 = sphi 0, %s204
      %s222 = sphi 0, %s222
      %s224 = sphi 0, %s222
      %s225 = sphi 0, %s224
      %s239 = sphi 0, %s225
      %s243 = sphi 0, %s243
      %s245 = sphi 0, %s243
      %s246 = sphi 0, %s245
      %s260 = sphi 0, %s246
      %s264 = sphi 0, %s264
      %s266 = sphi 0, %s264
      %s267 = sphi 0, %s266
      %s281 = sphi 0, %s267
      %s285 = sphi 0, %s285
      %s287 = sphi 0, %s285
      %s288 = sphi 0, %s287
      %s302 = sphi 0, %s288
      %s308 = sphi 0, %s310
      %s311 = sphi 0, %s308
      %s312 = sphi 0, %s311
      %s328 = sphi 0, %s312
      %s334 = sphi 0, %s336
      %s337 = sphi 0, %s334
      %s338 = sphi 0, %s337
      %s354 = sphi 0, %s338
      %s360 = sphi 0, %s362
      %s363 = sphi 0, %s360
      %s364 = sphi 0, %s363
      %s380 = sphi 0, %s364
    $region4: #{tpu_custom_call.1} parent=1 // loop_header_branch
      %39 = sbr.rel (%p37) target = $region8
    $region5: #{tpu_custom_call.1} parent=1 // loop_body
      %s41 = ssub.s32 %s36, 1
      %s42 = ssub.s32 %s36, 2
      %s43 = sadd.s32 %s36, 1
      %s44 = ssub.s32 %s36, %s43
      %p45 = scmp.eq.s32.totalorder %s44, 0
      %s47 = sadd.s32 %s46, 1
      %s48 = scalar_select %p45, %s46, %s47
      %p51 = pneg %p45
      %p52 = scmp.eq.s32.totalorder %s36, 1
      %p53 = por %p51, %p52
      %p54 = scmp.ne.s32.totalorder %s46, %s49
      %p55 = scmp.eq.s32.totalorder %s36, 0
      %p56 = por %p54, %p55
      %p57 = scmp.ne.s32.totalorder %s46, %s49
      %p58 = scmp.eq.s32.totalorder %s41, 1
      %p59 = por %p57, %p58
      %p60 = scmp.ne.s32.totalorder %s49, %s50
      %p61 = scmp.eq.s32.totalorder %s41, 0
      %p62 = por %p60, %p61
      %p63 = scmp.ne.s32.totalorder %s49, %s50
      %p64 = scmp.eq.s32.totalorder %s42, 1
      %p65 = por %p63, %p64
      %p67 = scmp.ne.s32.totalorder %s50, %s66
      %p68 = scmp.eq.s32.totalorder %s42, 0
      %p69 = por %p67, %p68
      %s70 = ssub.s32 %s36, %s43
      %p71 = scmp.eq.s32.totalorder %s70, 0
      %s73 = sadd.s32 %s72, 1
      %s74 = scalar_select %p71, %s72, %s73
      %p77 = pneg %p71
      %p78 = scmp.eq.s32.totalorder %s36, 1
      %p79 = por %p77, %p78
      %p80 = scmp.ne.s32.totalorder %s72, %s75
      %p81 = scmp.eq.s32.totalorder %s36, 0
      %p82 = por %p80, %p81
      %p83 = scmp.ne.s32.totalorder %s72, %s75
      %p84 = scmp.eq.s32.totalorder %s41, 1
      %p85 = por %p83, %p84
      %p86 = scmp.ne.s32.totalorder %s75, %s76
      %p87 = scmp.eq.s32.totalorder %s41, 0
      %p88 = por %p86, %p87
      %p89 = scmp.ne.s32.totalorder %s75, %s76
      %p90 = scmp.eq.s32.totalorder %s42, 1
      %p91 = por %p89, %p90
      %p93 = scmp.ne.s32.totalorder %s76, %s92
      %p94 = scmp.eq.s32.totalorder %s42, 0
      %p95 = por %p93, %p94
      %s97 = sadd.s32 %s96, 1
      %p100 = scmp.eq.s32.totalorder %s36, 1
      %p101 = scmp.ne.s32.totalorder %s96, %s98
      %p102 = scmp.eq.s32.totalorder %s36, 0
      %p103 = por %p101, %p102
      %p104 = scmp.ne.s32.totalorder %s96, %s98
      %p105 = scmp.eq.s32.totalorder %s41, 1
      %p106 = por %p104, %p105
      %p107 = scmp.ne.s32.totalorder %s98, %s99
      %p108 = scmp.eq.s32.totalorder %s41, 0
      %p109 = por %p107, %p108
      %p110 = scmp.ne.s32.totalorder %s98, %s99
      %p111 = scmp.eq.s32.totalorder %s42, 1
      %p112 = por %p110, %p111
      %p114 = scmp.ne.s32.totalorder %s99, %s113
      %p115 = scmp.eq.s32.totalorder %s42, 0
      %p116 = por %p114, %p115
      %s118 = sadd.s32 %s117, 1
      %p121 = scmp.eq.s32.totalorder %s36, 1
      %p122 = scmp.ne.s32.totalorder %s117, %s119
      %p123 = scmp.eq.s32.totalorder %s36, 0
      %p124 = por %p122, %p123
      %p125 = scmp.ne.s32.totalorder %s117, %s119
      %p126 = scmp.eq.s32.totalorder %s41, 1
      %p127 = por %p125, %p126
      %p128 = scmp.ne.s32.totalorder %s119, %s120
      %p129 = scmp.eq.s32.totalorder %s41, 0
      %p130 = por %p128, %p129
      %p131 = scmp.ne.s32.totalorder %s119, %s120
      %p132 = scmp.eq.s32.totalorder %s42, 1
      %p133 = por %p131, %p132
      %p135 = scmp.ne.s32.totalorder %s120, %s134
      %p136 = scmp.eq.s32.totalorder %s42, 0
      %p137 = por %p135, %p136
      %s139 = sadd.s32 %s138, 1
      %p142 = scmp.eq.s32.totalorder %s36, 1
      %p143 = scmp.ne.s32.totalorder %s138, %s140
      %p144 = scmp.eq.s32.totalorder %s36, 0
      %p145 = por %p143, %p144
      %p146 = scmp.ne.s32.totalorder %s138, %s140
      %p147 = scmp.eq.s32.totalorder %s41, 1
      %p148 = por %p146, %p147
      %p149 = scmp.ne.s32.totalorder %s140, %s141
      %p150 = scmp.eq.s32.totalorder %s41, 0
      %p151 = por %p149, %p150
      %p152 = scmp.ne.s32.totalorder %s140, %s141
      %p153 = scmp.eq.s32.totalorder %s42, 1
      %p154 = por %p152, %p153
      %p156 = scmp.ne.s32.totalorder %s141, %s155
      %p157 = scmp.eq.s32.totalorder %s42, 0
      %p158 = por %p156, %p157
      %s160 = sadd.s32 %s159, 1
      %p163 = scmp.eq.s32.totalorder %s36, 1
      %p164 = scmp.ne.s32.totalorder %s159, %s161
      %p165 = scmp.eq.s32.totalorder %s36, 0
      %p166 = por %p164, %p165
      %p167 = scmp.ne.s32.totalorder %s159, %s161
      %p168 = scmp.eq.s32.totalorder %s41, 1
      %p169 = por %p167, %p168
      %p170 = scmp.ne.s32.totalorder %s161, %s162
      %p171 = scmp.eq.s32.totalorder %s41, 0
      %p172 = por %p170, %p171
      %p173 = scmp.ne.s32.totalorder %s161, %s162
      %p174 = scmp.eq.s32.totalorder %s42, 1
      %p175 = por %p173, %p174
      %p177 = scmp.ne.s32.totalorder %s162, %s176
      %p178 = scmp.eq.s32.totalorder %s42, 0
      %p179 = por %p177, %p178
      %s181 = sadd.s32 %s180, 1
      %p184 = scmp.eq.s32.totalorder %s36, 1
      %p185 = scmp.ne.s32.totalorder %s180, %s182
      %p186 = scmp.eq.s32.totalorder %s36, 0
      %p187 = por %p185, %p186
      %p188 = scmp.ne.s32.totalorder %s180, %s182
      %p189 = scmp.eq.s32.totalorder %s41, 1
      %p190 = por %p188, %p189
      %p191 = scmp.ne.s32.totalorder %s182, %s183
      %p192 = scmp.eq.s32.totalorder %s41, 0
      %p193 = por %p191, %p192
      %p194 = scmp.ne.s32.totalorder %s182, %s183
      %p195 = scmp.eq.s32.totalorder %s42, 1
      %p196 = por %p194, %p195
      %p198 = scmp.ne.s32.totalorder %s183, %s197
      %p199 = scmp.eq.s32.totalorder %s42, 0
      %p200 = por %p198, %p199
      %s202 = sadd.s32 %s201, 1
      %p205 = scmp.eq.s32.totalorder %s36, 1
      %p206 = scmp.ne.s32.totalorder %s201, %s203
      %p207 = scmp.eq.s32.totalorder %s36, 0
      %p208 = por %p206, %p207
      %p209 = scmp.ne.s32.totalorder %s201, %s203
      %p210 = scmp.eq.s32.totalorder %s41, 1
      %p211 = por %p209, %p210
      %p212 = scmp.ne.s32.totalorder %s203, %s204
      %p213 = scmp.eq.s32.totalorder %s41, 0
      %p214 = por %p212, %p213
      %p215 = scmp.ne.s32.totalorder %s203, %s204
      %p216 = scmp.eq.s32.totalorder %s42, 1
      %p217 = por %p215, %p216
      %p219 = scmp.ne.s32.totalorder %s204, %s218
      %p220 = scmp.eq.s32.totalorder %s42, 0
      %p221 = por %p219, %p220
      %s223 = sadd.s32 %s222, 1
      %p226 = scmp.eq.s32.totalorder %s36, 1
      %p227 = scmp.ne.s32.totalorder %s222, %s224
      %p228 = scmp.eq.s32.totalorder %s36, 0
      %p229 = por %p227, %p228
      %p230 = scmp.ne.s32.totalorder %s222, %s224
      %p231 = scmp.eq.s32.totalorder %s41, 1
      %p232 = por %p230, %p231
      %p233 = scmp.ne.s32.totalorder %s224, %s225
      %p234 = scmp.eq.s32.totalorder %s41, 0
      %p235 = por %p233, %p234
      %p236 = scmp.ne.s32.totalorder %s224, %s225
      %p237 = scmp.eq.s32.totalorder %s42, 1
      %p238 = por %p236, %p237
      %p240 = scmp.ne.s32.totalorder %s225, %s239
      %p241 = scmp.eq.s32.totalorder %s42, 0
      %p242 = por %p240, %p241
      %s244 = sadd.s32 %s243, 1
      %p247 = scmp.eq.s32.totalorder %s36, 1
      %p248 = scmp.ne.s32.totalorder %s243, %s245
      %p249 = scmp.eq.s32.totalorder %s36, 0
      %p250 = por %p248, %p249
      %p251 = scmp.ne.s32.totalorder %s243, %s245
      %p252 = scmp.eq.s32.totalorder %s41, 1
      %p253 = por %p251, %p252
      %p254 = scmp.ne.s32.totalorder %s245, %s246
      %p255 = scmp.eq.s32.totalorder %s41, 0
      %p256 = por %p254, %p255
      %p257 = scmp.ne.s32.totalorder %s245, %s246
      %p258 = scmp.eq.s32.totalorder %s42, 1
      %p259 = por %p257, %p258
      %p261 = scmp.ne.s32.totalorder %s246, %s260
      %p262 = scmp.eq.s32.totalorder %s42, 0
      %p263 = por %p261, %p262
      %s265 = sadd.s32 %s264, 1
      %p268 = scmp.eq.s32.totalorder %s36, 1
      %p269 = scmp.ne.s32.totalorder %s264, %s266
      %p270 = scmp.eq.s32.totalorder %s36, 0
      %p271 = por %p269, %p270
      %p272 = scmp.ne.s32.totalorder %s264, %s266
      %p273 = scmp.eq.s32.totalorder %s41, 1
      %p274 = por %p272, %p273
      %p275 = scmp.ne.s32.totalorder %s266, %s267
      %p276 = scmp.eq.s32.totalorder %s41, 0
      %p277 = por %p275, %p276
      %p278 = scmp.ne.s32.totalorder %s266, %s267
      %p279 = scmp.eq.s32.totalorder %s42, 1
      %p280 = por %p278, %p279
      %p282 = scmp.ne.s32.totalorder %s267, %s281
      %p283 = scmp.eq.s32.totalorder %s42, 0
      %p284 = por %p282, %p283
      %s286 = sadd.s32 %s285, 1
      %p289 = scmp.eq.s32.totalorder %s36, 1
      %p290 = scmp.ne.s32.totalorder %s285, %s287
      %p291 = scmp.eq.s32.totalorder %s36, 0
      %p292 = por %p290, %p291
      %p293 = scmp.ne.s32.totalorder %s285, %s287
      %p294 = scmp.eq.s32.totalorder %s41, 1
      %p295 = por %p293, %p294
      %p296 = scmp.ne.s32.totalorder %s287, %s288
      %p297 = scmp.eq.s32.totalorder %s41, 0
      %p298 = por %p296, %p297
      %p299 = scmp.ne.s32.totalorder %s287, %s288
      %p300 = scmp.eq.s32.totalorder %s42, 1
      %p301 = por %p299, %p300
      %p303 = scmp.ne.s32.totalorder %s288, %s302
      %p304 = scmp.eq.s32.totalorder %s42, 0
      %p305 = por %p303, %p304
      %s306 = ssub.s32 %s36, %s43
      %p307 = scmp.eq.s32.totalorder %s306, 0
      %s309 = sadd.s32 %s308, 1
      %s310 = scalar_select %p307, %s308, %s309
      %p313 = pneg %p307
      %p314 = scmp.eq.s32.totalorder %s36, 1
      %p315 = por %p313, %p314
      %p316 = scmp.ne.s32.totalorder %s308, %s311
      %p317 = scmp.eq.s32.totalorder %s36, 0
      %p318 = por %p316, %p317
      %p319 = scmp.ne.s32.totalorder %s308, %s311
      %p320 = scmp.eq.s32.totalorder %s41, 1
      %p321 = por %p319, %p320
      %p322 = scmp.ne.s32.totalorder %s311, %s312
      %p323 = scmp.eq.s32.totalorder %s41, 0
      %p324 = por %p322, %p323
      %p325 = scmp.ne.s32.totalorder %s311, %s312
      %p326 = scmp.eq.s32.totalorder %s42, 1
      %p327 = por %p325, %p326
      %p329 = scmp.ne.s32.totalorder %s312, %s328
      %p330 = scmp.eq.s32.totalorder %s42, 0
      %p331 = por %p329, %p330
      %s332 = ssub.s32 %s36, %s43
      %p333 = scmp.eq.s32.totalorder %s332, 0
      %s335 = sadd.s32 %s334, 1
      %s336 = scalar_select %p333, %s334, %s335
      %p339 = pneg %p333
      %p340 = scmp.eq.s32.totalorder %s36, 1
      %p341 = por %p339, %p340
      %p342 = scmp.ne.s32.totalorder %s334, %s337
      %p343 = scmp.eq.s32.totalorder %s36, 0
      %p344 = por %p342, %p343
      %p345 = scmp.ne.s32.totalorder %s334, %s337
      %p346 = scmp.eq.s32.totalorder %s41, 1
      %p347 = por %p345, %p346
      %p348 = scmp.ne.s32.totalorder %s337, %s338
      %p349 = scmp.eq.s32.totalorder %s41, 0
      %p350 = por %p348, %p349
      %p351 = scmp.ne.s32.totalorder %s337, %s338
      %p352 = scmp.eq.s32.totalorder %s42, 1
      %p353 = por %p351, %p352
      %p355 = scmp.ne.s32.totalorder %s338, %s354
      %p356 = scmp.eq.s32.totalorder %s42, 0
      %p357 = por %p355, %p356
      %s358 = ssub.s32 %s36, %s43
      %p359 = scmp.eq.s32.totalorder %s358, 0
      %s361 = sadd.s32 %s360, 1
      %s362 = scalar_select %p359, %s360, %s361
      %p365 = pneg %p359
      %p366 = scmp.eq.s32.totalorder %s36, 1
      %p367 = por %p365, %p366
      %p368 = scmp.ne.s32.totalorder %s360, %s363
      %p369 = scmp.eq.s32.totalorder %s36, 0
      %p370 = por %p368, %p369
      %p371 = scmp.ne.s32.totalorder %s360, %s363
      %p372 = scmp.eq.s32.totalorder %s41, 1
      %p373 = por %p371, %p372
      %p374 = scmp.ne.s32.totalorder %s363, %s364
      %p375 = scmp.eq.s32.totalorder %s41, 0
      %p376 = por %p374, %p375
      %p377 = scmp.ne.s32.totalorder %s363, %s364
      %p378 = scmp.eq.s32.totalorder %s42, 1
      %p379 = por %p377, %p378
      %p381 = scmp.ne.s32.totalorder %s364, %s380
      %p382 = scmp.eq.s32.totalorder %s42, 0
      %p383 = por %p381, %p382
      %p384 = scmp.le.s32.totalorder 1, %s36
      %p385 = scmp.lt.s32.totalorder %s36, 3
      %p386 = pnand %p384, %p385
      %p387 = pneg %p386
      // Predicated region
      $region9: #{tpu_custom_call.1} parent=5 // pred_check
        _
      $region10: #{tpu_custom_call.1} parent=5 // pred_check_branch
        %389 = sbr.rel (%p386) target = $region12
      $region11: #{tpu_custom_call.1} parent=5 // pred_region
        %s390 = ssub.s32 %s36, 1
        // Predicated region
        $region13: #{tpu_custom_call.1} parent=11 // pred_check
          %p391 = pneg %p109
        $region14: #{tpu_custom_call.1} parent=11 // pred_check_branch
          %393 = sbr.rel (%p391) target = $region16
        $region15: #{tpu_custom_call.1} parent=11 // pred_region
          %395 = vsyncadd [#allocation6], 0
          %s396 = sshll.u32 %s2, 4
          %s397 = int_to_ptr.hbm [resolvable:$true] %s396
          %s398 = sshll.u32 [#allocation7], 4
          %s399 = int_to_ptr.vmem [resolvable:$true] %s398
          %404 = dma.hbm_to_vmem [thread:$0]  %s397, 8192, %s399, [#allocation6], 128, 128, 8
        $region16: #{tpu_custom_call.1} parent=11 // pred_fallthru
          _
        // Predicated region
        $region17: #{tpu_custom_call.1} parent=11 // pred_check
          %p405 = pneg %p130
        $region18: #{tpu_custom_call.1} parent=11 // pred_check_branch
          %407 = sbr.rel (%p405) target = $region20
        $region19: #{tpu_custom_call.1} parent=11 // pred_region
          _
        $region20: #{tpu_custom_call.1} parent=11 // pred_fallthru
          _
        // Predicated region
        $region21: #{tpu_custom_call.1} parent=11 // pred_check
          %p408 = pneg %p151
        $region22: #{tpu_custom_call.1} parent=11 // pred_check_branch
          %410 = sbr.rel (%p408) target = $region24
        $region23: #{tpu_custom_call.1} parent=11 // pred_region
          %412 = vsyncadd [#allocation9], 0
          %s413 = sshll.u32 %s4, 4
          %s414 = int_to_ptr.hbm [resolvable:$true] %s413
          %s415 = sshll.u32 [#allocation8], 4
          %s416 = int_to_ptr.vmem [resolvable:$true] %s415
          %421 = dma.hbm_to_vmem [thread:$0]  %s414, 2048, %s416, [#allocation9], 64, 64, 4
        $region24: #{tpu_custom_call.1} parent=11 // pred_fallthru
          _
        // Predicated region
        $region25: #{tpu_custom_call.1} parent=11 // pred_check
          %p422 = pneg %p172
        $region26: #{tpu_custom_call.1} parent=11 // pred_check_branch
          %424 = sbr.rel (%p422) target = $region28
        $region27: #{tpu_custom_call.1} parent=11 // pred_region
          %426 = vsyncadd [#allocation9], 0
          %s428 = sshll.u32 %s5, 4
          %s429 = int_to_ptr.hbm [resolvable:$true] %s428
          %s430 = sshll.u32 [#allocation10], 4
          %s431 = int_to_ptr.vmem [resolvable:$true] %s430
          %433 = dma.hbm_to_vmem [thread:$0]  %s429, 16, %s431, [#allocation9]
        $region28: #{tpu_custom_call.1} parent=11 // pred_fallthru
          _
        // Predicated region
        $region29: #{tpu_custom_call.1} parent=11 // pred_check
          %p434 = pneg %p193
        $region30: #{tpu_custom_call.1} parent=11 // pred_check_branch
          %436 = sbr.rel (%p434) target = $region32
        $region31: #{tpu_custom_call.1} parent=11 // pred_region
          %438 = vsyncadd [#allocation12], 0
          %s439 = sshll.u32 %s6, 4
          %s440 = int_to_ptr.hbm [resolvable:$true] %s439
          %s441 = sshll.u32 [#allocation11], 4
          %s442 = int_to_ptr.vmem [resolvable:$true] %s441
          %447 = dma.hbm_to_vmem [thread:$0]  %s440, 2048, %s442, [#allocation12], 64, 64, 4
        $region32: #{tpu_custom_call.1} parent=11 // pred_fallthru
          _
        // Predicated region
        $region33: #{tpu_custom_call.1} parent=11 // pred_check
          %p448 = pneg %p214
        $region34: #{tpu_custom_call.1} parent=11 // pred_check_branch
          %450 = sbr.rel (%p448) target = $region36
        $region35: #{tpu_custom_call.1} parent=11 // pred_region
          %452 = vsyncadd [#allocation12], 0
          %s454 = sshll.u32 %s7, 4
          %s455 = int_to_ptr.hbm [resolvable:$true] %s454
          %s456 = sshll.u32 [#allocation13], 4
          %s457 = int_to_ptr.vmem [resolvable:$true] %s456
          %459 = dma.hbm_to_vmem [thread:$0]  %s455, 16, %s457, [#allocation12]
        $region36: #{tpu_custom_call.1} parent=11 // pred_fallthru
          _
        // Predicated region
        $region37: #{tpu_custom_call.1} parent=11 // pred_check
          %p460 = pneg %p235
        $region38: #{tpu_custom_call.1} parent=11 // pred_check_branch
          %462 = sbr.rel (%p460) target = $region40
        $region39: #{tpu_custom_call.1} parent=11 // pred_region
          %464 = vsyncadd [#allocation15], 0
          %s465 = sshll.u32 %s8, 4
          %s466 = int_to_ptr.hbm [resolvable:$true] %s465
          %s467 = sshll.u32 [#allocation14], 4
          %s468 = int_to_ptr.vmem [resolvable:$true] %s467
          %473 = dma.hbm_to_vmem [thread:$0]  %s466, 2048, %s468, [#allocation15], 128, 128, 8
        $region40: #{tpu_custom_call.1} parent=11 // pred_fallthru
          _
        // Predicated region
        $region41: #{tpu_custom_call.1} parent=11 // pred_check
          %p474 = pneg %p256
        $region42: #{tpu_custom_call.1} parent=11 // pred_check_branch
          %476 = sbr.rel (%p474) target = $region44
        $region43: #{tpu_custom_call.1} parent=11 // pred_region
          _
        $region44: #{tpu_custom_call.1} parent=11 // pred_fallthru
          _
        // Predicated region
        $region45: #{tpu_custom_call.1} parent=11 // pred_check
          %p477 = pneg %p277
        $region46: #{tpu_custom_call.1} parent=11 // pred_check_branch
          %479 = sbr.rel (%p477) target = $region48
        $region47: #{tpu_custom_call.1} parent=11 // pred_region
          %481 = vsyncadd [#allocation15], 0
          %s482 = sshll.u32 %s10, 4
          %s483 = int_to_ptr.hbm [resolvable:$true] %s482
          %s484 = sshll.u32 [#allocation16], 4
          %s485 = int_to_ptr.vmem [resolvable:$true] %s484
          %490 = dma.hbm_to_vmem [thread:$0]  %s483, 8192, %s485, [#allocation15], 256, 256, 16
        $region48: #{tpu_custom_call.1} parent=11 // pred_fallthru
          _
        // Predicated region
        $region49: #{tpu_custom_call.1} parent=11 // pred_check
          %p491 = pneg %p298
        $region50: #{tpu_custom_call.1} parent=11 // pred_check_branch
          %493 = sbr.rel (%p491) target = $region52
        $region51: #{tpu_custom_call.1} parent=11 // pred_region
          _
        $region52: #{tpu_custom_call.1} parent=11 // pred_fallthru
          _
      $region12: #{tpu_custom_call.1} parent=5 // pred_fallthru
        _
      %p494 = scmp.lt.s32.totalorder %s36, 2
      // Predicated region
      $region53: #{tpu_custom_call.1} parent=5 // pred_check
        %p495 = pneg %p494
      $region54: #{tpu_custom_call.1} parent=5 // pred_check_branch
        %497 = sbr.rel (%p495) target = $region56
      $region55: #{tpu_custom_call.1} parent=5 // pred_region
        // Predicated region
        $region57: #{tpu_custom_call.1} parent=55 // pred_check
          %p498 = pneg %p56
        $region58: #{tpu_custom_call.1} parent=55 // pred_check_branch
          %500 = sbr.rel (%p498) target = $region60
        $region59: #{tpu_custom_call.1} parent=55 // pred_region
          %s501 = sand.u32 %s46, 1
          %s502 = scalar_lea.sflag [#allocation3], %s501
          %s503 = sand.u32 %s46, 1
          %s504 = smul.addr %s503, 256
          %s505 = scalar_lea.vmem [#allocation2], %s504
          %s506 = smul.u32 16, %s36
          %508 = vsyncadd %s502, 0
          %s509 = smul.addr %s506, 4
          %s510 = smul.addr %s509, 4
          %s511 = scalar_lea.hbm %s0, %s510
          %s512 = sshll.u32 %s511, 4
          %s513 = int_to_ptr.hbm [resolvable:$true] %s512
          %s514 = sshll.u32 %s505, 4
          %s515 = int_to_ptr.vmem [resolvable:$true] %s514
          %520 = dma.hbm_to_vmem [thread:$0]  %s513, 4096, %s515, %s502, 256, 256, 16
        $region60: #{tpu_custom_call.1} parent=55 // pred_fallthru
          _
        // Predicated region
        $region61: #{tpu_custom_call.1} parent=55 // pred_check
          %p521 = pneg %p82
        $region62: #{tpu_custom_call.1} parent=55 // pred_check_branch
          %523 = sbr.rel (%p521) target = $region64
        $region63: #{tpu_custom_call.1} parent=55 // pred_region
          %s524 = sand.u32 %s36, 1
          %s525 = scalar_lea.sflag [#allocation6], %s524
          %s526 = sand.u32 %s72, 1
          %s527 = smul.addr %s526, 128
          %s528 = scalar_lea.vmem [#allocation5], %s527
          %s529 = smul.u32 16, %s36
          %531 = vsyncadd %s525, 0
          %s532 = smul.addr %s529, 8
          %s533 = scalar_lea.hbm %s1, %s532
          %s534 = sshll.u32 %s533, 4
          %s535 = int_to_ptr.hbm [resolvable:$true] %s534
          %s536 = sshll.u32 %s528, 4
          %s537 = int_to_ptr.vmem [resolvable:$true] %s536
          %542 = dma.hbm_to_vmem [thread:$0]  %s535, 2048, %s537, %s525, 128, 128, 8
        $region64: #{tpu_custom_call.1} parent=55 // pred_fallthru
          _
      $region56: #{tpu_custom_call.1} parent=5 // pred_fallthru
        _
      %p543 = scmp.le.s32.totalorder 1, %s36
      %p544 = scmp.lt.s32.totalorder %s36, 3
      %p545 = pnand %p543, %p544
      %p546 = pneg %p545
      // Predicated region
      $region65: #{tpu_custom_call.1} parent=5 // pred_check
        _
      $region66: #{tpu_custom_call.1} parent=5 // pred_check_branch
        %548 = sbr.rel (%p545) target = $region68
      $region67: #{tpu_custom_call.1} parent=5 // pred_region
        %s549 = ssub.s32 %s36, 1
        %s550 = sand.u32 %s49, 1
        %s551 = scalar_lea.sflag [#allocation3], %s550
        %s552 = sand.u32 %s49, 1
        %s553 = smul.addr %s552, 256
        %s554 = scalar_lea.vmem [#allocation2], %s553
        // Predicated region
        $region69: #{tpu_custom_call.1} parent=67 // pred_check
          %p555 = pneg %p62
        $region70: #{tpu_custom_call.1} parent=67 // pred_check_branch
          %557 = sbr.rel (%p555) target = $region72
        $region71: #{tpu_custom_call.1} parent=67 // pred_region
          %559 = dma.done %s551, 4096
        $region72: #{tpu_custom_call.1} parent=67 // pred_fallthru
          _
        %s560 = sand.u32 %s41, 1
        %s561 = scalar_lea.sflag [#allocation6], %s560
        %s562 = sand.u32 %s75, 1
        %s563 = smul.addr %s562, 128
        %s564 = scalar_lea.vmem [#allocation5], %s563
        // Predicated region
        $region73: #{tpu_custom_call.1} parent=67 // pred_check
          %p565 = pneg %p88
        $region74: #{tpu_custom_call.1} parent=67 // pred_check_branch
          %567 = sbr.rel (%p565) target = $region76
        $region75: #{tpu_custom_call.1} parent=67 // pred_region
          %569 = dma.done %s561, 2048
        $region76: #{tpu_custom_call.1} parent=67 // pred_fallthru
          _
        // Predicated region
        $region77: #{tpu_custom_call.1} parent=67 // pred_check
          %p570 = pneg %p109
        $region78: #{tpu_custom_call.1} parent=67 // pred_check_branch
          %572 = sbr.rel (%p570) target = $region80
        $region79: #{tpu_custom_call.1} parent=67 // pred_region
          %574 = dma.done [#allocation6], 8192
        $region80: #{tpu_custom_call.1} parent=67 // pred_fallthru
          _
        // Predicated region
        $region81: #{tpu_custom_call.1} parent=67 // pred_check
          %p575 = pneg %p151
        $region82: #{tpu_custom_call.1} parent=67 // pred_check_branch
          %577 = sbr.rel (%p575) target = $region84
        $region83: #{tpu_custom_call.1} parent=67 // pred_region
          %579 = dma.done [#allocation9], 2048
        $region84: #{tpu_custom_call.1} parent=67 // pred_fallthru
          _
        // Predicated region
        $region85: #{tpu_custom_call.1} parent=67 // pred_check
          %p580 = pneg %p172
        $region86: #{tpu_custom_call.1} parent=67 // pred_check_branch
          %582 = sbr.rel (%p580) target = $region88
        $region87: #{tpu_custom_call.1} parent=67 // pred_region
          %584 = dma.done [#allocation9], 16
        $region88: #{tpu_custom_call.1} parent=67 // pred_fallthru
          _
        // Predicated region
        $region89: #{tpu_custom_call.1} parent=67 // pred_check
          %p585 = pneg %p193
        $region90: #{tpu_custom_call.1} parent=67 // pred_check_branch
          %587 = sbr.rel (%p585) target = $region92
        $region91: #{tpu_custom_call.1} parent=67 // pred_region
          %589 = dma.done [#allocation12], 2048
        $region92: #{tpu_custom_call.1} parent=67 // pred_fallthru
          _
        // Predicated region
        $region93: #{tpu_custom_call.1} parent=67 // pred_check
          %p590 = pneg %p214
        $region94: #{tpu_custom_call.1} parent=67 // pred_check_branch
          %592 = sbr.rel (%p590) target = $region96
        $region95: #{tpu_custom_call.1} parent=67 // pred_region
          %594 = dma.done [#allocation12], 16
        $region96: #{tpu_custom_call.1} parent=67 // pred_fallthru
          _
        // Predicated region
        $region97: #{tpu_custom_call.1} parent=67 // pred_check
          %p595 = pneg %p235
        $region98: #{tpu_custom_call.1} parent=67 // pred_check_branch
          %597 = sbr.rel (%p595) target = $region100
        $region99: #{tpu_custom_call.1} parent=67 // pred_region
          %599 = dma.done [#allocation15], 2048
        $region100: #{tpu_custom_call.1} parent=67 // pred_fallthru
          _
        // Predicated region
        $region101: #{tpu_custom_call.1} parent=67 // pred_check
          %p600 = pneg %p277
        $region102: #{tpu_custom_call.1} parent=67 // pred_check_branch
          %602 = sbr.rel (%p600) target = $region104
        $region103: #{tpu_custom_call.1} parent=67 // pred_region
          %604 = dma.done [#allocation15], 8192
        $region104: #{tpu_custom_call.1} parent=67 // pred_fallthru
          _
        %s605 = sand.u32 %s49, 1
        %s606 = scalar_lea.sflag [#allocation3], %s605
        %s607 = sand.u32 %s49, 1
        %s608 = smul.addr %s607, 256
        %s609 = scalar_lea.vmem [#allocation2], %s608
        %p610 = pneg %p62
        %p611 = pneg %p59
        %s612 = sand.u32 %s41, 1
        %s613 = scalar_lea.sflag [#allocation6], %s612
        %s614 = sand.u32 %s75, 1
        %s615 = smul.addr %s614, 128
        %s616 = scalar_lea.vmem [#allocation5], %s615
        %p617 = pneg %p88
        %p618 = pneg %p85
        %p619 = pneg %p109
        %p620 = pneg %p106
        %p621 = pneg %p130
        %p622 = pneg %p127
        %p623 = pneg %p151
        %p624 = pneg %p148
        %p625 = pneg %p172
        %p626 = pneg %p169
        %p627 = pneg %p193
        %p628 = pneg %p190
        %p629 = pneg %p214
        %p630 = pneg %p211
        %p631 = pneg %p235
        %p632 = pneg %p232
        %p633 = pneg %p256
        %p634 = pneg %p253
        %p635 = pneg %p277
        %p636 = pneg %p274
        %p637 = pneg %p298
        %p638 = pneg %p295
        %p639 = pneg %p324
        %p640 = pneg %p321
        %s641 = sand.u32 %s311, 1
        %s642 = scalar_lea.sflag [#allocation4], %s641
        %s643 = sand.u32 %s311, 1
        %s644 = smul.addr %s643, 512
        %s645 = scalar_lea.vmem [#allocation17], %s644
        %p646 = pneg %p350
        %p647 = pneg %p347
        %s648 = sand.u32 %s41, 1
        %s649 = scalar_lea.sflag [#allocation19], %s648
        %s650 = sand.u32 %s337, 1
        %s651 = smul.addr %s650, 128
        %s652 = scalar_lea.vmem [#allocation18], %s651
        %p653 = pneg %p376
        %p654 = pneg %p373
        %s655 = sand.u32 %s41, 1
        %s656 = scalar_lea.sflag [#allocation19], %s655
        %s657 = sand.u32 %s363, 1
        %s658 = smul.addr %s657, 128
        %s659 = scalar_lea.vmem [#allocation20], %s658
        %s660 = smul.u32 16, %s41
        %s661 = smul.u32 16, %s41
        %s662 = smul.u32 16, %s41
        %s663 = smul.u32 16, %s41
        %s664 = smul.u32 16, %s41
        %v665 = vld [vmem:[%s554] sm:$0xff]
        %v666 = vld [vmem:[%s554 + $0x8] sm:$0xff]
        %v667 = vld [vmem:[%s554 + $0x10] sm:$0xff]
        %v668 = vld [vmem:[%s554 + $0x18] sm:$0xff]
        %v669 = vld [vmem:[%s554 + $0x20] sm:$0xff]
        %v670 = vld [vmem:[%s554 + $0x28] sm:$0xff]
        %v671 = vld [vmem:[%s554 + $0x30] sm:$0xff]
        %v672 = vld [vmem:[%s554 + $0x38] sm:$0xff]
        %v673 = vld [vmem:[%s554 + $0x40] sm:$0xff]
        %v674 = vld [vmem:[%s554 + $0x48] sm:$0xff]
        %v675 = vld [vmem:[%s554 + $0x50] sm:$0xff]
        %v676 = vld [vmem:[%s554 + $0x58] sm:$0xff]
        %v677 = vld [vmem:[%s554 + $0x60] sm:$0xff]
        %v678 = vld [vmem:[%s554 + $0x68] sm:$0xff]
        %v679 = vld [vmem:[%s554 + $0x70] sm:$0xff]
        %v680 = vld [vmem:[%s554 + $0x78] sm:$0xff]
        %v681 = vld [vmem:[%s554 + $0x80] sm:$0xff]
        %v682 = vld [vmem:[%s554 + $0x88] sm:$0xff]
        %v683 = vld [vmem:[%s554 + $0x90] sm:$0xff]
        %v684 = vld [vmem:[%s554 + $0x98] sm:$0xff]
        %v685 = vld [vmem:[%s554 + $0xa0] sm:$0xff]
        %v686 = vld [vmem:[%s554 + $0xa8] sm:$0xff]
        %v687 = vld [vmem:[%s554 + $0xb0] sm:$0xff]
        %v688 = vld [vmem:[%s554 + $0xb8] sm:$0xff]
        %v689 = vld [vmem:[%s554 + $0xc0] sm:$0xff]
        %v690 = vld [vmem:[%s554 + $0xc8] sm:$0xff]
        %v691 = vld [vmem:[%s554 + $0xd0] sm:$0xff]
        %v692 = vld [vmem:[%s554 + $0xd8] sm:$0xff]
        %v693 = vld [vmem:[%s554 + $0xe0] sm:$0xff]
        %v694 = vld [vmem:[%s554 + $0xe8] sm:$0xff]
        %v695 = vld [vmem:[%s554 + $0xf0] sm:$0xff]
        %v696 = vld [vmem:[%s554 + $0xf8] sm:$0xff]
        %v697 = vld [vmem:[#allocation7] sm:$0xff]
        %v698 = vld [vmem:[#allocation7 + $0x8] sm:$0xff]
        %v699 = vld [vmem:[#allocation7 + $0x10] sm:$0xff]
        %v700 = vld [vmem:[#allocation7 + $0x18] sm:$0xff]
        %v701 = vld [vmem:[#allocation7 + $0x20] sm:$0xff]
        %v702 = vld [vmem:[#allocation7 + $0x28] sm:$0xff]
        %v703 = vld [vmem:[#allocation7 + $0x30] sm:$0xff]
        %v704 = vld [vmem:[#allocation7 + $0x38] sm:$0xff]
        %v705 = vld [vmem:[#allocation7 + $0x40] sm:$0xff]
        %v706 = vld [vmem:[#allocation7 + $0x48] sm:$0xff]
        %v707 = vld [vmem:[#allocation7 + $0x50] sm:$0xff]
        %v708 = vld [vmem:[#allocation7 + $0x58] sm:$0xff]
        %v709 = vld [vmem:[#allocation7 + $0x60] sm:$0xff]
        %v710 = vld [vmem:[#allocation7 + $0x68] sm:$0xff]
        %v711 = vld [vmem:[#allocation7 + $0x70] sm:$0xff]
        %v712 = vld [vmem:[#allocation7 + $0x78] sm:$0xff]
        %v713 = vld [vmem:[#allocation7 + $0x80] sm:$0xff]
        %v714 = vld [vmem:[#allocation7 + $0x88] sm:$0xff]
        %v715 = vld [vmem:[#allocation7 + $0x90] sm:$0xff]
        %v716 = vld [vmem:[#allocation7 + $0x98] sm:$0xff]
        %v717 = vld [vmem:[#allocation7 + $0xa0] sm:$0xff]
        %v718 = vld [vmem:[#allocation7 + $0xa8] sm:$0xff]
        %v719 = vld [vmem:[#allocation7 + $0xb0] sm:$0xff]
        %v720 = vld [vmem:[#allocation7 + $0xb8] sm:$0xff]
        %v721 = vld [vmem:[#allocation7 + $0xc0] sm:$0xff]
        %v722 = vld [vmem:[#allocation7 + $0xc8] sm:$0xff]
        %v723 = vld [vmem:[#allocation7 + $0xd0] sm:$0xff]
        %v724 = vld [vmem:[#allocation7 + $0xd8] sm:$0xff]
        %v725 = vld [vmem:[#allocation7 + $0xe0] sm:$0xff]
        %v726 = vld [vmem:[#allocation7 + $0xe8] sm:$0xff]
        %v727 = vld [vmem:[#allocation7 + $0xf0] sm:$0xff]
        %v728 = vld [vmem:[#allocation7 + $0xf8] sm:$0xff]
        %v729 = vld [vmem:[#allocation7 + $0x100] sm:$0xff]
        %v730 = vld [vmem:[#allocation7 + $0x108] sm:$0xff]
        %v731 = vld [vmem:[#allocation7 + $0x110] sm:$0xff]
        %v732 = vld [vmem:[#allocation7 + $0x118] sm:$0xff]
        %v733 = vld [vmem:[#allocation7 + $0x120] sm:$0xff]
        %v734 = vld [vmem:[#allocation7 + $0x128] sm:$0xff]
        %v735 = vld [vmem:[#allocation7 + $0x130] sm:$0xff]
        %v736 = vld [vmem:[#allocation7 + $0x138] sm:$0xff]
        %v737 = vld [vmem:[#allocation7 + $0x140] sm:$0xff]
        %v738 = vld [vmem:[#allocation7 + $0x148] sm:$0xff]
        %v739 = vld [vmem:[#allocation7 + $0x150] sm:$0xff]
        %v740 = vld [vmem:[#allocation7 + $0x158] sm:$0xff]
        %v741 = vld [vmem:[#allocation7 + $0x160] sm:$0xff]
        %v742 = vld [vmem:[#allocation7 + $0x168] sm:$0xff]
        %v743 = vld [vmem:[#allocation7 + $0x170] sm:$0xff]
        %v744 = vld [vmem:[#allocation7 + $0x178] sm:$0xff]
        %v745 = vld [vmem:[#allocation7 + $0x180] sm:$0xff]
        %v746 = vld [vmem:[#allocation7 + $0x188] sm:$0xff]
        %v747 = vld [vmem:[#allocation7 + $0x190] sm:$0xff]
        %v748 = vld [vmem:[#allocation7 + $0x198] sm:$0xff]
        %v749 = vld [vmem:[#allocation7 + $0x1a0] sm:$0xff]
        %v750 = vld [vmem:[#allocation7 + $0x1a8] sm:$0xff]
        %v751 = vld [vmem:[#allocation7 + $0x1b0] sm:$0xff]
        %v752 = vld [vmem:[#allocation7 + $0x1b8] sm:$0xff]
        %v753 = vld [vmem:[#allocation7 + $0x1c0] sm:$0xff]
        %v754 = vld [vmem:[#allocation7 + $0x1c8] sm:$0xff]
        %v755 = vld [vmem:[#allocation7 + $0x1d0] sm:$0xff]
        %v756 = vld [vmem:[#allocation7 + $0x1d8] sm:$0xff]
        %v757 = vld [vmem:[#allocation7 + $0x1e0] sm:$0xff]
        %v758 = vld [vmem:[#allocation7 + $0x1e8] sm:$0xff]
        %v759 = vld [vmem:[#allocation7 + $0x1f0] sm:$0xff]
        %v760 = vld [vmem:[#allocation7 + $0x1f8] sm:$0xff]
        %v761 = vld [vmem:[%s3] sm:$0x3]
        %v763 = vperm.slane %v761, 0
        %v764 = vperm.slane %v761, 1
        %v799 = vunpack.c.l.b16 %v665
        %v800 = vunpack.c.h.b16 %v665
        %v801 = vunpack.c.l.b16 %v666
        %v802 = vunpack.c.h.b16 %v666
        %v803 = vunpack.c.l.b16 %v667
        %v804 = vunpack.c.h.b16 %v667
        %v805 = vunpack.c.l.b16 %v668
        %v806 = vunpack.c.h.b16 %v668
        %v807 = vunpack.c.l.b16 %v669
        %v808 = vunpack.c.h.b16 %v669
        %v809 = vunpack.c.l.b16 %v670
        %v810 = vunpack.c.h.b16 %v670
        %v811 = vunpack.c.l.b16 %v671
        %v812 = vunpack.c.h.b16 %v671
        %v813 = vunpack.c.l.b16 %v672
        %v814 = vunpack.c.h.b16 %v672
        %v815 = vunpack.c.l.b16 %v673
        %v816 = vunpack.c.h.b16 %v673
        %v817 = vunpack.c.l.b16 %v674
        %v818 = vunpack.c.h.b16 %v674
        %v819 = vunpack.c.l.b16 %v675
        %v820 = vunpack.c.h.b16 %v675
        %v821 = vunpack.c.l.b16 %v676
        %v822 = vunpack.c.h.b16 %v676
        %v823 = vunpack.c.l.b16 %v677
        %v824 = vunpack.c.h.b16 %v677
        %v825 = vunpack.c.l.b16 %v678
        %v826 = vunpack.c.h.b16 %v678
        %v827 = vunpack.c.l.b16 %v679
        %v828 = vunpack.c.h.b16 %v679
        %v829 = vunpack.c.l.b16 %v680
        %v830 = vunpack.c.h.b16 %v680
        %v831 = vunpack.c.l.b16 %v681
        %v832 = vunpack.c.h.b16 %v681
        %v833 = vunpack.c.l.b16 %v682
        %v834 = vunpack.c.h.b16 %v682
        %v835 = vunpack.c.l.b16 %v683
        %v836 = vunpack.c.h.b16 %v683
        %v837 = vunpack.c.l.b16 %v684
        %v838 = vunpack.c.h.b16 %v684
        %v839 = vunpack.c.l.b16 %v685
        %v840 = vunpack.c.h.b16 %v685
        %v841 = vunpack.c.l.b16 %v686
        %v842 = vunpack.c.h.b16 %v686
        %v843 = vunpack.c.l.b16 %v687
        %v844 = vunpack.c.h.b16 %v687
        %v845 = vunpack.c.l.b16 %v688
        %v846 = vunpack.c.h.b16 %v688
        %v847 = vunpack.c.l.b16 %v689
        %v848 = vunpack.c.h.b16 %v689
        %v849 = vunpack.c.l.b16 %v690
        %v850 = vunpack.c.h.b16 %v690
        %v851 = vunpack.c.l.b16 %v691
        %v852 = vunpack.c.h.b16 %v691
        %v853 = vunpack.c.l.b16 %v692
        %v854 = vunpack.c.h.b16 %v692
        %v855 = vunpack.c.l.b16 %v693
        %v856 = vunpack.c.h.b16 %v693
        %v857 = vunpack.c.l.b16 %v694
        %v858 = vunpack.c.h.b16 %v694
        %v859 = vunpack.c.l.b16 %v695
        %v860 = vunpack.c.h.b16 %v695
        %v861 = vunpack.c.l.b16 %v696
        %v862 = vunpack.c.h.b16 %v696
        %v863 = vpack.c.b16 %v803, %v799
        %v864 = vpack.c.b16 %v804, %v800
        %v865 = vpack.c.b16 %v805, %v801
        %v866 = vpack.c.b16 %v806, %v802
        %v867 = vpack.c.b16 %v811, %v807
        %v868 = vpack.c.b16 %v812, %v808
        %v869 = vpack.c.b16 %v813, %v809
        %v870 = vpack.c.b16 %v814, %v810
        %v871 = vpack.c.b16 %v819, %v815
        %v872 = vpack.c.b16 %v820, %v816
        %v873 = vpack.c.b16 %v821, %v817
        %v874 = vpack.c.b16 %v822, %v818
        %v875 = vpack.c.b16 %v827, %v823
        %v876 = vpack.c.b16 %v828, %v824
        %v877 = vpack.c.b16 %v829, %v825
        %v878 = vpack.c.b16 %v830, %v826
        %v879 = vpack.c.b16 %v835, %v831
        %v880 = vpack.c.b16 %v836, %v832
        %v881 = vpack.c.b16 %v837, %v833
        %v882 = vpack.c.b16 %v838, %v834
        %v883 = vpack.c.b16 %v843, %v839
        %v884 = vpack.c.b16 %v844, %v840
        %v885 = vpack.c.b16 %v845, %v841
        %v886 = vpack.c.b16 %v846, %v842
        %v887 = vpack.c.b16 %v851, %v847
        %v888 = vpack.c.b16 %v852, %v848
        %v889 = vpack.c.b16 %v853, %v849
        %v890 = vpack.c.b16 %v854, %v850
        %v891 = vpack.c.b16 %v859, %v855
        %v892 = vpack.c.b16 %v860, %v856
        %v893 = vpack.c.b16 %v861, %v857
        %v894 = vpack.c.b16 %v862, %v858
        %v991 = vunpack.c.l.b16 %v697
        %v992 = vunpack.c.h.b16 %v697
        %v993 = vunpack.c.l.b16 %v698
        %v994 = vunpack.c.h.b16 %v698
        %v995 = vunpack.c.l.b16 %v699
        %v996 = vunpack.c.h.b16 %v699
        %v997 = vunpack.c.l.b16 %v700
        %v998 = vunpack.c.h.b16 %v700
        %v999 = vunpack.c.l.b16 %v701
        %v1000 = vunpack.c.h.b16 %v701
        %v1001 = vunpack.c.l.b16 %v702
        %v1002 = vunpack.c.h.b16 %v702
        %v1003 = vunpack.c.l.b16 %v703
        %v1004 = vunpack.c.h.b16 %v703
        %v1005 = vunpack.c.l.b16 %v704
        %v1006 = vunpack.c.h.b16 %v704
        %v1007 = vunpack.c.l.b16 %v705
        %v1008 = vunpack.c.h.b16 %v705
        %v1009 = vunpack.c.l.b16 %v706
        %v1010 = vunpack.c.h.b16 %v706
        %v1011 = vunpack.c.l.b16 %v707
        %v1012 = vunpack.c.h.b16 %v707
        %v1013 = vunpack.c.l.b16 %v708
        %v1014 = vunpack.c.h.b16 %v708
        %v1015 = vunpack.c.l.b16 %v709
        %v1016 = vunpack.c.h.b16 %v709
        %v1017 = vunpack.c.l.b16 %v710
        %v1018 = vunpack.c.h.b16 %v710
        %v1019 = vunpack.c.l.b16 %v711
        %v1020 = vunpack.c.h.b16 %v711
        %v1021 = vunpack.c.l.b16 %v712
        %v1022 = vunpack.c.h.b16 %v712
        %v1023 = vunpack.c.l.b16 %v713
        %v1024 = vunpack.c.h.b16 %v713
        %v1025 = vunpack.c.l.b16 %v714
        %v1026 = vunpack.c.h.b16 %v714
        %v1027 = vunpack.c.l.b16 %v715
        %v1028 = vunpack.c.h.b16 %v715
        %v1029 = vunpack.c.l.b16 %v716
        %v1030 = vunpack.c.h.b16 %v716
        %v1031 = vunpack.c.l.b16 %v717
        %v1032 = vunpack.c.h.b16 %v717
        %v1033 = vunpack.c.l.b16 %v718
        %v1034 = vunpack.c.h.b16 %v718
        %v1035 = vunpack.c.l.b16 %v719
        %v1036 = vunpack.c.h.b16 %v719
        %v1037 = vunpack.c.l.b16 %v720
        %v1038 = vunpack.c.h.b16 %v720
        %v1039 = vunpack.c.l.b16 %v721
        %v1040 = vunpack.c.h.b16 %v721
        %v1041 = vunpack.c.l.b16 %v722
        %v1042 = vunpack.c.h.b16 %v722
        %v1043 = vunpack.c.l.b16 %v723
        %v1044 = vunpack.c.h.b16 %v723
        %v1045 = vunpack.c.l.b16 %v724
        %v1046 = vunpack.c.h.b16 %v724
        %v1047 = vunpack.c.l.b16 %v725
        %v1048 = vunpack.c.h.b16 %v725
        %v1049 = vunpack.c.l.b16 %v726
        %v1050 = vunpack.c.h.b16 %v726
        %v1051 = vunpack.c.l.b16 %v727
        %v1052 = vunpack.c.h.b16 %v727
        %v1053 = vunpack.c.l.b16 %v728
        %v1054 = vunpack.c.h.b16 %v728
        %v1055 = vunpack.c.l.b16 %v729
        %v1056 = vunpack.c.h.b16 %v729
        %v1057 = vunpack.c.l.b16 %v730
        %v1058 = vunpack.c.h.b16 %v730
        %v1059 = vunpack.c.l.b16 %v731
        %v1060 = vunpack.c.h.b16 %v731
        %v1061 = vunpack.c.l.b16 %v732
        %v1062 = vunpack.c.h.b16 %v732
        %v1063 = vunpack.c.l.b16 %v733
        %v1064 = vunpack.c.h.b16 %v733
        %v1065 = vunpack.c.l.b16 %v734
        %v1066 = vunpack.c.h.b16 %v734
        %v1067 = vunpack.c.l.b16 %v735
        %v1068 = vunpack.c.h.b16 %v735
        %v1069 = vunpack.c.l.b16 %v736
        %v1070 = vunpack.c.h.b16 %v736
        %v1071 = vunpack.c.l.b16 %v737
        %v1072 = vunpack.c.h.b16 %v737
        %v1073 = vunpack.c.l.b16 %v738
        %v1074 = vunpack.c.h.b16 %v738
        %v1075 = vunpack.c.l.b16 %v739
        %v1076 = vunpack.c.h.b16 %v739
        %v1077 = vunpack.c.l.b16 %v740
        %v1078 = vunpack.c.h.b16 %v740
        %v1079 = vunpack.c.l.b16 %v741
        %v1080 = vunpack.c.h.b16 %v741
        %v1081 = vunpack.c.l.b16 %v742
        %v1082 = vunpack.c.h.b16 %v742
        %v1083 = vunpack.c.l.b16 %v743
        %v1084 = vunpack.c.h.b16 %v743
        %v1085 = vunpack.c.l.b16 %v744
        %v1086 = vunpack.c.h.b16 %v744
        %v1087 = vunpack.c.l.b16 %v745
        %v1088 = vunpack.c.h.b16 %v745
        %v1089 = vunpack.c.l.b16 %v746
        %v1090 = vunpack.c.h.b16 %v746
        %v1091 = vunpack.c.l.b16 %v747
        %v1092 = vunpack.c.h.b16 %v747
        %v1093 = vunpack.c.l.b16 %v748
        %v1094 = vunpack.c.h.b16 %v748
        %v1095 = vunpack.c.l.b16 %v749
        %v1096 = vunpack.c.h.b16 %v749
        %v1097 = vunpack.c.l.b16 %v750
        %v1098 = vunpack.c.h.b16 %v750
        %v1099 = vunpack.c.l.b16 %v751
        %v1100 = vunpack.c.h.b16 %v751
        %v1101 = vunpack.c.l.b16 %v752
        %v1102 = vunpack.c.h.b16 %v752
        %v1103 = vunpack.c.l.b16 %v753
        %v1104 = vunpack.c.h.b16 %v753
        %v1105 = vunpack.c.l.b16 %v754
        %v1106 = vunpack.c.h.b16 %v754
        %v1107 = vunpack.c.l.b16 %v755
        %v1108 = vunpack.c.h.b16 %v755
        %v1109 = vunpack.c.l.b16 %v756
        %v1110 = vunpack.c.h.b16 %v756
        %v1111 = vunpack.c.l.b16 %v757
        %v1112 = vunpack.c.h.b16 %v757
        %v1113 = vunpack.c.l.b16 %v758
        %v1114 = vunpack.c.h.b16 %v758
        %v1115 = vunpack.c.l.b16 %v759
        %v1116 = vunpack.c.h.b16 %v759
        %v1117 = vunpack.c.l.b16 %v760
        %v1118 = vunpack.c.h.b16 %v760
        %v1119 = vpack.c.b16 %v993, %v991
        %v1120 = vpack.c.b16 %v994, %v992
        %v1121 = vpack.c.b16 %v997, %v995
        %v1122 = vpack.c.b16 %v998, %v996
        %v1123 = vpack.c.b16 %v1001, %v999
        %v1124 = vpack.c.b16 %v1002, %v1000
        %v1125 = vpack.c.b16 %v1005, %v1003
        %v1126 = vpack.c.b16 %v1006, %v1004
        %v1127 = vpack.c.b16 %v1009, %v1007
        %v1128 = vpack.c.b16 %v1010, %v1008
        %v1129 = vpack.c.b16 %v1013, %v1011
        %v1130 = vpack.c.b16 %v1014, %v1012
        %v1131 = vpack.c.b16 %v1017, %v1015
        %v1132 = vpack.c.b16 %v1018, %v1016
        %v1133 = vpack.c.b16 %v1021, %v1019
        %v1134 = vpack.c.b16 %v1022, %v1020
        %v1135 = vpack.c.b16 %v1025, %v1023
        %v1136 = vpack.c.b16 %v1026, %v1024
        %v1137 = vpack.c.b16 %v1029, %v1027
        %v1138 = vpack.c.b16 %v1030, %v1028
        %v1139 = vpack.c.b16 %v1033, %v1031
        %v1140 = vpack.c.b16 %v1034, %v1032
        %v1141 = vpack.c.b16 %v1037, %v1035
        %v1142 = vpack.c.b16 %v1038, %v1036
        %v1143 = vpack.c.b16 %v1041, %v1039
        %v1144 = vpack.c.b16 %v1042, %v1040
        %v1145 = vpack.c.b16 %v1045, %v1043
        %v1146 = vpack.c.b16 %v1046, %v1044
        %v1147 = vpack.c.b16 %v1049, %v1047
        %v1148 = vpack.c.b16 %v1050, %v1048
        %v1149 = vpack.c.b16 %v1053, %v1051
        %v1150 = vpack.c.b16 %v1054, %v1052
        %v1151 = vpack.c.b16 %v1057, %v1055
        %v1152 = vpack.c.b16 %v1058, %v1056
        %v1153 = vpack.c.b16 %v1061, %v1059
        %v1154 = vpack.c.b16 %v1062, %v1060
        %v1155 = vpack.c.b16 %v1065, %v1063
        %v1156 = vpack.c.b16 %v1066, %v1064
        %v1157 = vpack.c.b16 %v1069, %v1067
        %v1158 = vpack.c.b16 %v1070, %v1068
        %v1159 = vpack.c.b16 %v1073, %v1071
        %v1160 = vpack.c.b16 %v1074, %v1072
        %v1161 = vpack.c.b16 %v1077, %v1075
        %v1162 = vpack.c.b16 %v1078, %v1076
        %v1163 = vpack.c.b16 %v1081, %v1079
        %v1164 = vpack.c.b16 %v1082, %v1080
        %v1165 = vpack.c.b16 %v1085, %v1083
        %v1166 = vpack.c.b16 %v1086, %v1084
        %v1167 = vpack.c.b16 %v1089, %v1087
        %v1168 = vpack.c.b16 %v1090, %v1088
        %v1169 = vpack.c.b16 %v1093, %v1091
        %v1170 = vpack.c.b16 %v1094, %v1092
        %v1171 = vpack.c.b16 %v1097, %v1095
        %v1172 = vpack.c.b16 %v1098, %v1096
        %v1173 = vpack.c.b16 %v1101, %v1099
        %v1174 = vpack.c.b16 %v1102, %v1100
        %v1175 = vpack.c.b16 %v1105, %v1103
        %v1176 = vpack.c.b16 %v1106, %v1104
        %v1177 = vpack.c.b16 %v1109, %v1107
        %v1178 = vpack.c.b16 %v1110, %v1108
        %v1179 = vpack.c.b16 %v1113, %v1111
        %v1180 = vpack.c.b16 %v1114, %v1112
        %v1181 = vpack.c.b16 %v1117, %v1115
        %v1182 = vpack.c.b16 %v1118, %v1116
        %1247 = vmatpush.bf16.msra.mxu0 %v1133
        %1248 = vmatpush.bf16.msra.mxu0 %v1131
        %1249 = vmatpush.bf16.msra.mxu0 %v1129
        %1250 = vmatpush.bf16.msra.mxu0 %v1127
        %1251 = vmatpush.bf16.msra.mxu0 %v1125
        %1252 = vmatpush.bf16.msra.mxu0 %v1123
        %1253 = vmatpush.bf16.msra.mxu0 %v1121
        %1254 = vmatpush.bf16.msra.mxu0 %v1119
        %1255 = vmatmul.bf16.gmra.mxu0 %v863
        %v1256 = vpop.f32.mrf.mxu0
        %v1257 = vadd.f32 %v763, %v1256
        %v1258 = vpop.f32.mrf.mxu0
        %v1259 = vadd.f32 %v763, %v1258
        %1260 = vmatmul.bf16.gmra.mxu0 %v867
        %v1261 = vpop.f32.mrf.mxu0
        %v1262 = vadd.f32 %v763, %v1261
        %v1263 = vpop.f32.mrf.mxu0
        %v1264 = vadd.f32 %v763, %v1263
        %1265 = vmatmul.bf16.gmra.mxu0 %v871
        %v1266 = vpop.f32.mrf.mxu0
        %v1267 = vadd.f32 %v763, %v1266
        %v1268 = vpop.f32.mrf.mxu0
        %v1269 = vadd.f32 %v763, %v1268
        %1270 = vmatmul.bf16.gmra.mxu0 %v875
        %v1271 = vpop.f32.mrf.mxu0
        %v1272 = vadd.f32 %v763, %v1271
        %v1273 = vpop.f32.mrf.mxu0
        %v1274 = vadd.f32 %v763, %v1273
        %1275 = vmatmul.bf16.gmra.mxu0 %v879
        %v1276 = vpop.f32.mrf.mxu0
        %v1277 = vadd.f32 %v763, %v1276
        %v1278 = vpop.f32.mrf.mxu0
        %v1279 = vadd.f32 %v763, %v1278
        %1280 = vmatmul.bf16.gmra.mxu0 %v883
        %v1281 = vpop.f32.mrf.mxu0
        %v1282 = vadd.f32 %v763, %v1281
        %v1283 = vpop.f32.mrf.mxu0
        %v1284 = vadd.f32 %v763, %v1283
        %1285 = vmatmul.bf16.gmra.mxu0 %v887
        %v1286 = vpop.f32.mrf.mxu0
        %v1287 = vadd.f32 %v763, %v1286
        %v1288 = vpop.f32.mrf.mxu0
        %v1289 = vadd.f32 %v763, %v1288
        %1290 = vmatmul.bf16.gmra.mxu0 %v891
        %v1291 = vpop.f32.mrf.mxu0
        %v1292 = vadd.f32 %v763, %v1291
        %v1293 = vpop.f32.mrf.mxu0
        %v1294 = vadd.f32 %v763, %v1293
        %1295 = vdwg.mxu0
        %1296 = vmatpush.bf16.msra.mxu0 %v1149
        %1297 = vmatpush.bf16.msra.mxu0 %v1147
        %1298 = vmatpush.bf16.msra.mxu0 %v1145
        %1299 = vmatpush.bf16.msra.mxu0 %v1143
        %1300 = vmatpush.bf16.msra.mxu0 %v1141
        %1301 = vmatpush.bf16.msra.mxu0 %v1139
        %1302 = vmatpush.bf16.msra.mxu0 %v1137
        %1303 = vmatpush.bf16.msra.mxu0 %v1135
        %1304 = vmatmul.bf16.gmra.mxu0 %v864
        %v1305 = vpop.f32.mrf.mxu0
        %v1306 = vadd.f32 %v1257, %v1305
        %v1307 = vpop.f32.mrf.mxu0
        %v1308 = vadd.f32 %v1259, %v1307
        %1309 = vmatmul.bf16.gmra.mxu0 %v868
        %v1310 = vpop.f32.mrf.mxu0
        %v1311 = vadd.f32 %v1262, %v1310
        %v1312 = vpop.f32.mrf.mxu0
        %v1313 = vadd.f32 %v1264, %v1312
        %1314 = vmatmul.bf16.gmra.mxu0 %v872
        %v1315 = vpop.f32.mrf.mxu0
        %v1316 = vadd.f32 %v1267, %v1315
        %v1317 = vpop.f32.mrf.mxu0
        %v1318 = vadd.f32 %v1269, %v1317
        %1319 = vmatmul.bf16.gmra.mxu0 %v876
        %v1320 = vpop.f32.mrf.mxu0
        %v1321 = vadd.f32 %v1272, %v1320
        %v1322 = vpop.f32.mrf.mxu0
        %v1323 = vadd.f32 %v1274, %v1322
        %1324 = vmatmul.bf16.gmra.mxu0 %v880
        %v1325 = vpop.f32.mrf.mxu0
        %v1326 = vadd.f32 %v1277, %v1325
        %v1327 = vpop.f32.mrf.mxu0
        %v1328 = vadd.f32 %v1279, %v1327
        %1329 = vmatmul.bf16.gmra.mxu0 %v884
        %v1330 = vpop.f32.mrf.mxu0
        %v1331 = vadd.f32 %v1282, %v1330
        %v1332 = vpop.f32.mrf.mxu0
        %v1333 = vadd.f32 %v1284, %v1332
        %1334 = vmatmul.bf16.gmra.mxu0 %v888
        %v1335 = vpop.f32.mrf.mxu0
        %v1336 = vadd.f32 %v1287, %v1335
        %v1337 = vpop.f32.mrf.mxu0
        %v1338 = vadd.f32 %v1289, %v1337
        %1339 = vmatmul.bf16.gmra.mxu0 %v892
        %v1340 = vpop.f32.mrf.mxu0
        %v1341 = vadd.f32 %v1292, %v1340
        %v1342 = vpop.f32.mrf.mxu0
        %v1343 = vadd.f32 %v1294, %v1342
        %1344 = vdwg.mxu0
        %1345 = vmatpush.bf16.msra.mxu0 %v1165
        %1346 = vmatpush.bf16.msra.mxu0 %v1163
        %1347 = vmatpush.bf16.msra.mxu0 %v1161
        %1348 = vmatpush.bf16.msra.mxu0 %v1159
        %1349 = vmatpush.bf16.msra.mxu0 %v1157
        %1350 = vmatpush.bf16.msra.mxu0 %v1155
        %1351 = vmatpush.bf16.msra.mxu0 %v1153
        %1352 = vmatpush.bf16.msra.mxu0 %v1151
        %1353 = vmatmul.bf16.gmra.mxu0 %v865
        %v1354 = vpop.f32.mrf.mxu0
        %v1355 = vadd.f32 %v1306, %v1354
        %v1356 = vpop.f32.mrf.mxu0
        %v1357 = vadd.f32 %v1308, %v1356
        %1358 = vmatmul.bf16.gmra.mxu0 %v869
        %v1359 = vpop.f32.mrf.mxu0
        %v1360 = vadd.f32 %v1311, %v1359
        %v1361 = vpop.f32.mrf.mxu0
        %v1362 = vadd.f32 %v1313, %v1361
        %1363 = vmatmul.bf16.gmra.mxu0 %v873
        %v1364 = vpop.f32.mrf.mxu0
        %v1365 = vadd.f32 %v1316, %v1364
        %v1366 = vpop.f32.mrf.mxu0
        %v1367 = vadd.f32 %v1318, %v1366
        %1368 = vmatmul.bf16.gmra.mxu0 %v877
        %v1369 = vpop.f32.mrf.mxu0
        %v1370 = vadd.f32 %v1321, %v1369
        %v1371 = vpop.f32.mrf.mxu0
        %v1372 = vadd.f32 %v1323, %v1371
        %1373 = vmatmul.bf16.gmra.mxu0 %v881
        %v1374 = vpop.f32.mrf.mxu0
        %v1375 = vadd.f32 %v1326, %v1374
        %v1376 = vpop.f32.mrf.mxu0
        %v1377 = vadd.f32 %v1328, %v1376
        %1378 = vmatmul.bf16.gmra.mxu0 %v885
        %v1379 = vpop.f32.mrf.mxu0
        %v1380 = vadd.f32 %v1331, %v1379
        %v1381 = vpop.f32.mrf.mxu0
        %v1382 = vadd.f32 %v1333, %v1381
        %1383 = vmatmul.bf16.gmra.mxu0 %v889
        %v1384 = vpop.f32.mrf.mxu0
        %v1385 = vadd.f32 %v1336, %v1384
        %v1386 = vpop.f32.mrf.mxu0
        %v1387 = vadd.f32 %v1338, %v1386
        %1388 = vmatmul.bf16.gmra.mxu0 %v893
        %v1389 = vpop.f32.mrf.mxu0
        %v1390 = vadd.f32 %v1341, %v1389
        %v1391 = vpop.f32.mrf.mxu0
        %v1392 = vadd.f32 %v1343, %v1391
        %1393 = vdwg.mxu0
        %1394 = vmatpush.bf16.msra.mxu0 %v1181
        %1395 = vmatpush.bf16.msra.mxu0 %v1179
        %1396 = vmatpush.bf16.msra.mxu0 %v1177
        %1397 = vmatpush.bf16.msra.mxu0 %v1175
        %1398 = vmatpush.bf16.msra.mxu0 %v1173
        %1399 = vmatpush.bf16.msra.mxu0 %v1171
        %1400 = vmatpush.bf16.msra.mxu0 %v1169
        %1401 = vmatpush.bf16.msra.mxu0 %v1167
        %1402 = vmatmul.bf16.gmra.mxu0 %v866
        %v1403 = vpop.f32.mrf.mxu0
        %v1404 = vadd.f32 %v1355, %v1403
        %v1405 = vpop.f32.mrf.mxu0
        %v1406 = vadd.f32 %v1357, %v1405
        %1407 = vmatmul.bf16.gmra.mxu0 %v870
        %v1408 = vpop.f32.mrf.mxu0
        %v1409 = vadd.f32 %v1360, %v1408
        %v1410 = vpop.f32.mrf.mxu0
        %v1411 = vadd.f32 %v1362, %v1410
        %1412 = vmatmul.bf16.gmra.mxu0 %v874
        %v1413 = vpop.f32.mrf.mxu0
        %v1414 = vadd.f32 %v1365, %v1413
        %v1415 = vpop.f32.mrf.mxu0
        %v1416 = vadd.f32 %v1367, %v1415
        %1417 = vmatmul.bf16.gmra.mxu0 %v878
        %v1418 = vpop.f32.mrf.mxu0
        %v1419 = vadd.f32 %v1370, %v1418
        %v1420 = vpop.f32.mrf.mxu0
        %v1421 = vadd.f32 %v1372, %v1420
        %1422 = vmatmul.bf16.gmra.mxu0 %v882
        %v1423 = vpop.f32.mrf.mxu0
        %v1424 = vadd.f32 %v1375, %v1423
        %v1425 = vpop.f32.mrf.mxu0
        %v1426 = vadd.f32 %v1377, %v1425
        %1427 = vmatmul.bf16.gmra.mxu0 %v886
        %v1428 = vpop.f32.mrf.mxu0
        %v1429 = vadd.f32 %v1380, %v1428
        %v1430 = vpop.f32.mrf.mxu0
        %v1431 = vadd.f32 %v1382, %v1430
        %1432 = vmatmul.bf16.gmra.mxu0 %v890
        %v1433 = vpop.f32.mrf.mxu0
        %v1434 = vadd.f32 %v1385, %v1433
        %v1435 = vpop.f32.mrf.mxu0
        %v1436 = vadd.f32 %v1387, %v1435
        %1437 = vmatmul.bf16.gmra.mxu0 %v894
        %v1438 = vpop.f32.mrf.mxu0
        %v1439 = vadd.f32 %v1390, %v1438
        %v1440 = vpop.f32.mrf.mxu0
        %v1441 = vadd.f32 %v1392, %v1440
        %1442 = vdwg.mxu0
        %1443 = vmatpush.bf16.msra.mxu0 %v1134
        %1444 = vmatpush.bf16.msra.mxu0 %v1132
        %1445 = vmatpush.bf16.msra.mxu0 %v1130
        %1446 = vmatpush.bf16.msra.mxu0 %v1128
        %1447 = vmatpush.bf16.msra.mxu0 %v1126
        %1448 = vmatpush.bf16.msra.mxu0 %v1124
        %1449 = vmatpush.bf16.msra.mxu0 %v1122
        %1450 = vmatpush.bf16.msra.mxu0 %v1120
        %1451 = vmatmul.bf16.gmra.mxu0 %v863
        %v1452 = vpop.f32.mrf.mxu0
        %v1453 = vadd.f32 %v764, %v1452
        %v1454 = vpop.f32.mrf.mxu0
        %v1455 = vadd.f32 %v764, %v1454
        %1456 = vmatmul.bf16.gmra.mxu0 %v867
        %v1457 = vpop.f32.mrf.mxu0
        %v1458 = vadd.f32 %v764, %v1457
        %v1459 = vpop.f32.mrf.mxu0
        %v1460 = vadd.f32 %v764, %v1459
        %1461 = vmatmul.bf16.gmra.mxu0 %v871
        %v1462 = vpop.f32.mrf.mxu0
        %v1463 = vadd.f32 %v764, %v1462
        %v1464 = vpop.f32.mrf.mxu0
        %v1465 = vadd.f32 %v764, %v1464
        %1466 = vmatmul.bf16.gmra.mxu0 %v875
        %v1467 = vpop.f32.mrf.mxu0
        %v1468 = vadd.f32 %v764, %v1467
        %v1469 = vpop.f32.mrf.mxu0
        %v1470 = vadd.f32 %v764, %v1469
        %1471 = vmatmul.bf16.gmra.mxu0 %v879
        %v1472 = vpop.f32.mrf.mxu0
        %v1473 = vadd.f32 %v764, %v1472
        %v1474 = vpop.f32.mrf.mxu0
        %v1475 = vadd.f32 %v764, %v1474
        %1476 = vmatmul.bf16.gmra.mxu0 %v883
        %v1477 = vpop.f32.mrf.mxu0
        %v1478 = vadd.f32 %v764, %v1477
        %v1479 = vpop.f32.mrf.mxu0
        %v1480 = vadd.f32 %v764, %v1479
        %1481 = vmatmul.bf16.gmra.mxu0 %v887
        %v1482 = vpop.f32.mrf.mxu0
        %v1483 = vadd.f32 %v764, %v1482
        %v1484 = vpop.f32.mrf.mxu0
        %v1485 = vadd.f32 %v764, %v1484
        %1486 = vmatmul.bf16.gmra.mxu0 %v891
        %v1487 = vpop.f32.mrf.mxu0
        %v1488 = vadd.f32 %v764, %v1487
        %v1489 = vpop.f32.mrf.mxu0
        %v1490 = vadd.f32 %v764, %v1489
        %1491 = vdwg.mxu0
        %1492 = vmatpush.bf16.msra.mxu0 %v1150
        %1493 = vmatpush.bf16.msra.mxu0 %v1148
        %1494 = vmatpush.bf16.msra.mxu0 %v1146
        %1495 = vmatpush.bf16.msra.mxu0 %v1144
        %1496 = vmatpush.bf16.msra.mxu0 %v1142
        %1497 = vmatpush.bf16.msra.mxu0 %v1140
        %1498 = vmatpush.bf16.msra.mxu0 %v1138
        %1499 = vmatpush.bf16.msra.mxu0 %v1136
        %1500 = vmatmul.bf16.gmra.mxu0 %v864
        %v1501 = vpop.f32.mrf.mxu0
        %v1502 = vadd.f32 %v1453, %v1501
        %v1503 = vpop.f32.mrf.mxu0
        %v1504 = vadd.f32 %v1455, %v1503
        %1505 = vmatmul.bf16.gmra.mxu0 %v868
        %v1506 = vpop.f32.mrf.mxu0
        %v1507 = vadd.f32 %v1458, %v1506
        %v1508 = vpop.f32.mrf.mxu0
        %v1509 = vadd.f32 %v1460, %v1508
        %1510 = vmatmul.bf16.gmra.mxu0 %v872
        %v1511 = vpop.f32.mrf.mxu0
        %v1512 = vadd.f32 %v1463, %v1511
        %v1513 = vpop.f32.mrf.mxu0
        %v1514 = vadd.f32 %v1465, %v1513
        %1515 = vmatmul.bf16.gmra.mxu0 %v876
        %v1516 = vpop.f32.mrf.mxu0
        %v1517 = vadd.f32 %v1468, %v1516
        %v1518 = vpop.f32.mrf.mxu0
        %v1519 = vadd.f32 %v1470, %v1518
        %1520 = vmatmul.bf16.gmra.mxu0 %v880
        %v1521 = vpop.f32.mrf.mxu0
        %v1522 = vadd.f32 %v1473, %v1521
        %v1523 = vpop.f32.mrf.mxu0
        %v1524 = vadd.f32 %v1475, %v1523
        %1525 = vmatmul.bf16.gmra.mxu0 %v884
        %v1526 = vpop.f32.mrf.mxu0
        %v1527 = vadd.f32 %v1478, %v1526
        %v1528 = vpop.f32.mrf.mxu0
        %v1529 = vadd.f32 %v1480, %v1528
        %1530 = vmatmul.bf16.gmra.mxu0 %v888
        %v1531 = vpop.f32.mrf.mxu0
        %v1532 = vadd.f32 %v1483, %v1531
        %v1533 = vpop.f32.mrf.mxu0
        %v1534 = vadd.f32 %v1485, %v1533
        %1535 = vmatmul.bf16.gmra.mxu0 %v892
        %v1536 = vpop.f32.mrf.mxu0
        %v1537 = vadd.f32 %v1488, %v1536
        %v1538 = vpop.f32.mrf.mxu0
        %v1539 = vadd.f32 %v1490, %v1538
        %1540 = vdwg.mxu0
        %1541 = vmatpush.bf16.msra.mxu0 %v1166
        %1542 = vmatpush.bf16.msra.mxu0 %v1164
        %1543 = vmatpush.bf16.msra.mxu0 %v1162
        %1544 = vmatpush.bf16.msra.mxu0 %v1160
        %1545 = vmatpush.bf16.msra.mxu0 %v1158
        %1546 = vmatpush.bf16.msra.mxu0 %v1156
        %1547 = vmatpush.bf16.msra.mxu0 %v1154
        %1548 = vmatpush.bf16.msra.mxu0 %v1152
        %1549 = vmatmul.bf16.gmra.mxu0 %v865
        %v1550 = vpop.f32.mrf.mxu0
        %v1551 = vadd.f32 %v1502, %v1550
        %v1552 = vpop.f32.mrf.mxu0
        %v1553 = vadd.f32 %v1504, %v1552
        %1554 = vmatmul.bf16.gmra.mxu0 %v869
        %v1555 = vpop.f32.mrf.mxu0
        %v1556 = vadd.f32 %v1507, %v1555
        %v1557 = vpop.f32.mrf.mxu0
        %v1558 = vadd.f32 %v1509, %v1557
        %1559 = vmatmul.bf16.gmra.mxu0 %v873
        %v1560 = vpop.f32.mrf.mxu0
        %v1561 = vadd.f32 %v1512, %v1560
        %v1562 = vpop.f32.mrf.mxu0
        %v1563 = vadd.f32 %v1514, %v1562
        %1564 = vmatmul.bf16.gmra.mxu0 %v877
        %v1565 = vpop.f32.mrf.mxu0
        %v1566 = vadd.f32 %v1517, %v1565
        %v1567 = vpop.f32.mrf.mxu0
        %v1568 = vadd.f32 %v1519, %v1567
        %1569 = vmatmul.bf16.gmra.mxu0 %v881
        %v1570 = vpop.f32.mrf.mxu0
        %v1571 = vadd.f32 %v1522, %v1570
        %v1572 = vpop.f32.mrf.mxu0
        %v1573 = vadd.f32 %v1524, %v1572
        %1574 = vmatmul.bf16.gmra.mxu0 %v885
        %v1575 = vpop.f32.mrf.mxu0
        %v1576 = vadd.f32 %v1527, %v1575
        %v1577 = vpop.f32.mrf.mxu0
        %v1578 = vadd.f32 %v1529, %v1577
        %1579 = vmatmul.bf16.gmra.mxu0 %v889
        %v1580 = vpop.f32.mrf.mxu0
        %v1581 = vadd.f32 %v1532, %v1580
        %v1582 = vpop.f32.mrf.mxu0
        %v1583 = vadd.f32 %v1534, %v1582
        %1584 = vmatmul.bf16.gmra.mxu0 %v893
        %v1585 = vpop.f32.mrf.mxu0
        %v1586 = vadd.f32 %v1537, %v1585
        %v1587 = vpop.f32.mrf.mxu0
        %v1588 = vadd.f32 %v1539, %v1587
        %1589 = vdwg.mxu0
        %1590 = vmatpush.bf16.msra.mxu0 %v1182
        %1591 = vmatpush.bf16.msra.mxu0 %v1180
        %1592 = vmatpush.bf16.msra.mxu0 %v1178
        %1593 = vmatpush.bf16.msra.mxu0 %v1176
        %1594 = vmatpush.bf16.msra.mxu0 %v1174
        %1595 = vmatpush.bf16.msra.mxu0 %v1172
        %1596 = vmatpush.bf16.msra.mxu0 %v1170
        %1597 = vmatpush.bf16.msra.mxu0 %v1168
        %1598 = vmatmul.bf16.gmra.mxu0 %v866
        %v1599 = vpop.f32.mrf.mxu0
        %v1600 = vadd.f32 %v1551, %v1599
        %v1601 = vpop.f32.mrf.mxu0
        %v1602 = vadd.f32 %v1553, %v1601
        %1603 = vmatmul.bf16.gmra.mxu0 %v870
        %v1604 = vpop.f32.mrf.mxu0
        %v1605 = vadd.f32 %v1556, %v1604
        %v1606 = vpop.f32.mrf.mxu0
        %v1607 = vadd.f32 %v1558, %v1606
        %1608 = vmatmul.bf16.gmra.mxu0 %v874
        %v1609 = vpop.f32.mrf.mxu0
        %v1610 = vadd.f32 %v1561, %v1609
        %v1611 = vpop.f32.mrf.mxu0
        %v1612 = vadd.f32 %v1563, %v1611
        %1613 = vmatmul.bf16.gmra.mxu0 %v878
        %v1614 = vpop.f32.mrf.mxu0
        %v1615 = vadd.f32 %v1566, %v1614
        %v1616 = vpop.f32.mrf.mxu0
        %v1617 = vadd.f32 %v1568, %v1616
        %1618 = vmatmul.bf16.gmra.mxu0 %v882
        %v1619 = vpop.f32.mrf.mxu0
        %v1620 = vadd.f32 %v1571, %v1619
        %v1621 = vpop.f32.mrf.mxu0
        %v1622 = vadd.f32 %v1573, %v1621
        %1623 = vmatmul.bf16.gmra.mxu0 %v886
        %v1624 = vpop.f32.mrf.mxu0
        %v1625 = vadd.f32 %v1576, %v1624
        %v1626 = vpop.f32.mrf.mxu0
        %v1627 = vadd.f32 %v1578, %v1626
        %1628 = vmatmul.bf16.gmra.mxu0 %v890
        %v1629 = vpop.f32.mrf.mxu0
        %v1630 = vadd.f32 %v1581, %v1629
        %v1631 = vpop.f32.mrf.mxu0
        %v1632 = vadd.f32 %v1583, %v1631
        %1633 = vmatmul.bf16.gmra.mxu0 %v894
        %v1634 = vpop.f32.mrf.mxu0
        %v1635 = vadd.f32 %v1586, %v1634
        %v1636 = vpop.f32.mrf.mxu0
        %v1637 = vadd.f32 %v1588, %v1636
        %1638 = vdwg.mxu0
        %vm1639 = vcmp.gt.f32.partialorder %v1404, 0.0
        %vm1640 = vcmp.gt.f32.partialorder %v1600, 0.0
        %vm1641 = vcmp.gt.f32.partialorder %v1406, 0.0
        %vm1642 = vcmp.gt.f32.partialorder %v1602, 0.0
        %vm1643 = vcmp.gt.f32.partialorder %v1409, 0.0
        %vm1644 = vcmp.gt.f32.partialorder %v1605, 0.0
        %vm1645 = vcmp.gt.f32.partialorder %v1411, 0.0
        %vm1646 = vcmp.gt.f32.partialorder %v1607, 0.0
        %vm1647 = vcmp.gt.f32.partialorder %v1414, 0.0
        %vm1648 = vcmp.gt.f32.partialorder %v1610, 0.0
        %vm1649 = vcmp.gt.f32.partialorder %v1416, 0.0
        %vm1650 = vcmp.gt.f32.partialorder %v1612, 0.0
        %vm1651 = vcmp.gt.f32.partialorder %v1419, 0.0
        %vm1652 = vcmp.gt.f32.partialorder %v1615, 0.0
        %vm1653 = vcmp.gt.f32.partialorder %v1421, 0.0
        %vm1654 = vcmp.gt.f32.partialorder %v1617, 0.0
        %vm1655 = vcmp.gt.f32.partialorder %v1424, 0.0
        %vm1656 = vcmp.gt.f32.partialorder %v1620, 0.0
        %vm1657 = vcmp.gt.f32.partialorder %v1426, 0.0
        %vm1658 = vcmp.gt.f32.partialorder %v1622, 0.0
        %vm1659 = vcmp.gt.f32.partialorder %v1429, 0.0
        %vm1660 = vcmp.gt.f32.partialorder %v1625, 0.0
        %vm1661 = vcmp.gt.f32.partialorder %v1431, 0.0
        %vm1662 = vcmp.gt.f32.partialorder %v1627, 0.0
        %vm1663 = vcmp.gt.f32.partialorder %v1434, 0.0
        %vm1664 = vcmp.gt.f32.partialorder %v1630, 0.0
        %vm1665 = vcmp.gt.f32.partialorder %v1436, 0.0
        %vm1666 = vcmp.gt.f32.partialorder %v1632, 0.0
        %vm1667 = vcmp.gt.f32.partialorder %v1439, 0.0
        %vm1668 = vcmp.gt.f32.partialorder %v1635, 0.0
        %vm1669 = vcmp.gt.f32.partialorder %v1441, 0.0
        %vm1670 = vcmp.gt.f32.partialorder %v1637, 0.0
        %v1671 = vmul.f32 %v1404, 0.2
        %v1672 = vmul.f32 %v1600, 0.2
        %v1673 = vmul.f32 %v1406, 0.2
        %v1674 = vmul.f32 %v1602, 0.2
        %v1675 = vmul.f32 %v1409, 0.2
        %v1676 = vmul.f32 %v1605, 0.2
        %v1677 = vmul.f32 %v1411, 0.2
        %v1678 = vmul.f32 %v1607, 0.2
        %v1679 = vmul.f32 %v1414, 0.2
        %v1680 = vmul.f32 %v1610, 0.2
        %v1681 = vmul.f32 %v1416, 0.2
        %v1682 = vmul.f32 %v1612, 0.2
        %v1683 = vmul.f32 %v1419, 0.2
        %v1684 = vmul.f32 %v1615, 0.2
        %v1685 = vmul.f32 %v1421, 0.2
        %v1686 = vmul.f32 %v1617, 0.2
        %v1687 = vmul.f32 %v1424, 0.2
        %v1688 = vmul.f32 %v1620, 0.2
        %v1689 = vmul.f32 %v1426, 0.2
        %v1690 = vmul.f32 %v1622, 0.2
        %v1691 = vmul.f32 %v1429, 0.2
        %v1692 = vmul.f32 %v1625, 0.2
        %v1693 = vmul.f32 %v1431, 0.2
        %v1694 = vmul.f32 %v1627, 0.2
        %v1695 = vmul.f32 %v1434, 0.2
        %v1696 = vmul.f32 %v1630, 0.2
        %v1697 = vmul.f32 %v1436, 0.2
        %v1698 = vmul.f32 %v1632, 0.2
        %v1699 = vmul.f32 %v1439, 0.2
        %v1700 = vmul.f32 %v1635, 0.2
        %v1701 = vmul.f32 %v1441, 0.2
        %v1702 = vmul.f32 %v1637, 0.2
        %v1703 = vsel %vm1639, %v1404, %v1671
        %v1704 = vsel %vm1640, %v1600, %v1672
        %v1705 = vsel %vm1641, %v1406, %v1673
        %v1706 = vsel %vm1642, %v1602, %v1674
        %v1707 = vsel %vm1643, %v1409, %v1675
        %v1708 = vsel %vm1644, %v1605, %v1676
        %v1709 = vsel %vm1645, %v1411, %v1677
        %v1710 = vsel %vm1646, %v1607, %v1678
        %v1711 = vsel %vm1647, %v1414, %v1679
        %v1712 = vsel %vm1648, %v1610, %v1680
        %v1713 = vsel %vm1649, %v1416, %v1681
        %v1714 = vsel %vm1650, %v1612, %v1682
        %v1715 = vsel %vm1651, %v1419, %v1683
        %v1716 = vsel %vm1652, %v1615, %v1684
        %v1717 = vsel %vm1653, %v1421, %v1685
        %v1718 = vsel %vm1654, %v1617, %v1686
        %v1719 = vsel %vm1655, %v1424, %v1687
        %v1720 = vsel %vm1656, %v1620, %v1688
        %v1721 = vsel %vm1657, %v1426, %v1689
        %v1722 = vsel %vm1658, %v1622, %v1690
        %v1723 = vsel %vm1659, %v1429, %v1691
        %v1724 = vsel %vm1660, %v1625, %v1692
        %v1725 = vsel %vm1661, %v1431, %v1693
        %v1726 = vsel %vm1662, %v1627, %v1694
        %v1727 = vsel %vm1663, %v1434, %v1695
        %v1728 = vsel %vm1664, %v1630, %v1696
        %v1729 = vsel %vm1665, %v1436, %v1697
        %v1730 = vsel %vm1666, %v1632, %v1698
        %v1731 = vsel %vm1667, %v1439, %v1699
        %v1732 = vsel %vm1668, %v1635, %v1700
        %v1733 = vsel %vm1669, %v1441, %v1701
        %v1734 = vsel %vm1670, %v1637, %v1702
        %v1735 = vpack.c.bf16 %v1705, %v1703
        %v1736 = vpack.c.bf16 %v1706, %v1704
        %v1737 = vpack.c.bf16 %v1709, %v1707
        %v1738 = vpack.c.bf16 %v1710, %v1708
        %v1739 = vpack.c.bf16 %v1713, %v1711
        %v1740 = vpack.c.bf16 %v1714, %v1712
        %v1741 = vpack.c.bf16 %v1717, %v1715
        %v1742 = vpack.c.bf16 %v1718, %v1716
        %v1743 = vpack.c.bf16 %v1721, %v1719
        %v1744 = vpack.c.bf16 %v1722, %v1720
        %v1745 = vpack.c.bf16 %v1725, %v1723
        %v1746 = vpack.c.bf16 %v1726, %v1724
        %v1747 = vpack.c.bf16 %v1729, %v1727
        %v1748 = vpack.c.bf16 %v1730, %v1728
        %v1749 = vpack.c.bf16 %v1733, %v1731
        %v1750 = vpack.c.bf16 %v1734, %v1732
        %v1751 = vld [vmem:[#allocation8] sm:$0xf]
        %v1752 = vld [vmem:[#allocation8 + $0x4] sm:$0xf]
        %v1753 = vld [vmem:[#allocation8 + $0x8] sm:$0xf]
        %v1754 = vld [vmem:[#allocation8 + $0xc] sm:$0xf]
        %v1755 = vld [vmem:[#allocation8 + $0x10] sm:$0xf]
        %v1756 = vld [vmem:[#allocation8 + $0x14] sm:$0xf]
        %v1757 = vld [vmem:[#allocation8 + $0x18] sm:$0xf]
        %v1758 = vld [vmem:[#allocation8 + $0x1c] sm:$0xf]
        %v1759 = vld [vmem:[#allocation8 + $0x20] sm:$0xf]
        %v1760 = vld [vmem:[#allocation8 + $0x24] sm:$0xf]
        %v1761 = vld [vmem:[#allocation8 + $0x28] sm:$0xf]
        %v1762 = vld [vmem:[#allocation8 + $0x2c] sm:$0xf]
        %v1763 = vld [vmem:[#allocation8 + $0x30] sm:$0xf]
        %v1764 = vld [vmem:[#allocation8 + $0x34] sm:$0xf]
        %v1765 = vld [vmem:[#allocation8 + $0x38] sm:$0xf]
        %v1766 = vld [vmem:[#allocation8 + $0x3c] sm:$0xf]
        %v1767 = vld [vmem:[#allocation8 + $0x40] sm:$0xf]
        %v1768 = vld [vmem:[#allocation8 + $0x44] sm:$0xf]
        %v1769 = vld [vmem:[#allocation8 + $0x48] sm:$0xf]
        %v1770 = vld [vmem:[#allocation8 + $0x4c] sm:$0xf]
        %v1771 = vld [vmem:[#allocation8 + $0x50] sm:$0xf]
        %v1772 = vld [vmem:[#allocation8 + $0x54] sm:$0xf]
        %v1773 = vld [vmem:[#allocation8 + $0x58] sm:$0xf]
        %v1774 = vld [vmem:[#allocation8 + $0x5c] sm:$0xf]
        %v1775 = vld [vmem:[#allocation8 + $0x60] sm:$0xf]
        %v1776 = vld [vmem:[#allocation8 + $0x64] sm:$0xf]
        %v1777 = vld [vmem:[#allocation8 + $0x68] sm:$0xf]
        %v1778 = vld [vmem:[#allocation8 + $0x6c] sm:$0xf]
        %v1779 = vld [vmem:[#allocation8 + $0x70] sm:$0xf]
        %v1780 = vld [vmem:[#allocation8 + $0x74] sm:$0xf]
        %v1781 = vld [vmem:[#allocation8 + $0x78] sm:$0xf]
        %v1782 = vld [vmem:[#allocation8 + $0x7c] sm:$0xf]
        %v1783 = vld [vmem:[#allocation10] sm:$0x1]
        %v1785 = vperm.slane %v1783, 0
        %v1819 = vunpack.c.l.b16 %v1751
        %v1820 = vunpack.c.l.b16 %v1752
        %v1821 = vunpack.c.l.b16 %v1753
        %v1822 = vunpack.c.l.b16 %v1754
        %v1823 = vunpack.c.l.b16 %v1755
        %v1824 = vunpack.c.l.b16 %v1756
        %v1825 = vunpack.c.l.b16 %v1757
        %v1826 = vunpack.c.l.b16 %v1758
        %v1827 = vunpack.c.l.b16 %v1759
        %v1828 = vunpack.c.l.b16 %v1760
        %v1829 = vunpack.c.l.b16 %v1761
        %v1830 = vunpack.c.l.b16 %v1762
        %v1831 = vunpack.c.l.b16 %v1763
        %v1832 = vunpack.c.l.b16 %v1764
        %v1833 = vunpack.c.l.b16 %v1765
        %v1834 = vunpack.c.l.b16 %v1766
        %v1835 = vunpack.c.l.b16 %v1767
        %v1836 = vunpack.c.l.b16 %v1768
        %v1837 = vunpack.c.l.b16 %v1769
        %v1838 = vunpack.c.l.b16 %v1770
        %v1839 = vunpack.c.l.b16 %v1771
        %v1840 = vunpack.c.l.b16 %v1772
        %v1841 = vunpack.c.l.b16 %v1773
        %v1842 = vunpack.c.l.b16 %v1774
        %v1843 = vunpack.c.l.b16 %v1775
        %v1844 = vunpack.c.l.b16 %v1776
        %v1845 = vunpack.c.l.b16 %v1777
        %v1846 = vunpack.c.l.b16 %v1778
        %v1847 = vunpack.c.l.b16 %v1779
        %v1848 = vunpack.c.l.b16 %v1780
        %v1849 = vunpack.c.l.b16 %v1781
        %v1850 = vunpack.c.l.b16 %v1782
        %v1851 = vpack.c.b16 %v1820, %v1819
        %v1852 = vpack.c.b16 %v1822, %v1821
        %v1853 = vpack.c.b16 %v1824, %v1823
        %v1854 = vpack.c.b16 %v1826, %v1825
        %v1855 = vpack.c.b16 %v1828, %v1827
        %v1856 = vpack.c.b16 %v1830, %v1829
        %v1857 = vpack.c.b16 %v1832, %v1831
        %v1858 = vpack.c.b16 %v1834, %v1833
        %v1859 = vpack.c.b16 %v1836, %v1835
        %v1860 = vpack.c.b16 %v1838, %v1837
        %v1861 = vpack.c.b16 %v1840, %v1839
        %v1862 = vpack.c.b16 %v1842, %v1841
        %v1863 = vpack.c.b16 %v1844, %v1843
        %v1864 = vpack.c.b16 %v1846, %v1845
        %v1865 = vpack.c.b16 %v1848, %v1847
        %v1866 = vpack.c.b16 %v1850, %v1849
        %1883 = vmatpush.bf16.msra.mxu0 %v1858
        %1884 = vmatpush.bf16.msra.mxu0 %v1857
        %1885 = vmatpush.bf16.msra.mxu0 %v1856
        %1886 = vmatpush.bf16.msra.mxu0 %v1855
        %1887 = vmatpush.bf16.msra.mxu0 %v1854
        %1888 = vmatpush.bf16.msra.mxu0 %v1853
        %1889 = vmatpush.bf16.msra.mxu0 %v1852
        %1890 = vmatpush.bf16.msra.mxu0 %v1851
        %1891 = vmatmul.bf16.gmra.mxu0 %v1735
        %v1892 = vpop.f32.mrf.mxu0
        %v1893 = vadd.f32 %v1785, %v1892
        %v1894 = vpop.f32.mrf.mxu0
        %v1895 = vadd.f32 %v1785, %v1894
        %1896 = vmatmul.bf16.gmra.mxu0 %v1737
        %v1897 = vpop.f32.mrf.mxu0
        %v1898 = vadd.f32 %v1785, %v1897
        %v1899 = vpop.f32.mrf.mxu0
        %v1900 = vadd.f32 %v1785, %v1899
        %1901 = vmatmul.bf16.gmra.mxu0 %v1739
        %v1902 = vpop.f32.mrf.mxu0
        %v1903 = vadd.f32 %v1785, %v1902
        %v1904 = vpop.f32.mrf.mxu0
        %v1905 = vadd.f32 %v1785, %v1904
        %1906 = vmatmul.bf16.gmra.mxu0 %v1741
        %v1907 = vpop.f32.mrf.mxu0
        %v1908 = vadd.f32 %v1785, %v1907
        %v1909 = vpop.f32.mrf.mxu0
        %v1910 = vadd.f32 %v1785, %v1909
        %1911 = vmatmul.bf16.gmra.mxu0 %v1743
        %v1912 = vpop.f32.mrf.mxu0
        %v1913 = vadd.f32 %v1785, %v1912
        %v1914 = vpop.f32.mrf.mxu0
        %v1915 = vadd.f32 %v1785, %v1914
        %1916 = vmatmul.bf16.gmra.mxu0 %v1745
        %v1917 = vpop.f32.mrf.mxu0
        %v1918 = vadd.f32 %v1785, %v1917
        %v1919 = vpop.f32.mrf.mxu0
        %v1920 = vadd.f32 %v1785, %v1919
        %1921 = vmatmul.bf16.gmra.mxu0 %v1747
        %v1922 = vpop.f32.mrf.mxu0
        %v1923 = vadd.f32 %v1785, %v1922
        %v1924 = vpop.f32.mrf.mxu0
        %v1925 = vadd.f32 %v1785, %v1924
        %1926 = vmatmul.bf16.gmra.mxu0 %v1749
        %v1927 = vpop.f32.mrf.mxu0
        %v1928 = vadd.f32 %v1785, %v1927
        %v1929 = vpop.f32.mrf.mxu0
        %v1930 = vadd.f32 %v1785, %v1929
        %1931 = vdwg.mxu0
        %1932 = vmatpush.bf16.msra.mxu0 %v1866
        %1933 = vmatpush.bf16.msra.mxu0 %v1865
        %1934 = vmatpush.bf16.msra.mxu0 %v1864
        %1935 = vmatpush.bf16.msra.mxu0 %v1863
        %1936 = vmatpush.bf16.msra.mxu0 %v1862
        %1937 = vmatpush.bf16.msra.mxu0 %v1861
        %1938 = vmatpush.bf16.msra.mxu0 %v1860
        %1939 = vmatpush.bf16.msra.mxu0 %v1859
        %1940 = vmatmul.bf16.gmra.mxu0 %v1736
        %v1941 = vpop.f32.mrf.mxu0
        %v1942 = vadd.f32 %v1893, %v1941
        %v1943 = vpop.f32.mrf.mxu0
        %v1944 = vadd.f32 %v1895, %v1943
        %1945 = vmatmul.bf16.gmra.mxu0 %v1738
        %v1946 = vpop.f32.mrf.mxu0
        %v1947 = vadd.f32 %v1898, %v1946
        %v1948 = vpop.f32.mrf.mxu0
        %v1949 = vadd.f32 %v1900, %v1948
        %1950 = vmatmul.bf16.gmra.mxu0 %v1740
        %v1951 = vpop.f32.mrf.mxu0
        %v1952 = vadd.f32 %v1903, %v1951
        %v1953 = vpop.f32.mrf.mxu0
        %v1954 = vadd.f32 %v1905, %v1953
        %1955 = vmatmul.bf16.gmra.mxu0 %v1742
        %v1956 = vpop.f32.mrf.mxu0
        %v1957 = vadd.f32 %v1908, %v1956
        %v1958 = vpop.f32.mrf.mxu0
        %v1959 = vadd.f32 %v1910, %v1958
        %1960 = vmatmul.bf16.gmra.mxu0 %v1744
        %v1961 = vpop.f32.mrf.mxu0
        %v1962 = vadd.f32 %v1913, %v1961
        %v1963 = vpop.f32.mrf.mxu0
        %v1964 = vadd.f32 %v1915, %v1963
        %1965 = vmatmul.bf16.gmra.mxu0 %v1746
        %v1966 = vpop.f32.mrf.mxu0
        %v1967 = vadd.f32 %v1918, %v1966
        %v1968 = vpop.f32.mrf.mxu0
        %v1969 = vadd.f32 %v1920, %v1968
        %1970 = vmatmul.bf16.gmra.mxu0 %v1748
        %v1971 = vpop.f32.mrf.mxu0
        %v1972 = vadd.f32 %v1923, %v1971
        %v1973 = vpop.f32.mrf.mxu0
        %v1974 = vadd.f32 %v1925, %v1973
        %1975 = vmatmul.bf16.gmra.mxu0 %v1750
        %v1976 = vpop.f32.mrf.mxu0
        %v1977 = vadd.f32 %v1928, %v1976
        %v1978 = vpop.f32.mrf.mxu0
        %v1979 = vadd.f32 %v1930, %v1978
        %1980 = vdwg.mxu0
        %v1981 = vld [vmem:[#allocation11] sm:$0xf]
        %v1982 = vld [vmem:[#allocation11 + $0x4] sm:$0xf]
        %v1983 = vld [vmem:[#allocation11 + $0x8] sm:$0xf]
        %v1984 = vld [vmem:[#allocation11 + $0xc] sm:$0xf]
        %v1985 = vld [vmem:[#allocation11 + $0x10] sm:$0xf]
        %v1986 = vld [vmem:[#allocation11 + $0x14] sm:$0xf]
        %v1987 = vld [vmem:[#allocation11 + $0x18] sm:$0xf]
        %v1988 = vld [vmem:[#allocation11 + $0x1c] sm:$0xf]
        %v1989 = vld [vmem:[#allocation11 + $0x20] sm:$0xf]
        %v1990 = vld [vmem:[#allocation11 + $0x24] sm:$0xf]
        %v1991 = vld [vmem:[#allocation11 + $0x28] sm:$0xf]
        %v1992 = vld [vmem:[#allocation11 + $0x2c] sm:$0xf]
        %v1993 = vld [vmem:[#allocation11 + $0x30] sm:$0xf]
        %v1994 = vld [vmem:[#allocation11 + $0x34] sm:$0xf]
        %v1995 = vld [vmem:[#allocation11 + $0x38] sm:$0xf]
        %v1996 = vld [vmem:[#allocation11 + $0x3c] sm:$0xf]
        %v1997 = vld [vmem:[#allocation11 + $0x40] sm:$0xf]
        %v1998 = vld [vmem:[#allocation11 + $0x44] sm:$0xf]
        %v1999 = vld [vmem:[#allocation11 + $0x48] sm:$0xf]
        %v2000 = vld [vmem:[#allocation11 + $0x4c] sm:$0xf]
        %v2001 = vld [vmem:[#allocation11 + $0x50] sm:$0xf]
        %v2002 = vld [vmem:[#allocation11 + $0x54] sm:$0xf]
        %v2003 = vld [vmem:[#allocation11 + $0x58] sm:$0xf]
        %v2004 = vld [vmem:[#allocation11 + $0x5c] sm:$0xf]
        %v2005 = vld [vmem:[#allocation11 + $0x60] sm:$0xf]
        %v2006 = vld [vmem:[#allocation11 + $0x64] sm:$0xf]
        %v2007 = vld [vmem:[#allocation11 + $0x68] sm:$0xf]
        %v2008 = vld [vmem:[#allocation11 + $0x6c] sm:$0xf]
        %v2009 = vld [vmem:[#allocation11 + $0x70] sm:$0xf]
        %v2010 = vld [vmem:[#allocation11 + $0x74] sm:$0xf]
        %v2011 = vld [vmem:[#allocation11 + $0x78] sm:$0xf]
        %v2012 = vld [vmem:[#allocation11 + $0x7c] sm:$0xf]
        %v2013 = vld [vmem:[#allocation13] sm:$0x1]
        %v2015 = vperm.slane %v2013, 0
        %v2049 = vunpack.c.l.b16 %v1981
        %v2050 = vunpack.c.l.b16 %v1982
        %v2051 = vunpack.c.l.b16 %v1983
        %v2052 = vunpack.c.l.b16 %v1984
        %v2053 = vunpack.c.l.b16 %v1985
        %v2054 = vunpack.c.l.b16 %v1986
        %v2055 = vunpack.c.l.b16 %v1987
        %v2056 = vunpack.c.l.b16 %v1988
        %v2057 = vunpack.c.l.b16 %v1989
        %v2058 = vunpack.c.l.b16 %v1990
        %v2059 = vunpack.c.l.b16 %v1991
        %v2060 = vunpack.c.l.b16 %v1992
        %v2061 = vunpack.c.l.b16 %v1993
        %v2062 = vunpack.c.l.b16 %v1994
        %v2063 = vunpack.c.l.b16 %v1995
        %v2064 = vunpack.c.l.b16 %v1996
        %v2065 = vunpack.c.l.b16 %v1997
        %v2066 = vunpack.c.l.b16 %v1998
        %v2067 = vunpack.c.l.b16 %v1999
        %v2068 = vunpack.c.l.b16 %v2000
        %v2069 = vunpack.c.l.b16 %v2001
        %v2070 = vunpack.c.l.b16 %v2002
        %v2071 = vunpack.c.l.b16 %v2003
        %v2072 = vunpack.c.l.b16 %v2004
        %v2073 = vunpack.c.l.b16 %v2005
        %v2074 = vunpack.c.l.b16 %v2006
        %v2075 = vunpack.c.l.b16 %v2007
        %v2076 = vunpack.c.l.b16 %v2008
        %v2077 = vunpack.c.l.b16 %v2009
        %v2078 = vunpack.c.l.b16 %v2010
        %v2079 = vunpack.c.l.b16 %v2011
        %v2080 = vunpack.c.l.b16 %v2012
        %v2081 = vpack.c.b16 %v2050, %v2049
        %v2082 = vpack.c.b16 %v2052, %v2051
        %v2083 = vpack.c.b16 %v2054, %v2053
        %v2084 = vpack.c.b16 %v2056, %v2055
        %v2085 = vpack.c.b16 %v2058, %v2057
        %v2086 = vpack.c.b16 %v2060, %v2059
        %v2087 = vpack.c.b16 %v2062, %v2061
        %v2088 = vpack.c.b16 %v2064, %v2063
        %v2089 = vpack.c.b16 %v2066, %v2065
        %v2090 = vpack.c.b16 %v2068, %v2067
        %v2091 = vpack.c.b16 %v2070, %v2069
        %v2092 = vpack.c.b16 %v2072, %v2071
        %v2093 = vpack.c.b16 %v2074, %v2073
        %v2094 = vpack.c.b16 %v2076, %v2075
        %v2095 = vpack.c.b16 %v2078, %v2077
        %v2096 = vpack.c.b16 %v2080, %v2079
        %2113 = vmatpush.bf16.msra.mxu0 %v2088
        %2114 = vmatpush.bf16.msra.mxu0 %v2087
        %2115 = vmatpush.bf16.msra.mxu0 %v2086
        %2116 = vmatpush.bf16.msra.mxu0 %v2085
        %2117 = vmatpush.bf16.msra.mxu0 %v2084
        %2118 = vmatpush.bf16.msra.mxu0 %v2083
        %2119 = vmatpush.bf16.msra.mxu0 %v2082
        %2120 = vmatpush.bf16.msra.mxu0 %v2081
        %2121 = vmatmul.bf16.gmra.mxu0 %v1735
        %v2122 = vpop.f32.mrf.mxu0
        %v2123 = vadd.f32 %v2015, %v2122
        %v2124 = vpop.f32.mrf.mxu0
        %v2125 = vadd.f32 %v2015, %v2124
        %2126 = vmatmul.bf16.gmra.mxu0 %v1737
        %v2127 = vpop.f32.mrf.mxu0
        %v2128 = vadd.f32 %v2015, %v2127
        %v2129 = vpop.f32.mrf.mxu0
        %v2130 = vadd.f32 %v2015, %v2129
        %2131 = vmatmul.bf16.gmra.mxu0 %v1739
        %v2132 = vpop.f32.mrf.mxu0
        %v2133 = vadd.f32 %v2015, %v2132
        %v2134 = vpop.f32.mrf.mxu0
        %v2135 = vadd.f32 %v2015, %v2134
        %2136 = vmatmul.bf16.gmra.mxu0 %v1741
        %v2137 = vpop.f32.mrf.mxu0
        %v2138 = vadd.f32 %v2015, %v2137
        %v2139 = vpop.f32.mrf.mxu0
        %v2140 = vadd.f32 %v2015, %v2139
        %2141 = vmatmul.bf16.gmra.mxu0 %v1743
        %v2142 = vpop.f32.mrf.mxu0
        %v2143 = vadd.f32 %v2015, %v2142
        %v2144 = vpop.f32.mrf.mxu0
        %v2145 = vadd.f32 %v2015, %v2144
        %2146 = vmatmul.bf16.gmra.mxu0 %v1745
        %v2147 = vpop.f32.mrf.mxu0
        %v2148 = vadd.f32 %v2015, %v2147
        %v2149 = vpop.f32.mrf.mxu0
        %v2150 = vadd.f32 %v2015, %v2149
        %2151 = vmatmul.bf16.gmra.mxu0 %v1747
        %v2152 = vpop.f32.mrf.mxu0
        %v2153 = vadd.f32 %v2015, %v2152
        %v2154 = vpop.f32.mrf.mxu0
        %v2155 = vadd.f32 %v2015, %v2154
        %2156 = vmatmul.bf16.gmra.mxu0 %v1749
        %v2157 = vpop.f32.mrf.mxu0
        %v2158 = vadd.f32 %v2015, %v2157
        %v2159 = vpop.f32.mrf.mxu0
        %v2160 = vadd.f32 %v2015, %v2159
        %2161 = vdwg.mxu0
        %2162 = vmatpush.bf16.msra.mxu0 %v2096
        %2163 = vmatpush.bf16.msra.mxu0 %v2095
        %2164 = vmatpush.bf16.msra.mxu0 %v2094
        %2165 = vmatpush.bf16.msra.mxu0 %v2093
        %2166 = vmatpush.bf16.msra.mxu0 %v2092
        %2167 = vmatpush.bf16.msra.mxu0 %v2091
        %2168 = vmatpush.bf16.msra.mxu0 %v2090
        %2169 = vmatpush.bf16.msra.mxu0 %v2089
        %2170 = vmatmul.bf16.gmra.mxu0 %v1736
        %v2171 = vpop.f32.mrf.mxu0
        %v2172 = vadd.f32 %v2123, %v2171
        %v2173 = vpop.f32.mrf.mxu0
        %v2174 = vadd.f32 %v2125, %v2173
        %2175 = vmatmul.bf16.gmra.mxu0 %v1738
        %v2176 = vpop.f32.mrf.mxu0
        %v2177 = vadd.f32 %v2128, %v2176
        %v2178 = vpop.f32.mrf.mxu0
        %v2179 = vadd.f32 %v2130, %v2178
        %2180 = vmatmul.bf16.gmra.mxu0 %v1740
        %v2181 = vpop.f32.mrf.mxu0
        %v2182 = vadd.f32 %v2133, %v2181
        %v2183 = vpop.f32.mrf.mxu0
        %v2184 = vadd.f32 %v2135, %v2183
        %2185 = vmatmul.bf16.gmra.mxu0 %v1742
        %v2186 = vpop.f32.mrf.mxu0
        %v2187 = vadd.f32 %v2138, %v2186
        %v2188 = vpop.f32.mrf.mxu0
        %v2189 = vadd.f32 %v2140, %v2188
        %2190 = vmatmul.bf16.gmra.mxu0 %v1744
        %v2191 = vpop.f32.mrf.mxu0
        %v2192 = vadd.f32 %v2143, %v2191
        %v2193 = vpop.f32.mrf.mxu0
        %v2194 = vadd.f32 %v2145, %v2193
        %2195 = vmatmul.bf16.gmra.mxu0 %v1746
        %v2196 = vpop.f32.mrf.mxu0
        %v2197 = vadd.f32 %v2148, %v2196
        %v2198 = vpop.f32.mrf.mxu0
        %v2199 = vadd.f32 %v2150, %v2198
        %2200 = vmatmul.bf16.gmra.mxu0 %v1748
        %v2201 = vpop.f32.mrf.mxu0
        %v2202 = vadd.f32 %v2153, %v2201
        %v2203 = vpop.f32.mrf.mxu0
        %v2204 = vadd.f32 %v2155, %v2203
        %2205 = vmatmul.bf16.gmra.mxu0 %v1750
        %v2206 = vpop.f32.mrf.mxu0
        %v2207 = vadd.f32 %v2158, %v2206
        %v2208 = vpop.f32.mrf.mxu0
        %v2209 = vadd.f32 %v2160, %v2208
        %2210 = vdwg.mxu0
        %v2211 = vmul.f32 %v2172, 0.5
        %v2212 = vmul.f32 %v2174, 0.5
        %v2213 = vmul.f32 %v2177, 0.5
        %v2214 = vmul.f32 %v2179, 0.5
        %v2215 = vmul.f32 %v2182, 0.5
        %v2216 = vmul.f32 %v2184, 0.5
        %v2217 = vmul.f32 %v2187, 0.5
        %v2218 = vmul.f32 %v2189, 0.5
        %v2219 = vmul.f32 %v2192, 0.5
        %v2220 = vmul.f32 %v2194, 0.5
        %v2221 = vmul.f32 %v2197, 0.5
        %v2222 = vmul.f32 %v2199, 0.5
        %v2223 = vmul.f32 %v2202, 0.5
        %v2224 = vmul.f32 %v2204, 0.5
        %v2225 = vmul.f32 %v2207, 0.5
        %v2226 = vmul.f32 %v2209, 0.5
        %v2227 = vmul.f32 %v2211, 1.442695
        %v2228 = vpow.pop %v2227
        %v2229 = vmul.f32 %v2212, 1.442695
        %v2230 = vpow.pop %v2229
        %v2231 = vmul.f32 %v2213, 1.442695
        %v2232 = vpow.pop %v2231
        %v2233 = vmul.f32 %v2214, 1.442695
        %v2234 = vpow.pop %v2233
        %v2235 = vmul.f32 %v2215, 1.442695
        %v2236 = vpow.pop %v2235
        %v2237 = vmul.f32 %v2216, 1.442695
        %v2238 = vpow.pop %v2237
        %v2239 = vmul.f32 %v2217, 1.442695
        %v2240 = vpow.pop %v2239
        %v2241 = vmul.f32 %v2218, 1.442695
        %v2242 = vpow.pop %v2241
        %v2243 = vmul.f32 %v2219, 1.442695
        %v2244 = vpow.pop %v2243
        %v2245 = vmul.f32 %v2220, 1.442695
        %v2246 = vpow.pop %v2245
        %v2247 = vmul.f32 %v2221, 1.442695
        %v2248 = vpow.pop %v2247
        %v2249 = vmul.f32 %v2222, 1.442695
        %v2250 = vpow.pop %v2249
        %v2251 = vmul.f32 %v2223, 1.442695
        %v2252 = vpow.pop %v2251
        %v2253 = vmul.f32 %v2224, 1.442695
        %v2254 = vpow.pop %v2253
        %v2255 = vmul.f32 %v2225, 1.442695
        %v2256 = vpow.pop %v2255
        %v2257 = vmul.f32 %v2226, 1.442695
        %v2258 = vpow.pop %v2257
        %v2259 = vld [vmem:[%s564] sm:$0xff]
        %v2260 = vld [vmem:[%s564 + $0x8] sm:$0xff]
        %v2261 = vld [vmem:[%s564 + $0x10] sm:$0xff]
        %v2262 = vld [vmem:[%s564 + $0x18] sm:$0xff]
        %v2263 = vld [vmem:[%s564 + $0x20] sm:$0xff]
        %v2264 = vld [vmem:[%s564 + $0x28] sm:$0xff]
        %v2265 = vld [vmem:[%s564 + $0x30] sm:$0xff]
        %v2266 = vld [vmem:[%s564 + $0x38] sm:$0xff]
        %v2267 = vld [vmem:[%s564 + $0x40] sm:$0xff]
        %v2268 = vld [vmem:[%s564 + $0x48] sm:$0xff]
        %v2269 = vld [vmem:[%s564 + $0x50] sm:$0xff]
        %v2270 = vld [vmem:[%s564 + $0x58] sm:$0xff]
        %v2271 = vld [vmem:[%s564 + $0x60] sm:$0xff]
        %v2272 = vld [vmem:[%s564 + $0x68] sm:$0xff]
        %v2273 = vld [vmem:[%s564 + $0x70] sm:$0xff]
        %v2274 = vld [vmem:[%s564 + $0x78] sm:$0xff]
        %v2275 = vmul.f32 %v2228, %v2259
        %v2276 = vmul.f32 %v2230, %v2260
        %v2277 = vmul.f32 %v2232, %v2261
        %v2278 = vmul.f32 %v2234, %v2262
        %v2279 = vmul.f32 %v2236, %v2263
        %v2280 = vmul.f32 %v2238, %v2264
        %v2281 = vmul.f32 %v2240, %v2265
        %v2282 = vmul.f32 %v2242, %v2266
        %v2283 = vmul.f32 %v2244, %v2267
        %v2284 = vmul.f32 %v2246, %v2268
        %v2285 = vmul.f32 %v2248, %v2269
        %v2286 = vmul.f32 %v2250, %v2270
        %v2287 = vmul.f32 %v2252, %v2271
        %v2288 = vmul.f32 %v2254, %v2272
        %v2289 = vmul.f32 %v2256, %v2273
        %v2290 = vmul.f32 %v2258, %v2274
        %v2291 = vadd.f32 %v1942, %v2275
        %v2292 = vadd.f32 %v1944, %v2276
        %v2293 = vadd.f32 %v1947, %v2277
        %v2294 = vadd.f32 %v1949, %v2278
        %v2295 = vadd.f32 %v1952, %v2279
        %v2296 = vadd.f32 %v1954, %v2280
        %v2297 = vadd.f32 %v1957, %v2281
        %v2298 = vadd.f32 %v1959, %v2282
        %v2299 = vadd.f32 %v1962, %v2283
        %v2300 = vadd.f32 %v1964, %v2284
        %v2301 = vadd.f32 %v1967, %v2285
        %v2302 = vadd.f32 %v1969, %v2286
        %v2303 = vadd.f32 %v1972, %v2287
        %v2304 = vadd.f32 %v1974, %v2288
        %v2305 = vadd.f32 %v1977, %v2289
        %v2306 = vadd.f32 %v1979, %v2290
        %v2307 = vpack.c.bf16 %v2292, %v2291
        %v2308 = vpack.c.bf16 %v2294, %v2293
        %v2309 = vpack.c.bf16 %v2296, %v2295
        %v2310 = vpack.c.bf16 %v2298, %v2297
        %v2311 = vpack.c.bf16 %v2300, %v2299
        %v2312 = vpack.c.bf16 %v2302, %v2301
        %v2313 = vpack.c.bf16 %v2304, %v2303
        %v2314 = vpack.c.bf16 %v2306, %v2305
        %v2315 = vld [vmem:[#allocation14] sm:$0xff]
        %v2316 = vld [vmem:[#allocation14 + $0x8] sm:$0xff]
        %v2317 = vld [vmem:[#allocation14 + $0x10] sm:$0xff]
        %v2318 = vld [vmem:[#allocation14 + $0x18] sm:$0xff]
        %v2319 = vld [vmem:[#allocation14 + $0x20] sm:$0xff]
        %v2320 = vld [vmem:[#allocation14 + $0x28] sm:$0xff]
        %v2321 = vld [vmem:[#allocation14 + $0x30] sm:$0xff]
        %v2322 = vld [vmem:[#allocation14 + $0x38] sm:$0xff]
        %v2323 = vld [vmem:[#allocation14 + $0x40] sm:$0xff]
        %v2324 = vld [vmem:[#allocation14 + $0x48] sm:$0xff]
        %v2325 = vld [vmem:[#allocation14 + $0x50] sm:$0xff]
        %v2326 = vld [vmem:[#allocation14 + $0x58] sm:$0xff]
        %v2327 = vld [vmem:[#allocation14 + $0x60] sm:$0xff]
        %v2328 = vld [vmem:[#allocation14 + $0x68] sm:$0xff]
        %v2329 = vld [vmem:[#allocation14 + $0x70] sm:$0xff]
        %v2330 = vld [vmem:[#allocation14 + $0x78] sm:$0xff]
        %v2331 = vld [vmem:[%s9] sm:$0x3]
        %v2333 = vperm.slane %v2331, 0
        %v2334 = vperm.slane %v2331, 1
        %v2353 = vunpack.c.l.b16 %v2315
        %v2354 = vunpack.c.h.b16 %v2315
        %v2355 = vunpack.c.l.b16 %v2316
        %v2356 = vunpack.c.h.b16 %v2316
        %v2357 = vunpack.c.l.b16 %v2317
        %v2358 = vunpack.c.h.b16 %v2317
        %v2359 = vunpack.c.l.b16 %v2318
        %v2360 = vunpack.c.h.b16 %v2318
        %v2361 = vunpack.c.l.b16 %v2319
        %v2362 = vunpack.c.h.b16 %v2319
        %v2363 = vunpack.c.l.b16 %v2320
        %v2364 = vunpack.c.h.b16 %v2320
        %v2365 = vunpack.c.l.b16 %v2321
        %v2366 = vunpack.c.h.b16 %v2321
        %v2367 = vunpack.c.l.b16 %v2322
        %v2368 = vunpack.c.h.b16 %v2322
        %v2369 = vunpack.c.l.b16 %v2323
        %v2370 = vunpack.c.h.b16 %v2323
        %v2371 = vunpack.c.l.b16 %v2324
        %v2372 = vunpack.c.h.b16 %v2324
        %v2373 = vunpack.c.l.b16 %v2325
        %v2374 = vunpack.c.h.b16 %v2325
        %v2375 = vunpack.c.l.b16 %v2326
        %v2376 = vunpack.c.h.b16 %v2326
        %v2377 = vunpack.c.l.b16 %v2327
        %v2378 = vunpack.c.h.b16 %v2327
        %v2379 = vunpack.c.l.b16 %v2328
        %v2380 = vunpack.c.h.b16 %v2328
        %v2381 = vunpack.c.l.b16 %v2329
        %v2382 = vunpack.c.h.b16 %v2329
        %v2383 = vunpack.c.l.b16 %v2330
        %v2384 = vunpack.c.h.b16 %v2330
        %v2385 = vpack.c.b16 %v2355, %v2353
        %v2386 = vpack.c.b16 %v2356, %v2354
        %v2387 = vpack.c.b16 %v2359, %v2357
        %v2388 = vpack.c.b16 %v2360, %v2358
        %v2389 = vpack.c.b16 %v2363, %v2361
        %v2390 = vpack.c.b16 %v2364, %v2362
        %v2391 = vpack.c.b16 %v2367, %v2365
        %v2392 = vpack.c.b16 %v2368, %v2366
        %v2393 = vpack.c.b16 %v2371, %v2369
        %v2394 = vpack.c.b16 %v2372, %v2370
        %v2395 = vpack.c.b16 %v2375, %v2373
        %v2396 = vpack.c.b16 %v2376, %v2374
        %v2397 = vpack.c.b16 %v2379, %v2377
        %v2398 = vpack.c.b16 %v2380, %v2378
        %v2399 = vpack.c.b16 %v2383, %v2381
        %v2400 = vpack.c.b16 %v2384, %v2382
        %2417 = vmatpush.bf16.msra.mxu0 %v2399
        %2418 = vmatpush.bf16.msra.mxu0 %v2397
        %2419 = vmatpush.bf16.msra.mxu0 %v2395
        %2420 = vmatpush.bf16.msra.mxu0 %v2393
        %2421 = vmatpush.bf16.msra.mxu0 %v2391
        %2422 = vmatpush.bf16.msra.mxu0 %v2389
        %2423 = vmatpush.bf16.msra.mxu0 %v2387
        %2424 = vmatpush.bf16.msra.mxu0 %v2385
        %2425 = vmatmul.bf16.gmra.mxu0 %v2307
        %v2426 = vpop.f32.mrf.mxu0
        %v2427 = vadd.f32 %v2333, %v2426
        %v2428 = vpop.f32.mrf.mxu0
        %v2429 = vadd.f32 %v2333, %v2428
        %2430 = vmatmul.bf16.gmra.mxu0 %v2308
        %v2431 = vpop.f32.mrf.mxu0
        %v2432 = vadd.f32 %v2333, %v2431
        %v2433 = vpop.f32.mrf.mxu0
        %v2434 = vadd.f32 %v2333, %v2433
        %2435 = vmatmul.bf16.gmra.mxu0 %v2309
        %v2436 = vpop.f32.mrf.mxu0
        %v2437 = vadd.f32 %v2333, %v2436
        %v2438 = vpop.f32.mrf.mxu0
        %v2439 = vadd.f32 %v2333, %v2438
        %2440 = vmatmul.bf16.gmra.mxu0 %v2310
        %v2441 = vpop.f32.mrf.mxu0
        %v2442 = vadd.f32 %v2333, %v2441
        %v2443 = vpop.f32.mrf.mxu0
        %v2444 = vadd.f32 %v2333, %v2443
        %2445 = vmatmul.bf16.gmra.mxu0 %v2311
        %v2446 = vpop.f32.mrf.mxu0
        %v2447 = vadd.f32 %v2333, %v2446
        %v2448 = vpop.f32.mrf.mxu0
        %v2449 = vadd.f32 %v2333, %v2448
        %2450 = vmatmul.bf16.gmra.mxu0 %v2312
        %v2451 = vpop.f32.mrf.mxu0
        %v2452 = vadd.f32 %v2333, %v2451
        %v2453 = vpop.f32.mrf.mxu0
        %v2454 = vadd.f32 %v2333, %v2453
        %2455 = vmatmul.bf16.gmra.mxu0 %v2313
        %v2456 = vpop.f32.mrf.mxu0
        %v2457 = vadd.f32 %v2333, %v2456
        %v2458 = vpop.f32.mrf.mxu0
        %v2459 = vadd.f32 %v2333, %v2458
        %2460 = vmatmul.bf16.gmra.mxu0 %v2314
        %v2461 = vpop.f32.mrf.mxu0
        %v2462 = vadd.f32 %v2333, %v2461
        %v2463 = vpop.f32.mrf.mxu0
        %v2464 = vadd.f32 %v2333, %v2463
        %2465 = vdwg.mxu0
        %2466 = vmatpush.bf16.msra.mxu0 %v2400
        %2467 = vmatpush.bf16.msra.mxu0 %v2398
        %2468 = vmatpush.bf16.msra.mxu0 %v2396
        %2469 = vmatpush.bf16.msra.mxu0 %v2394
        %2470 = vmatpush.bf16.msra.mxu0 %v2392
        %2471 = vmatpush.bf16.msra.mxu0 %v2390
        %2472 = vmatpush.bf16.msra.mxu0 %v2388
        %2473 = vmatpush.bf16.msra.mxu0 %v2386
        %2474 = vmatmul.bf16.gmra.mxu0 %v2307
        %v2475 = vpop.f32.mrf.mxu0
        %v2476 = vadd.f32 %v2334, %v2475
        %v2477 = vpop.f32.mrf.mxu0
        %v2478 = vadd.f32 %v2334, %v2477
        %2479 = vmatmul.bf16.gmra.mxu0 %v2308
        %v2480 = vpop.f32.mrf.mxu0
        %v2481 = vadd.f32 %v2334, %v2480
        %v2482 = vpop.f32.mrf.mxu0
        %v2483 = vadd.f32 %v2334, %v2482
        %2484 = vmatmul.bf16.gmra.mxu0 %v2309
        %v2485 = vpop.f32.mrf.mxu0
        %v2486 = vadd.f32 %v2334, %v2485
        %v2487 = vpop.f32.mrf.mxu0
        %v2488 = vadd.f32 %v2334, %v2487
        %2489 = vmatmul.bf16.gmra.mxu0 %v2310
        %v2490 = vpop.f32.mrf.mxu0
        %v2491 = vadd.f32 %v2334, %v2490
        %v2492 = vpop.f32.mrf.mxu0
        %v2493 = vadd.f32 %v2334, %v2492
        %2494 = vmatmul.bf16.gmra.mxu0 %v2311
        %v2495 = vpop.f32.mrf.mxu0
        %v2496 = vadd.f32 %v2334, %v2495
        %v2497 = vpop.f32.mrf.mxu0
        %v2498 = vadd.f32 %v2334, %v2497
        %2499 = vmatmul.bf16.gmra.mxu0 %v2312
        %v2500 = vpop.f32.mrf.mxu0
        %v2501 = vadd.f32 %v2334, %v2500
        %v2502 = vpop.f32.mrf.mxu0
        %v2503 = vadd.f32 %v2334, %v2502
        %2504 = vmatmul.bf16.gmra.mxu0 %v2313
        %v2505 = vpop.f32.mrf.mxu0
        %v2506 = vadd.f32 %v2334, %v2505
        %v2507 = vpop.f32.mrf.mxu0
        %v2508 = vadd.f32 %v2334, %v2507
        %2509 = vmatmul.bf16.gmra.mxu0 %v2314
        %v2510 = vpop.f32.mrf.mxu0
        %v2511 = vadd.f32 %v2334, %v2510
        %v2512 = vpop.f32.mrf.mxu0
        %v2513 = vadd.f32 %v2334, %v2512
        %2514 = vdwg.mxu0
        %v2515 = vmax.f32 %v2427, 0.0
        %v2516 = vmax.f32 %v2476, 0.0
        %v2517 = vmax.f32 %v2429, 0.0
        %v2518 = vmax.f32 %v2478, 0.0
        %v2519 = vmax.f32 %v2432, 0.0
        %v2520 = vmax.f32 %v2481, 0.0
        %v2521 = vmax.f32 %v2434, 0.0
        %v2522 = vmax.f32 %v2483, 0.0
        %v2523 = vmax.f32 %v2437, 0.0
        %v2524 = vmax.f32 %v2486, 0.0
        %v2525 = vmax.f32 %v2439, 0.0
        %v2526 = vmax.f32 %v2488, 0.0
        %v2527 = vmax.f32 %v2442, 0.0
        %v2528 = vmax.f32 %v2491, 0.0
        %v2529 = vmax.f32 %v2444, 0.0
        %v2530 = vmax.f32 %v2493, 0.0
        %v2531 = vmax.f32 %v2447, 0.0
        %v2532 = vmax.f32 %v2496, 0.0
        %v2533 = vmax.f32 %v2449, 0.0
        %v2534 = vmax.f32 %v2498, 0.0
        %v2535 = vmax.f32 %v2452, 0.0
        %v2536 = vmax.f32 %v2501, 0.0
        %v2537 = vmax.f32 %v2454, 0.0
        %v2538 = vmax.f32 %v2503, 0.0
        %v2539 = vmax.f32 %v2457, 0.0
        %v2540 = vmax.f32 %v2506, 0.0
        %v2541 = vmax.f32 %v2459, 0.0
        %v2542 = vmax.f32 %v2508, 0.0
        %v2543 = vmax.f32 %v2462, 0.0
        %v2544 = vmax.f32 %v2511, 0.0
        %v2545 = vmax.f32 %v2464, 0.0
        %v2546 = vmax.f32 %v2513, 0.0
        %v2547 = vpack.c.bf16 %v2517, %v2515
        %v2548 = vpack.c.bf16 %v2518, %v2516
        %v2549 = vpack.c.bf16 %v2521, %v2519
        %v2550 = vpack.c.bf16 %v2522, %v2520
        %v2551 = vpack.c.bf16 %v2525, %v2523
        %v2552 = vpack.c.bf16 %v2526, %v2524
        %v2553 = vpack.c.bf16 %v2529, %v2527
        %v2554 = vpack.c.bf16 %v2530, %v2528
        %v2555 = vpack.c.bf16 %v2533, %v2531
        %v2556 = vpack.c.bf16 %v2534, %v2532
        %v2557 = vpack.c.bf16 %v2537, %v2535
        %v2558 = vpack.c.bf16 %v2538, %v2536
        %v2559 = vpack.c.bf16 %v2541, %v2539
        %v2560 = vpack.c.bf16 %v2542, %v2540
        %v2561 = vpack.c.bf16 %v2545, %v2543
        %v2562 = vpack.c.bf16 %v2546, %v2544
        %v2563 = vld [vmem:[#allocation16] sm:$0xff]
        %v2564 = vld [vmem:[#allocation16 + $0x8] sm:$0xff]
        %v2565 = vld [vmem:[#allocation16 + $0x10] sm:$0xff]
        %v2566 = vld [vmem:[#allocation16 + $0x18] sm:$0xff]
        %v2567 = vld [vmem:[#allocation16 + $0x20] sm:$0xff]
        %v2568 = vld [vmem:[#allocation16 + $0x28] sm:$0xff]
        %v2569 = vld [vmem:[#allocation16 + $0x30] sm:$0xff]
        %v2570 = vld [vmem:[#allocation16 + $0x38] sm:$0xff]
        %v2571 = vld [vmem:[#allocation16 + $0x40] sm:$0xff]
        %v2572 = vld [vmem:[#allocation16 + $0x48] sm:$0xff]
        %v2573 = vld [vmem:[#allocation16 + $0x50] sm:$0xff]
        %v2574 = vld [vmem:[#allocation16 + $0x58] sm:$0xff]
        %v2575 = vld [vmem:[#allocation16 + $0x60] sm:$0xff]
        %v2576 = vld [vmem:[#allocation16 + $0x68] sm:$0xff]
        %v2577 = vld [vmem:[#allocation16 + $0x70] sm:$0xff]
        %v2578 = vld [vmem:[#allocation16 + $0x78] sm:$0xff]
        %v2579 = vld [vmem:[#allocation16 + $0x80] sm:$0xff]
        %v2580 = vld [vmem:[#allocation16 + $0x88] sm:$0xff]
        %v2581 = vld [vmem:[#allocation16 + $0x90] sm:$0xff]
        %v2582 = vld [vmem:[#allocation16 + $0x98] sm:$0xff]
        %v2583 = vld [vmem:[#allocation16 + $0xa0] sm:$0xff]
        %v2584 = vld [vmem:[#allocation16 + $0xa8] sm:$0xff]
        %v2585 = vld [vmem:[#allocation16 + $0xb0] sm:$0xff]
        %v2586 = vld [vmem:[#allocation16 + $0xb8] sm:$0xff]
        %v2587 = vld [vmem:[#allocation16 + $0xc0] sm:$0xff]
        %v2588 = vld [vmem:[#allocation16 + $0xc8] sm:$0xff]
        %v2589 = vld [vmem:[#allocation16 + $0xd0] sm:$0xff]
        %v2590 = vld [vmem:[#allocation16 + $0xd8] sm:$0xff]
        %v2591 = vld [vmem:[#allocation16 + $0xe0] sm:$0xff]
        %v2592 = vld [vmem:[#allocation16 + $0xe8] sm:$0xff]
        %v2593 = vld [vmem:[#allocation16 + $0xf0] sm:$0xff]
        %v2594 = vld [vmem:[#allocation16 + $0xf8] sm:$0xff]
        %v2595 = vld [vmem:[#allocation16 + $0x100] sm:$0xff]
        %v2596 = vld [vmem:[#allocation16 + $0x108] sm:$0xff]
        %v2597 = vld [vmem:[#allocation16 + $0x110] sm:$0xff]
        %v2598 = vld [vmem:[#allocation16 + $0x118] sm:$0xff]
        %v2599 = vld [vmem:[#allocation16 + $0x120] sm:$0xff]
        %v2600 = vld [vmem:[#allocation16 + $0x128] sm:$0xff]
        %v2601 = vld [vmem:[#allocation16 + $0x130] sm:$0xff]
        %v2602 = vld [vmem:[#allocation16 + $0x138] sm:$0xff]
        %v2603 = vld [vmem:[#allocation16 + $0x140] sm:$0xff]
        %v2604 = vld [vmem:[#allocation16 + $0x148] sm:$0xff]
        %v2605 = vld [vmem:[#allocation16 + $0x150] sm:$0xff]
        %v2606 = vld [vmem:[#allocation16 + $0x158] sm:$0xff]
        %v2607 = vld [vmem:[#allocation16 + $0x160] sm:$0xff]
        %v2608 = vld [vmem:[#allocation16 + $0x168] sm:$0xff]
        %v2609 = vld [vmem:[#allocation16 + $0x170] sm:$0xff]
        %v2610 = vld [vmem:[#allocation16 + $0x178] sm:$0xff]
        %v2611 = vld [vmem:[#allocation16 + $0x180] sm:$0xff]
        %v2612 = vld [vmem:[#allocation16 + $0x188] sm:$0xff]
        %v2613 = vld [vmem:[#allocation16 + $0x190] sm:$0xff]
        %v2614 = vld [vmem:[#allocation16 + $0x198] sm:$0xff]
        %v2615 = vld [vmem:[#allocation16 + $0x1a0] sm:$0xff]
        %v2616 = vld [vmem:[#allocation16 + $0x1a8] sm:$0xff]
        %v2617 = vld [vmem:[#allocation16 + $0x1b0] sm:$0xff]
        %v2618 = vld [vmem:[#allocation16 + $0x1b8] sm:$0xff]
        %v2619 = vld [vmem:[#allocation16 + $0x1c0] sm:$0xff]
        %v2620 = vld [vmem:[#allocation16 + $0x1c8] sm:$0xff]
        %v2621 = vld [vmem:[#allocation16 + $0x1d0] sm:$0xff]
        %v2622 = vld [vmem:[#allocation16 + $0x1d8] sm:$0xff]
        %v2623 = vld [vmem:[#allocation16 + $0x1e0] sm:$0xff]
        %v2624 = vld [vmem:[#allocation16 + $0x1e8] sm:$0xff]
        %v2625 = vld [vmem:[#allocation16 + $0x1f0] sm:$0xff]
        %v2626 = vld [vmem:[#allocation16 + $0x1f8] sm:$0xff]
        %v2627 = vld [vmem:[%s11] sm:$0xf]
        %v2629 = vperm.slane %v2627, 0
        %v2630 = vperm.slane %v2627, 1
        %v2631 = vperm.slane %v2627, 2
        %v2632 = vperm.slane %v2627, 3
        %v2701 = vunpack.c.l.b16 %v2563
        %v2702 = vunpack.c.h.b16 %v2563
        %v2703 = vunpack.c.l.b16 %v2564
        %v2704 = vunpack.c.h.b16 %v2564
        %v2705 = vunpack.c.l.b16 %v2565
        %v2706 = vunpack.c.h.b16 %v2565
        %v2707 = vunpack.c.l.b16 %v2566
        %v2708 = vunpack.c.h.b16 %v2566
        %v2709 = vunpack.c.l.b16 %v2567
        %v2710 = vunpack.c.h.b16 %v2567
        %v2711 = vunpack.c.l.b16 %v2568
        %v2712 = vunpack.c.h.b16 %v2568
        %v2713 = vunpack.c.l.b16 %v2569
        %v2714 = vunpack.c.h.b16 %v2569
        %v2715 = vunpack.c.l.b16 %v2570
        %v2716 = vunpack.c.h.b16 %v2570
        %v2717 = vunpack.c.l.b16 %v2571
        %v2718 = vunpack.c.h.b16 %v2571
        %v2719 = vunpack.c.l.b16 %v2572
        %v2720 = vunpack.c.h.b16 %v2572
        %v2721 = vunpack.c.l.b16 %v2573
        %v2722 = vunpack.c.h.b16 %v2573
        %v2723 = vunpack.c.l.b16 %v2574
        %v2724 = vunpack.c.h.b16 %v2574
        %v2725 = vunpack.c.l.b16 %v2575
        %v2726 = vunpack.c.h.b16 %v2575
        %v2727 = vunpack.c.l.b16 %v2576
        %v2728 = vunpack.c.h.b16 %v2576
        %v2729 = vunpack.c.l.b16 %v2577
        %v2730 = vunpack.c.h.b16 %v2577
        %v2731 = vunpack.c.l.b16 %v2578
        %v2732 = vunpack.c.h.b16 %v2578
        %v2733 = vunpack.c.l.b16 %v2579
        %v2734 = vunpack.c.h.b16 %v2579
        %v2735 = vunpack.c.l.b16 %v2580
        %v2736 = vunpack.c.h.b16 %v2580
        %v2737 = vunpack.c.l.b16 %v2581
        %v2738 = vunpack.c.h.b16 %v2581
        %v2739 = vunpack.c.l.b16 %v2582
        %v2740 = vunpack.c.h.b16 %v2582
        %v2741 = vunpack.c.l.b16 %v2583
        %v2742 = vunpack.c.h.b16 %v2583
        %v2743 = vunpack.c.l.b16 %v2584
        %v2744 = vunpack.c.h.b16 %v2584
        %v2745 = vunpack.c.l.b16 %v2585
        %v2746 = vunpack.c.h.b16 %v2585
        %v2747 = vunpack.c.l.b16 %v2586
        %v2748 = vunpack.c.h.b16 %v2586
        %v2749 = vunpack.c.l.b16 %v2587
        %v2750 = vunpack.c.h.b16 %v2587
        %v2751 = vunpack.c.l.b16 %v2588
        %v2752 = vunpack.c.h.b16 %v2588
        %v2753 = vunpack.c.l.b16 %v2589
        %v2754 = vunpack.c.h.b16 %v2589
        %v2755 = vunpack.c.l.b16 %v2590
        %v2756 = vunpack.c.h.b16 %v2590
        %v2757 = vunpack.c.l.b16 %v2591
        %v2758 = vunpack.c.h.b16 %v2591
        %v2759 = vunpack.c.l.b16 %v2592
        %v2760 = vunpack.c.h.b16 %v2592
        %v2761 = vunpack.c.l.b16 %v2593
        %v2762 = vunpack.c.h.b16 %v2593
        %v2763 = vunpack.c.l.b16 %v2594
        %v2764 = vunpack.c.h.b16 %v2594
        %v2765 = vunpack.c.l.b16 %v2595
        %v2766 = vunpack.c.h.b16 %v2595
        %v2767 = vunpack.c.l.b16 %v2596
        %v2768 = vunpack.c.h.b16 %v2596
        %v2769 = vunpack.c.l.b16 %v2597
        %v2770 = vunpack.c.h.b16 %v2597
        %v2771 = vunpack.c.l.b16 %v2598
        %v2772 = vunpack.c.h.b16 %v2598
        %v2773 = vunpack.c.l.b16 %v2599
        %v2774 = vunpack.c.h.b16 %v2599
        %v2775 = vunpack.c.l.b16 %v2600
        %v2776 = vunpack.c.h.b16 %v2600
        %v2777 = vunpack.c.l.b16 %v2601
        %v2778 = vunpack.c.h.b16 %v2601
        %v2779 = vunpack.c.l.b16 %v2602
        %v2780 = vunpack.c.h.b16 %v2602
        %v2781 = vunpack.c.l.b16 %v2603
        %v2782 = vunpack.c.h.b16 %v2603
        %v2783 = vunpack.c.l.b16 %v2604
        %v2784 = vunpack.c.h.b16 %v2604
        %v2785 = vunpack.c.l.b16 %v2605
        %v2786 = vunpack.c.h.b16 %v2605
        %v2787 = vunpack.c.l.b16 %v2606
        %v2788 = vunpack.c.h.b16 %v2606
        %v2789 = vunpack.c.l.b16 %v2607
        %v2790 = vunpack.c.h.b16 %v2607
        %v2791 = vunpack.c.l.b16 %v2608
        %v2792 = vunpack.c.h.b16 %v2608
        %v2793 = vunpack.c.l.b16 %v2609
        %v2794 = vunpack.c.h.b16 %v2609
        %v2795 = vunpack.c.l.b16 %v2610
        %v2796 = vunpack.c.h.b16 %v2610
        %v2797 = vunpack.c.l.b16 %v2611
        %v2798 = vunpack.c.h.b16 %v2611
        %v2799 = vunpack.c.l.b16 %v2612
        %v2800 = vunpack.c.h.b16 %v2612
        %v2801 = vunpack.c.l.b16 %v2613
        %v2802 = vunpack.c.h.b16 %v2613
        %v2803 = vunpack.c.l.b16 %v2614
        %v2804 = vunpack.c.h.b16 %v2614
        %v2805 = vunpack.c.l.b16 %v2615
        %v2806 = vunpack.c.h.b16 %v2615
        %v2807 = vunpack.c.l.b16 %v2616
        %v2808 = vunpack.c.h.b16 %v2616
        %v2809 = vunpack.c.l.b16 %v2617
        %v2810 = vunpack.c.h.b16 %v2617
        %v2811 = vunpack.c.l.b16 %v2618
        %v2812 = vunpack.c.h.b16 %v2618
        %v2813 = vunpack.c.l.b16 %v2619
        %v2814 = vunpack.c.h.b16 %v2619
        %v2815 = vunpack.c.l.b16 %v2620
        %v2816 = vunpack.c.h.b16 %v2620
        %v2817 = vunpack.c.l.b16 %v2621
        %v2818 = vunpack.c.h.b16 %v2621
        %v2819 = vunpack.c.l.b16 %v2622
        %v2820 = vunpack.c.h.b16 %v2622
        %v2821 = vunpack.c.l.b16 %v2623
        %v2822 = vunpack.c.h.b16 %v2623
        %v2823 = vunpack.c.l.b16 %v2624
        %v2824 = vunpack.c.h.b16 %v2624
        %v2825 = vunpack.c.l.b16 %v2625
        %v2826 = vunpack.c.h.b16 %v2625
        %v2827 = vunpack.c.l.b16 %v2626
        %v2828 = vunpack.c.h.b16 %v2626
        %v2829 = vpack.c.b16 %v2705, %v2701
        %v2830 = vpack.c.b16 %v2706, %v2702
        %v2831 = vpack.c.b16 %v2707, %v2703
        %v2832 = vpack.c.b16 %v2708, %v2704
        %v2833 = vpack.c.b16 %v2713, %v2709
        %v2834 = vpack.c.b16 %v2714, %v2710
        %v2835 = vpack.c.b16 %v2715, %v2711
        %v2836 = vpack.c.b16 %v2716, %v2712
        %v2837 = vpack.c.b16 %v2721, %v2717
        %v2838 = vpack.c.b16 %v2722, %v2718
        %v2839 = vpack.c.b16 %v2723, %v2719
        %v2840 = vpack.c.b16 %v2724, %v2720
        %v2841 = vpack.c.b16 %v2729, %v2725
        %v2842 = vpack.c.b16 %v2730, %v2726
        %v2843 = vpack.c.b16 %v2731, %v2727
        %v2844 = vpack.c.b16 %v2732, %v2728
        %v2845 = vpack.c.b16 %v2737, %v2733
        %v2846 = vpack.c.b16 %v2738, %v2734
        %v2847 = vpack.c.b16 %v2739, %v2735
        %v2848 = vpack.c.b16 %v2740, %v2736
        %v2849 = vpack.c.b16 %v2745, %v2741
        %v2850 = vpack.c.b16 %v2746, %v2742
        %v2851 = vpack.c.b16 %v2747, %v2743
        %v2852 = vpack.c.b16 %v2748, %v2744
        %v2853 = vpack.c.b16 %v2753, %v2749
        %v2854 = vpack.c.b16 %v2754, %v2750
        %v2855 = vpack.c.b16 %v2755, %v2751
        %v2856 = vpack.c.b16 %v2756, %v2752
        %v2857 = vpack.c.b16 %v2761, %v2757
        %v2858 = vpack.c.b16 %v2762, %v2758
        %v2859 = vpack.c.b16 %v2763, %v2759
        %v2860 = vpack.c.b16 %v2764, %v2760
        %v2861 = vpack.c.b16 %v2769, %v2765
        %v2862 = vpack.c.b16 %v2770, %v2766
        %v2863 = vpack.c.b16 %v2771, %v2767
        %v2864 = vpack.c.b16 %v2772, %v2768
        %v2865 = vpack.c.b16 %v2777, %v2773
        %v2866 = vpack.c.b16 %v2778, %v2774
        %v2867 = vpack.c.b16 %v2779, %v2775
        %v2868 = vpack.c.b16 %v2780, %v2776
        %v2869 = vpack.c.b16 %v2785, %v2781
        %v2870 = vpack.c.b16 %v2786, %v2782
        %v2871 = vpack.c.b16 %v2787, %v2783
        %v2872 = vpack.c.b16 %v2788, %v2784
        %v2873 = vpack.c.b16 %v2793, %v2789
        %v2874 = vpack.c.b16 %v2794, %v2790
        %v2875 = vpack.c.b16 %v2795, %v2791
        %v2876 = vpack.c.b16 %v2796, %v2792
        %v2877 = vpack.c.b16 %v2801, %v2797
        %v2878 = vpack.c.b16 %v2802, %v2798
        %v2879 = vpack.c.b16 %v2803, %v2799
        %v2880 = vpack.c.b16 %v2804, %v2800
        %v2881 = vpack.c.b16 %v2809, %v2805
        %v2882 = vpack.c.b16 %v2810, %v2806
        %v2883 = vpack.c.b16 %v2811, %v2807
        %v2884 = vpack.c.b16 %v2812, %v2808
        %v2885 = vpack.c.b16 %v2817, %v2813
        %v2886 = vpack.c.b16 %v2818, %v2814
        %v2887 = vpack.c.b16 %v2819, %v2815
        %v2888 = vpack.c.b16 %v2820, %v2816
        %v2889 = vpack.c.b16 %v2825, %v2821
        %v2890 = vpack.c.b16 %v2826, %v2822
        %v2891 = vpack.c.b16 %v2827, %v2823
        %v2892 = vpack.c.b16 %v2828, %v2824
        %2957 = vmatpush.bf16.msra.mxu0 %v2857
        %2958 = vmatpush.bf16.msra.mxu0 %v2853
        %2959 = vmatpush.bf16.msra.mxu0 %v2849
        %2960 = vmatpush.bf16.msra.mxu0 %v2845
        %2961 = vmatpush.bf16.msra.mxu0 %v2841
        %2962 = vmatpush.bf16.msra.mxu0 %v2837
        %2963 = vmatpush.bf16.msra.mxu0 %v2833
        %2964 = vmatpush.bf16.msra.mxu0 %v2829
        %2965 = vmatmul.bf16.gmra.mxu0 %v2547
        %v2966 = vpop.f32.mrf.mxu0
        %v2967 = vadd.f32 %v2629, %v2966
        %v2968 = vpop.f32.mrf.mxu0
        %v2969 = vadd.f32 %v2629, %v2968
        %2970 = vmatmul.bf16.gmra.mxu0 %v2549
        %v2971 = vpop.f32.mrf.mxu0
        %v2972 = vadd.f32 %v2629, %v2971
        %v2973 = vpop.f32.mrf.mxu0
        %v2974 = vadd.f32 %v2629, %v2973
        %2975 = vmatmul.bf16.gmra.mxu0 %v2551
        %v2976 = vpop.f32.mrf.mxu0
        %v2977 = vadd.f32 %v2629, %v2976
        %v2978 = vpop.f32.mrf.mxu0
        %v2979 = vadd.f32 %v2629, %v2978
        %2980 = vmatmul.bf16.gmra.mxu0 %v2553
        %v2981 = vpop.f32.mrf.mxu0
        %v2982 = vadd.f32 %v2629, %v2981
        %v2983 = vpop.f32.mrf.mxu0
        %v2984 = vadd.f32 %v2629, %v2983
        %2985 = vmatmul.bf16.gmra.mxu0 %v2555
        %v2986 = vpop.f32.mrf.mxu0
        %v2987 = vadd.f32 %v2629, %v2986
        %v2988 = vpop.f32.mrf.mxu0
        %v2989 = vadd.f32 %v2629, %v2988
        %2990 = vmatmul.bf16.gmra.mxu0 %v2557
        %v2991 = vpop.f32.mrf.mxu0
        %v2992 = vadd.f32 %v2629, %v2991
        %v2993 = vpop.f32.mrf.mxu0
        %v2994 = vadd.f32 %v2629, %v2993
        %2995 = vmatmul.bf16.gmra.mxu0 %v2559
        %v2996 = vpop.f32.mrf.mxu0
        %v2997 = vadd.f32 %v2629, %v2996
        %v2998 = vpop.f32.mrf.mxu0
        %v2999 = vadd.f32 %v2629, %v2998
        %3000 = vmatmul.bf16.gmra.mxu0 %v2561
        %v3001 = vpop.f32.mrf.mxu0
        %v3002 = vadd.f32 %v2629, %v3001
        %v3003 = vpop.f32.mrf.mxu0
        %v3004 = vadd.f32 %v2629, %v3003
        %3005 = vdwg.mxu0
        %3006 = vmatpush.bf16.msra.mxu0 %v2889
        %3007 = vmatpush.bf16.msra.mxu0 %v2885
        %3008 = vmatpush.bf16.msra.mxu0 %v2881
        %3009 = vmatpush.bf16.msra.mxu0 %v2877
        %3010 = vmatpush.bf16.msra.mxu0 %v2873
        %3011 = vmatpush.bf16.msra.mxu0 %v2869
        %3012 = vmatpush.bf16.msra.mxu0 %v2865
        %3013 = vmatpush.bf16.msra.mxu0 %v2861
        %3014 = vmatmul.bf16.gmra.mxu0 %v2548
        %v3015 = vpop.f32.mrf.mxu0
        %v3016 = vadd.f32 %v2967, %v3015
        %v3017 = vpop.f32.mrf.mxu0
        %v3018 = vadd.f32 %v2969, %v3017
        %3019 = vmatmul.bf16.gmra.mxu0 %v2550
        %v3020 = vpop.f32.mrf.mxu0
        %v3021 = vadd.f32 %v2972, %v3020
        %v3022 = vpop.f32.mrf.mxu0
        %v3023 = vadd.f32 %v2974, %v3022
        %3024 = vmatmul.bf16.gmra.mxu0 %v2552
        %v3025 = vpop.f32.mrf.mxu0
        %v3026 = vadd.f32 %v2977, %v3025
        %v3027 = vpop.f32.mrf.mxu0
        %v3028 = vadd.f32 %v2979, %v3027
        %3029 = vmatmul.bf16.gmra.mxu0 %v2554
        %v3030 = vpop.f32.mrf.mxu0
        %v3031 = vadd.f32 %v2982, %v3030
        %v3032 = vpop.f32.mrf.mxu0
        %v3033 = vadd.f32 %v2984, %v3032
        %3034 = vmatmul.bf16.gmra.mxu0 %v2556
        %v3035 = vpop.f32.mrf.mxu0
        %v3036 = vadd.f32 %v2987, %v3035
        %v3037 = vpop.f32.mrf.mxu0
        %v3038 = vadd.f32 %v2989, %v3037
        %3039 = vmatmul.bf16.gmra.mxu0 %v2558
        %v3040 = vpop.f32.mrf.mxu0
        %v3041 = vadd.f32 %v2992, %v3040
        %v3042 = vpop.f32.mrf.mxu0
        %v3043 = vadd.f32 %v2994, %v3042
        %3044 = vmatmul.bf16.gmra.mxu0 %v2560
        %v3045 = vpop.f32.mrf.mxu0
        %v3046 = vadd.f32 %v2997, %v3045
        %v3047 = vpop.f32.mrf.mxu0
        %v3048 = vadd.f32 %v2999, %v3047
        %3049 = vmatmul.bf16.gmra.mxu0 %v2562
        %v3050 = vpop.f32.mrf.mxu0
        %v3051 = vadd.f32 %v3002, %v3050
        %v3052 = vpop.f32.mrf.mxu0
        %v3053 = vadd.f32 %v3004, %v3052
        %3054 = vdwg.mxu0
        %3055 = vmatpush.bf16.msra.mxu0 %v2858
        %3056 = vmatpush.bf16.msra.mxu0 %v2854
        %3057 = vmatpush.bf16.msra.mxu0 %v2850
        %3058 = vmatpush.bf16.msra.mxu0 %v2846
        %3059 = vmatpush.bf16.msra.mxu0 %v2842
        %3060 = vmatpush.bf16.msra.mxu0 %v2838
        %3061 = vmatpush.bf16.msra.mxu0 %v2834
        %3062 = vmatpush.bf16.msra.mxu0 %v2830
        %3063 = vmatmul.bf16.gmra.mxu0 %v2547
        %v3064 = vpop.f32.mrf.mxu0
        %v3065 = vadd.f32 %v2630, %v3064
        %v3066 = vpop.f32.mrf.mxu0
        %v3067 = vadd.f32 %v2630, %v3066
        %3068 = vmatmul.bf16.gmra.mxu0 %v2549
        %v3069 = vpop.f32.mrf.mxu0
        %v3070 = vadd.f32 %v2630, %v3069
        %v3071 = vpop.f32.mrf.mxu0
        %v3072 = vadd.f32 %v2630, %v3071
        %3073 = vmatmul.bf16.gmra.mxu0 %v2551
        %v3074 = vpop.f32.mrf.mxu0
        %v3075 = vadd.f32 %v2630, %v3074
        %v3076 = vpop.f32.mrf.mxu0
        %v3077 = vadd.f32 %v2630, %v3076
        %3078 = vmatmul.bf16.gmra.mxu0 %v2553
        %v3079 = vpop.f32.mrf.mxu0
        %v3080 = vadd.f32 %v2630, %v3079
        %v3081 = vpop.f32.mrf.mxu0
        %v3082 = vadd.f32 %v2630, %v3081
        %3083 = vmatmul.bf16.gmra.mxu0 %v2555
        %v3084 = vpop.f32.mrf.mxu0
        %v3085 = vadd.f32 %v2630, %v3084
        %v3086 = vpop.f32.mrf.mxu0
        %v3087 = vadd.f32 %v2630, %v3086
        %3088 = vmatmul.bf16.gmra.mxu0 %v2557
        %v3089 = vpop.f32.mrf.mxu0
        %v3090 = vadd.f32 %v2630, %v3089
        %v3091 = vpop.f32.mrf.mxu0
        %v3092 = vadd.f32 %v2630, %v3091
        %3093 = vmatmul.bf16.gmra.mxu0 %v2559
        %v3094 = vpop.f32.mrf.mxu0
        %v3095 = vadd.f32 %v2630, %v3094
        %v3096 = vpop.f32.mrf.mxu0
        %v3097 = vadd.f32 %v2630, %v3096
        %3098 = vmatmul.bf16.gmra.mxu0 %v2561
        %v3099 = vpop.f32.mrf.mxu0
        %v3100 = vadd.f32 %v2630, %v3099
        %v3101 = vpop.f32.mrf.mxu0
        %v3102 = vadd.f32 %v2630, %v3101
        %3103 = vdwg.mxu0
        %3104 = vmatpush.bf16.msra.mxu0 %v2890
        %3105 = vmatpush.bf16.msra.mxu0 %v2886
        %3106 = vmatpush.bf16.msra.mxu0 %v2882
        %3107 = vmatpush.bf16.msra.mxu0 %v2878
        %3108 = vmatpush.bf16.msra.mxu0 %v2874
        %3109 = vmatpush.bf16.msra.mxu0 %v2870
        %3110 = vmatpush.bf16.msra.mxu0 %v2866
        %3111 = vmatpush.bf16.msra.mxu0 %v2862
        %3112 = vmatmul.bf16.gmra.mxu0 %v2548
        %v3113 = vpop.f32.mrf.mxu0
        %v3114 = vadd.f32 %v3065, %v3113
        %v3115 = vpop.f32.mrf.mxu0
        %v3116 = vadd.f32 %v3067, %v3115
        %3117 = vmatmul.bf16.gmra.mxu0 %v2550
        %v3118 = vpop.f32.mrf.mxu0
        %v3119 = vadd.f32 %v3070, %v3118
        %v3120 = vpop.f32.mrf.mxu0
        %v3121 = vadd.f32 %v3072, %v3120
        %3122 = vmatmul.bf16.gmra.mxu0 %v2552
        %v3123 = vpop.f32.mrf.mxu0
        %v3124 = vadd.f32 %v3075, %v3123
        %v3125 = vpop.f32.mrf.mxu0
        %v3126 = vadd.f32 %v3077, %v3125
        %3127 = vmatmul.bf16.gmra.mxu0 %v2554
        %v3128 = vpop.f32.mrf.mxu0
        %v3129 = vadd.f32 %v3080, %v3128
        %v3130 = vpop.f32.mrf.mxu0
        %v3131 = vadd.f32 %v3082, %v3130
        %3132 = vmatmul.bf16.gmra.mxu0 %v2556
        %v3133 = vpop.f32.mrf.mxu0
        %v3134 = vadd.f32 %v3085, %v3133
        %v3135 = vpop.f32.mrf.mxu0
        %v3136 = vadd.f32 %v3087, %v3135
        %3137 = vmatmul.bf16.gmra.mxu0 %v2558
        %v3138 = vpop.f32.mrf.mxu0
        %v3139 = vadd.f32 %v3090, %v3138
        %v3140 = vpop.f32.mrf.mxu0
        %v3141 = vadd.f32 %v3092, %v3140
        %3142 = vmatmul.bf16.gmra.mxu0 %v2560
        %v3143 = vpop.f32.mrf.mxu0
        %v3144 = vadd.f32 %v3095, %v3143
        %v3145 = vpop.f32.mrf.mxu0
        %v3146 = vadd.f32 %v3097, %v3145
        %3147 = vmatmul.bf16.gmra.mxu0 %v2562
        %v3148 = vpop.f32.mrf.mxu0
        %v3149 = vadd.f32 %v3100, %v3148
        %v3150 = vpop.f32.mrf.mxu0
        %v3151 = vadd.f32 %v3102, %v3150
        %3152 = vdwg.mxu0
        %3153 = vmatpush.bf16.msra.mxu0 %v2859
        %3154 = vmatpush.bf16.msra.mxu0 %v2855
        %3155 = vmatpush.bf16.msra.mxu0 %v2851
        %3156 = vmatpush.bf16.msra.mxu0 %v2847
        %3157 = vmatpush.bf16.msra.mxu0 %v2843
        %3158 = vmatpush.bf16.msra.mxu0 %v2839
        %3159 = vmatpush.bf16.msra.mxu0 %v2835
        %3160 = vmatpush.bf16.msra.mxu0 %v2831
        %3161 = vmatmul.bf16.gmra.mxu0 %v2547
        %v3162 = vpop.f32.mrf.mxu0
        %v3163 = vadd.f32 %v2631, %v3162
        %v3164 = vpop.f32.mrf.mxu0
        %v3165 = vadd.f32 %v2631, %v3164
        %3166 = vmatmul.bf16.gmra.mxu0 %v2549
        %v3167 = vpop.f32.mrf.mxu0
        %v3168 = vadd.f32 %v2631, %v3167
        %v3169 = vpop.f32.mrf.mxu0
        %v3170 = vadd.f32 %v2631, %v3169
        %3171 = vmatmul.bf16.gmra.mxu0 %v2551
        %v3172 = vpop.f32.mrf.mxu0
        %v3173 = vadd.f32 %v2631, %v3172
        %v3174 = vpop.f32.mrf.mxu0
        %v3175 = vadd.f32 %v2631, %v3174
        %3176 = vmatmul.bf16.gmra.mxu0 %v2553
        %v3177 = vpop.f32.mrf.mxu0
        %v3178 = vadd.f32 %v2631, %v3177
        %v3179 = vpop.f32.mrf.mxu0
        %v3180 = vadd.f32 %v2631, %v3179
        %3181 = vmatmul.bf16.gmra.mxu0 %v2555
        %v3182 = vpop.f32.mrf.mxu0
        %v3183 = vadd.f32 %v2631, %v3182
        %v3184 = vpop.f32.mrf.mxu0
        %v3185 = vadd.f32 %v2631, %v3184
        %3186 = vmatmul.bf16.gmra.mxu0 %v2557
        %v3187 = vpop.f32.mrf.mxu0
        %v3188 = vadd.f32 %v2631, %v3187
        %v3189 = vpop.f32.mrf.mxu0
        %v3190 = vadd.f32 %v2631, %v3189
        %3191 = vmatmul.bf16.gmra.mxu0 %v2559
        %v3192 = vpop.f32.mrf.mxu0
        %v3193 = vadd.f32 %v2631, %v3192
        %v3194 = vpop.f32.mrf.mxu0
        %v3195 = vadd.f32 %v2631, %v3194
        %3196 = vmatmul.bf16.gmra.mxu0 %v2561
        %v3197 = vpop.f32.mrf.mxu0
        %v3198 = vadd.f32 %v2631, %v3197
        %v3199 = vpop.f32.mrf.mxu0
        %v3200 = vadd.f32 %v2631, %v3199
        %3201 = vdwg.mxu0
        %3202 = vmatpush.bf16.msra.mxu0 %v2891
        %3203 = vmatpush.bf16.msra.mxu0 %v2887
        %3204 = vmatpush.bf16.msra.mxu0 %v2883
        %3205 = vmatpush.bf16.msra.mxu0 %v2879
        %3206 = vmatpush.bf16.msra.mxu0 %v2875
        %3207 = vmatpush.bf16.msra.mxu0 %v2871
        %3208 = vmatpush.bf16.msra.mxu0 %v2867
        %3209 = vmatpush.bf16.msra.mxu0 %v2863
        %3210 = vmatmul.bf16.gmra.mxu0 %v2548
        %v3211 = vpop.f32.mrf.mxu0
        %v3212 = vadd.f32 %v3163, %v3211
        %v3213 = vpop.f32.mrf.mxu0
        %v3214 = vadd.f32 %v3165, %v3213
        %3215 = vmatmul.bf16.gmra.mxu0 %v2550
        %v3216 = vpop.f32.mrf.mxu0
        %v3217 = vadd.f32 %v3168, %v3216
        %v3218 = vpop.f32.mrf.mxu0
        %v3219 = vadd.f32 %v3170, %v3218
        %3220 = vmatmul.bf16.gmra.mxu0 %v2552
        %v3221 = vpop.f32.mrf.mxu0
        %v3222 = vadd.f32 %v3173, %v3221
        %v3223 = vpop.f32.mrf.mxu0
        %v3224 = vadd.f32 %v3175, %v3223
        %3225 = vmatmul.bf16.gmra.mxu0 %v2554
        %v3226 = vpop.f32.mrf.mxu0
        %v3227 = vadd.f32 %v3178, %v3226
        %v3228 = vpop.f32.mrf.mxu0
        %v3229 = vadd.f32 %v3180, %v3228
        %3230 = vmatmul.bf16.gmra.mxu0 %v2556
        %v3231 = vpop.f32.mrf.mxu0
        %v3232 = vadd.f32 %v3183, %v3231
        %v3233 = vpop.f32.mrf.mxu0
        %v3234 = vadd.f32 %v3185, %v3233
        %3235 = vmatmul.bf16.gmra.mxu0 %v2558
        %v3236 = vpop.f32.mrf.mxu0
        %v3237 = vadd.f32 %v3188, %v3236
        %v3238 = vpop.f32.mrf.mxu0
        %v3239 = vadd.f32 %v3190, %v3238
        %3240 = vmatmul.bf16.gmra.mxu0 %v2560
        %v3241 = vpop.f32.mrf.mxu0
        %v3242 = vadd.f32 %v3193, %v3241
        %v3243 = vpop.f32.mrf.mxu0
        %v3244 = vadd.f32 %v3195, %v3243
        %3245 = vmatmul.bf16.gmra.mxu0 %v2562
        %v3246 = vpop.f32.mrf.mxu0
        %v3247 = vadd.f32 %v3198, %v3246
        %v3248 = vpop.f32.mrf.mxu0
        %v3249 = vadd.f32 %v3200, %v3248
        %3250 = vdwg.mxu0
        %3251 = vmatpush.bf16.msra.mxu0 %v2860
        %3252 = vmatpush.bf16.msra.mxu0 %v2856
        %3253 = vmatpush.bf16.msra.mxu0 %v2852
        %3254 = vmatpush.bf16.msra.mxu0 %v2848
        %3255 = vmatpush.bf16.msra.mxu0 %v2844
        %3256 = vmatpush.bf16.msra.mxu0 %v2840
        %3257 = vmatpush.bf16.msra.mxu0 %v2836
        %3258 = vmatpush.bf16.msra.mxu0 %v2832
        %3259 = vmatmul.bf16.gmra.mxu0 %v2547
        %v3260 = vpop.f32.mrf.mxu0
        %v3261 = vadd.f32 %v2632, %v3260
        %v3262 = vpop.f32.mrf.mxu0
        %v3263 = vadd.f32 %v2632, %v3262
        %3264 = vmatmul.bf16.gmra.mxu0 %v2549
        %v3265 = vpop.f32.mrf.mxu0
        %v3266 = vadd.f32 %v2632, %v3265
        %v3267 = vpop.f32.mrf.mxu0
        %v3268 = vadd.f32 %v2632, %v3267
        %3269 = vmatmul.bf16.gmra.mxu0 %v2551
        %v3270 = vpop.f32.mrf.mxu0
        %v3271 = vadd.f32 %v2632, %v3270
        %v3272 = vpop.f32.mrf.mxu0
        %v3273 = vadd.f32 %v2632, %v3272
        %3274 = vmatmul.bf16.gmra.mxu0 %v2553
        %v3275 = vpop.f32.mrf.mxu0
        %v3276 = vadd.f32 %v2632, %v3275
        %v3277 = vpop.f32.mrf.mxu0
        %v3278 = vadd.f32 %v2632, %v3277
        %3279 = vmatmul.bf16.gmra.mxu0 %v2555
        %v3280 = vpop.f32.mrf.mxu0
        %v3281 = vadd.f32 %v2632, %v3280
        %v3282 = vpop.f32.mrf.mxu0
        %v3283 = vadd.f32 %v2632, %v3282
        %3284 = vmatmul.bf16.gmra.mxu0 %v2557
        %v3285 = vpop.f32.mrf.mxu0
        %v3286 = vadd.f32 %v2632, %v3285
        %v3287 = vpop.f32.mrf.mxu0
        %v3288 = vadd.f32 %v2632, %v3287
        %3289 = vmatmul.bf16.gmra.mxu0 %v2559
        %v3290 = vpop.f32.mrf.mxu0
        %v3291 = vadd.f32 %v2632, %v3290
        %v3292 = vpop.f32.mrf.mxu0
        %v3293 = vadd.f32 %v2632, %v3292
        %3294 = vmatmul.bf16.gmra.mxu0 %v2561
        %v3295 = vpop.f32.mrf.mxu0
        %v3296 = vadd.f32 %v2632, %v3295
        %v3297 = vpop.f32.mrf.mxu0
        %v3298 = vadd.f32 %v2632, %v3297
        %3299 = vdwg.mxu0
        %3300 = vmatpush.bf16.msra.mxu0 %v2892
        %3301 = vmatpush.bf16.msra.mxu0 %v2888
        %3302 = vmatpush.bf16.msra.mxu0 %v2884
        %3303 = vmatpush.bf16.msra.mxu0 %v2880
        %3304 = vmatpush.bf16.msra.mxu0 %v2876
        %3305 = vmatpush.bf16.msra.mxu0 %v2872
        %3306 = vmatpush.bf16.msra.mxu0 %v2868
        %3307 = vmatpush.bf16.msra.mxu0 %v2864
        %3308 = vmatmul.bf16.gmra.mxu0 %v2548
        %v3309 = vpop.f32.mrf.mxu0
        %v3310 = vadd.f32 %v3261, %v3309
        %v3311 = vpop.f32.mrf.mxu0
        %v3312 = vadd.f32 %v3263, %v3311
        %3313 = vmatmul.bf16.gmra.mxu0 %v2550
        %v3314 = vpop.f32.mrf.mxu0
        %v3315 = vadd.f32 %v3266, %v3314
        %v3316 = vpop.f32.mrf.mxu0
        %v3317 = vadd.f32 %v3268, %v3316
        %3318 = vmatmul.bf16.gmra.mxu0 %v2552
        %v3319 = vpop.f32.mrf.mxu0
        %v3320 = vadd.f32 %v3271, %v3319
        %v3321 = vpop.f32.mrf.mxu0
        %v3322 = vadd.f32 %v3273, %v3321
        %3323 = vmatmul.bf16.gmra.mxu0 %v2554
        %v3324 = vpop.f32.mrf.mxu0
        %v3325 = vadd.f32 %v3276, %v3324
        %v3326 = vpop.f32.mrf.mxu0
        %v3327 = vadd.f32 %v3278, %v3326
        %3328 = vmatmul.bf16.gmra.mxu0 %v2556
        %v3329 = vpop.f32.mrf.mxu0
        %v3330 = vadd.f32 %v3281, %v3329
        %v3331 = vpop.f32.mrf.mxu0
        %v3332 = vadd.f32 %v3283, %v3331
        %3333 = vmatmul.bf16.gmra.mxu0 %v2558
        %v3334 = vpop.f32.mrf.mxu0
        %v3335 = vadd.f32 %v3286, %v3334
        %v3336 = vpop.f32.mrf.mxu0
        %v3337 = vadd.f32 %v3288, %v3336
        %3338 = vmatmul.bf16.gmra.mxu0 %v2560
        %v3339 = vpop.f32.mrf.mxu0
        %v3340 = vadd.f32 %v3291, %v3339
        %v3341 = vpop.f32.mrf.mxu0
        %v3342 = vadd.f32 %v3293, %v3341
        %3343 = vmatmul.bf16.gmra.mxu0 %v2562
        %v3344 = vpop.f32.mrf.mxu0
        %v3345 = vadd.f32 %v3296, %v3344
        %v3346 = vpop.f32.mrf.mxu0
        %v3347 = vadd.f32 %v3298, %v3346
        %3348 = vdwg.mxu0
        %v3349 = vsub.f32 0.0, %v3016
        %v3350 = vsub.f32 0.0, %v3114
        %v3351 = vsub.f32 0.0, %v3212
        %v3352 = vsub.f32 0.0, %v3310
        %v3353 = vsub.f32 0.0, %v3018
        %v3354 = vsub.f32 0.0, %v3116
        %v3355 = vsub.f32 0.0, %v3214
        %v3356 = vsub.f32 0.0, %v3312
        %v3357 = vsub.f32 0.0, %v3021
        %v3358 = vsub.f32 0.0, %v3119
        %v3359 = vsub.f32 0.0, %v3217
        %v3360 = vsub.f32 0.0, %v3315
        %v3361 = vsub.f32 0.0, %v3023
        %v3362 = vsub.f32 0.0, %v3121
        %v3363 = vsub.f32 0.0, %v3219
        %v3364 = vsub.f32 0.0, %v3317
        %v3365 = vsub.f32 0.0, %v3026
        %v3366 = vsub.f32 0.0, %v3124
        %v3367 = vsub.f32 0.0, %v3222
        %v3368 = vsub.f32 0.0, %v3320
        %v3369 = vsub.f32 0.0, %v3028
        %v3370 = vsub.f32 0.0, %v3126
        %v3371 = vsub.f32 0.0, %v3224
        %v3372 = vsub.f32 0.0, %v3322
        %v3373 = vsub.f32 0.0, %v3031
        %v3374 = vsub.f32 0.0, %v3129
        %v3375 = vsub.f32 0.0, %v3227
        %v3376 = vsub.f32 0.0, %v3325
        %v3377 = vsub.f32 0.0, %v3033
        %v3378 = vsub.f32 0.0, %v3131
        %v3379 = vsub.f32 0.0, %v3229
        %v3380 = vsub.f32 0.0, %v3327
        %v3381 = vsub.f32 0.0, %v3036
        %v3382 = vsub.f32 0.0, %v3134
        %v3383 = vsub.f32 0.0, %v3232
        %v3384 = vsub.f32 0.0, %v3330
        %v3385 = vsub.f32 0.0, %v3038
        %v3386 = vsub.f32 0.0, %v3136
        %v3387 = vsub.f32 0.0, %v3234
        %v3388 = vsub.f32 0.0, %v3332
        %v3389 = vsub.f32 0.0, %v3041
        %v3390 = vsub.f32 0.0, %v3139
        %v3391 = vsub.f32 0.0, %v3237
        %v3392 = vsub.f32 0.0, %v3335
        %v3393 = vsub.f32 0.0, %v3043
        %v3394 = vsub.f32 0.0, %v3141
        %v3395 = vsub.f32 0.0, %v3239
        %v3396 = vsub.f32 0.0, %v3337
        %v3397 = vsub.f32 0.0, %v3046
        %v3398 = vsub.f32 0.0, %v3144
        %v3399 = vsub.f32 0.0, %v3242
        %v3400 = vsub.f32 0.0, %v3340
        %v3401 = vsub.f32 0.0, %v3048
        %v3402 = vsub.f32 0.0, %v3146
        %v3403 = vsub.f32 0.0, %v3244
        %v3404 = vsub.f32 0.0, %v3342
        %v3405 = vsub.f32 0.0, %v3051
        %v3406 = vsub.f32 0.0, %v3149
        %v3407 = vsub.f32 0.0, %v3247
        %v3408 = vsub.f32 0.0, %v3345
        %v3409 = vsub.f32 0.0, %v3053
        %v3410 = vsub.f32 0.0, %v3151
        %v3411 = vsub.f32 0.0, %v3249
        %v3412 = vsub.f32 0.0, %v3347
        %v3413 = vmul.f32 %v3349, 1.442695
        %v3414 = vpow.pop %v3413
        %v3415 = vmul.f32 %v3350, 1.442695
        %v3416 = vpow.pop %v3415
        %v3417 = vmul.f32 %v3351, 1.442695
        %v3418 = vpow.pop %v3417
        %v3419 = vmul.f32 %v3352, 1.442695
        %v3420 = vpow.pop %v3419
        %v3421 = vmul.f32 %v3353, 1.442695
        %v3422 = vpow.pop %v3421
        %v3423 = vmul.f32 %v3354, 1.442695
        %v3424 = vpow.pop %v3423
        %v3425 = vmul.f32 %v3355, 1.442695
        %v3426 = vpow.pop %v3425
        %v3427 = vmul.f32 %v3356, 1.442695
        %v3428 = vpow.pop %v3427
        %v3429 = vmul.f32 %v3357, 1.442695
        %v3430 = vpow.pop %v3429
        %v3431 = vmul.f32 %v3358, 1.442695
        %v3432 = vpow.pop %v3431
        %v3433 = vmul.f32 %v3359, 1.442695
        %v3434 = vpow.pop %v3433
        %v3435 = vmul.f32 %v3360, 1.442695
        %v3436 = vpow.pop %v3435
        %v3437 = vmul.f32 %v3361, 1.442695
        %v3438 = vpow.pop %v3437
        %v3439 = vmul.f32 %v3362, 1.442695
        %v3440 = vpow.pop %v3439
        %v3441 = vmul.f32 %v3363, 1.442695
        %v3442 = vpow.pop %v3441
        %v3443 = vmul.f32 %v3364, 1.442695
        %v3444 = vpow.pop %v3443
        %v3445 = vmul.f32 %v3365, 1.442695
        %v3446 = vpow.pop %v3445
        %v3447 = vmul.f32 %v3366, 1.442695
        %v3448 = vpow.pop %v3447
        %v3449 = vmul.f32 %v3367, 1.442695
        %v3450 = vpow.pop %v3449
        %v3451 = vmul.f32 %v3368, 1.442695
        %v3452 = vpow.pop %v3451
        %v3453 = vmul.f32 %v3369, 1.442695
        %v3454 = vpow.pop %v3453
        %v3455 = vmul.f32 %v3370, 1.442695
        %v3456 = vpow.pop %v3455
        %v3457 = vmul.f32 %v3371, 1.442695
        %v3458 = vpow.pop %v3457
        %v3459 = vmul.f32 %v3372, 1.442695
        %v3460 = vpow.pop %v3459
        %v3461 = vmul.f32 %v3373, 1.442695
        %v3462 = vpow.pop %v3461
        %v3463 = vmul.f32 %v3374, 1.442695
        %v3464 = vpow.pop %v3463
        %v3465 = vmul.f32 %v3375, 1.442695
        %v3466 = vpow.pop %v3465
        %v3467 = vmul.f32 %v3376, 1.442695
        %v3468 = vpow.pop %v3467
        %v3469 = vmul.f32 %v3377, 1.442695
        %v3470 = vpow.pop %v3469
        %v3471 = vmul.f32 %v3378, 1.442695
        %v3472 = vpow.pop %v3471
        %v3473 = vmul.f32 %v3379, 1.442695
        %v3474 = vpow.pop %v3473
        %v3475 = vmul.f32 %v3380, 1.442695
        %v3476 = vpow.pop %v3475
        %v3477 = vmul.f32 %v3381, 1.442695
        %v3478 = vpow.pop %v3477
        %v3479 = vmul.f32 %v3382, 1.442695
        %v3480 = vpow.pop %v3479
        %v3481 = vmul.f32 %v3383, 1.442695
        %v3482 = vpow.pop %v3481
        %v3483 = vmul.f32 %v3384, 1.442695
        %v3484 = vpow.pop %v3483
        %v3485 = vmul.f32 %v3385, 1.442695
        %v3486 = vpow.pop %v3485
        %v3487 = vmul.f32 %v3386, 1.442695
        %v3488 = vpow.pop %v3487
        %v3489 = vmul.f32 %v3387, 1.442695
        %v3490 = vpow.pop %v3489
        %v3491 = vmul.f32 %v3388, 1.442695
        %v3492 = vpow.pop %v3491
        %v3493 = vmul.f32 %v3389, 1.442695
        %v3494 = vpow.pop %v3493
        %v3495 = vmul.f32 %v3390, 1.442695
        %v3496 = vpow.pop %v3495
        %v3497 = vmul.f32 %v3391, 1.442695
        %v3498 = vpow.pop %v3497
        %v3499 = vmul.f32 %v3392, 1.442695
        %v3500 = vpow.pop %v3499
        %v3501 = vmul.f32 %v3393, 1.442695
        %v3502 = vpow.pop %v3501
        %v3503 = vmul.f32 %v3394, 1.442695
        %v3504 = vpow.pop %v3503
        %v3505 = vmul.f32 %v3395, 1.442695
        %v3506 = vpow.pop %v3505
        %v3507 = vmul.f32 %v3396, 1.442695
        %v3508 = vpow.pop %v3507
        %v3509 = vmul.f32 %v3397, 1.442695
        %v3510 = vpow.pop %v3509
        %v3511 = vmul.f32 %v3398, 1.442695
        %v3512 = vpow.pop %v3511
        %v3513 = vmul.f32 %v3399, 1.442695
        %v3514 = vpow.pop %v3513
        %v3515 = vmul.f32 %v3400, 1.442695
        %v3516 = vpow.pop %v3515
        %v3517 = vmul.f32 %v3401, 1.442695
        %v3518 = vpow.pop %v3517
        %v3519 = vmul.f32 %v3402, 1.442695
        %v3520 = vpow.pop %v3519
        %v3521 = vmul.f32 %v3403, 1.442695
        %v3522 = vpow.pop %v3521
        %v3523 = vmul.f32 %v3404, 1.442695
        %v3524 = vpow.pop %v3523
        %v3525 = vmul.f32 %v3405, 1.442695
        %v3526 = vpow.pop %v3525
        %v3527 = vmul.f32 %v3406, 1.442695
        %v3528 = vpow.pop %v3527
        %v3529 = vmul.f32 %v3407, 1.442695
        %v3530 = vpow.pop %v3529
        %v3531 = vmul.f32 %v3408, 1.442695
        %v3532 = vpow.pop %v3531
        %v3533 = vmul.f32 %v3409, 1.442695
        %v3534 = vpow.pop %v3533
        %v3535 = vmul.f32 %v3410, 1.442695
        %v3536 = vpow.pop %v3535
        %v3537 = vmul.f32 %v3411, 1.442695
        %v3538 = vpow.pop %v3537
        %v3539 = vmul.f32 %v3412, 1.442695
        %v3540 = vpow.pop %v3539
        %v3541 = vadd.f32 %v3414, 1.0
        %v3542 = vadd.f32 %v3416, 1.0
        %v3543 = vadd.f32 %v3418, 1.0
        %v3544 = vadd.f32 %v3420, 1.0
        %v3545 = vadd.f32 %v3422, 1.0
        %v3546 = vadd.f32 %v3424, 1.0
        %v3547 = vadd.f32 %v3426, 1.0
        %v3548 = vadd.f32 %v3428, 1.0
        %v3549 = vadd.f32 %v3430, 1.0
        %v3550 = vadd.f32 %v3432, 1.0
        %v3551 = vadd.f32 %v3434, 1.0
        %v3552 = vadd.f32 %v3436, 1.0
        %v3553 = vadd.f32 %v3438, 1.0
        %v3554 = vadd.f32 %v3440, 1.0
        %v3555 = vadd.f32 %v3442, 1.0
        %v3556 = vadd.f32 %v3444, 1.0
        %v3557 = vadd.f32 %v3446, 1.0
        %v3558 = vadd.f32 %v3448, 1.0
        %v3559 = vadd.f32 %v3450, 1.0
        %v3560 = vadd.f32 %v3452, 1.0
        %v3561 = vadd.f32 %v3454, 1.0
        %v3562 = vadd.f32 %v3456, 1.0
        %v3563 = vadd.f32 %v3458, 1.0
        %v3564 = vadd.f32 %v3460, 1.0
        %v3565 = vadd.f32 %v3462, 1.0
        %v3566 = vadd.f32 %v3464, 1.0
        %v3567 = vadd.f32 %v3466, 1.0
        %v3568 = vadd.f32 %v3468, 1.0
        %v3569 = vadd.f32 %v3470, 1.0
        %v3570 = vadd.f32 %v3472, 1.0
        %v3571 = vadd.f32 %v3474, 1.0
        %v3572 = vadd.f32 %v3476, 1.0
        %v3573 = vadd.f32 %v3478, 1.0
        %v3574 = vadd.f32 %v3480, 1.0
        %v3575 = vadd.f32 %v3482, 1.0
        %v3576 = vadd.f32 %v3484, 1.0
        %v3577 = vadd.f32 %v3486, 1.0
        %v3578 = vadd.f32 %v3488, 1.0
        %v3579 = vadd.f32 %v3490, 1.0
        %v3580 = vadd.f32 %v3492, 1.0
        %v3581 = vadd.f32 %v3494, 1.0
        %v3582 = vadd.f32 %v3496, 1.0
        %v3583 = vadd.f32 %v3498, 1.0
        %v3584 = vadd.f32 %v3500, 1.0
        %v3585 = vadd.f32 %v3502, 1.0
        %v3586 = vadd.f32 %v3504, 1.0
        %v3587 = vadd.f32 %v3506, 1.0
        %v3588 = vadd.f32 %v3508, 1.0
        %v3589 = vadd.f32 %v3510, 1.0
        %v3590 = vadd.f32 %v3512, 1.0
        %v3591 = vadd.f32 %v3514, 1.0
        %v3592 = vadd.f32 %v3516, 1.0
        %v3593 = vadd.f32 %v3518, 1.0
        %v3594 = vadd.f32 %v3520, 1.0
        %v3595 = vadd.f32 %v3522, 1.0
        %v3596 = vadd.f32 %v3524, 1.0
        %v3597 = vadd.f32 %v3526, 1.0
        %v3598 = vadd.f32 %v3528, 1.0
        %v3599 = vadd.f32 %v3530, 1.0
        %v3600 = vadd.f32 %v3532, 1.0
        %v3601 = vadd.f32 %v3534, 1.0
        %v3602 = vadd.f32 %v3536, 1.0
        %v3603 = vadd.f32 %v3538, 1.0
        %v3604 = vadd.f32 %v3540, 1.0
        %v3605 = vrcp.pop %v3541
        %v3606 = vrcp.pop %v3542
        %v3607 = vrcp.pop %v3543
        %v3608 = vrcp.pop %v3544
        %v3609 = vrcp.pop %v3545
        %v3610 = vrcp.pop %v3546
        %v3611 = vrcp.pop %v3547
        %v3612 = vrcp.pop %v3548
        %v3613 = vrcp.pop %v3549
        %v3614 = vrcp.pop %v3550
        %v3615 = vrcp.pop %v3551
        %v3616 = vrcp.pop %v3552
        %v3617 = vrcp.pop %v3553
        %v3618 = vrcp.pop %v3554
        %v3619 = vrcp.pop %v3555
        %v3620 = vrcp.pop %v3556
        %v3621 = vrcp.pop %v3557
        %v3622 = vrcp.pop %v3558
        %v3623 = vrcp.pop %v3559
        %v3624 = vrcp.pop %v3560
        %v3625 = vrcp.pop %v3561
        %v3626 = vrcp.pop %v3562
        %v3627 = vrcp.pop %v3563
        %v3628 = vrcp.pop %v3564
        %v3629 = vrcp.pop %v3565
        %v3630 = vrcp.pop %v3566
        %v3631 = vrcp.pop %v3567
        %v3632 = vrcp.pop %v3568
        %v3633 = vrcp.pop %v3569
        %v3634 = vrcp.pop %v3570
        %v3635 = vrcp.pop %v3571
        %v3636 = vrcp.pop %v3572
        %v3637 = vrcp.pop %v3573
        %v3638 = vrcp.pop %v3574
        %v3639 = vrcp.pop %v3575
        %v3640 = vrcp.pop %v3576
        %v3641 = vrcp.pop %v3577
        %v3642 = vrcp.pop %v3578
        %v3643 = vrcp.pop %v3579
        %v3644 = vrcp.pop %v3580
        %v3645 = vrcp.pop %v3581
        %v3646 = vrcp.pop %v3582
        %v3647 = vrcp.pop %v3583
        %v3648 = vrcp.pop %v3584
        %v3649 = vrcp.pop %v3585
        %v3650 = vrcp.pop %v3586
        %v3651 = vrcp.pop %v3587
        %v3652 = vrcp.pop %v3588
        %v3653 = vrcp.pop %v3589
        %v3654 = vrcp.pop %v3590
        %v3655 = vrcp.pop %v3591
        %v3656 = vrcp.pop %v3592
        %v3657 = vrcp.pop %v3593
        %v3658 = vrcp.pop %v3594
        %v3659 = vrcp.pop %v3595
        %v3660 = vrcp.pop %v3596
        %v3661 = vrcp.pop %v3597
        %v3662 = vrcp.pop %v3598
        %v3663 = vrcp.pop %v3599
        %v3664 = vrcp.pop %v3600
        %v3665 = vrcp.pop %v3601
        %v3666 = vrcp.pop %v3602
        %v3667 = vrcp.pop %v3603
        %v3668 = vrcp.pop %v3604
        %3669 = vst [vmem:[%s645] sm:$0xff] %v3605
        %3670 = vst [vmem:[%s645 + $0x8] sm:$0xff] %v3606
        %3671 = vst [vmem:[%s645 + $0x10] sm:$0xff] %v3607
        %3672 = vst [vmem:[%s645 + $0x18] sm:$0xff] %v3608
        %3673 = vst [vmem:[%s645 + $0x20] sm:$0xff] %v3609
        %3674 = vst [vmem:[%s645 + $0x28] sm:$0xff] %v3610
        %3675 = vst [vmem:[%s645 + $0x30] sm:$0xff] %v3611
        %3676 = vst [vmem:[%s645 + $0x38] sm:$0xff] %v3612
        %3677 = vst [vmem:[%s645 + $0x40] sm:$0xff] %v3613
        %3678 = vst [vmem:[%s645 + $0x48] sm:$0xff] %v3614
        %3679 = vst [vmem:[%s645 + $0x50] sm:$0xff] %v3615
        %3680 = vst [vmem:[%s645 + $0x58] sm:$0xff] %v3616
        %3681 = vst [vmem:[%s645 + $0x60] sm:$0xff] %v3617
        %3682 = vst [vmem:[%s645 + $0x68] sm:$0xff] %v3618
        %3683 = vst [vmem:[%s645 + $0x70] sm:$0xff] %v3619
        %3684 = vst [vmem:[%s645 + $0x78] sm:$0xff] %v3620
        %3685 = vst [vmem:[%s645 + $0x80] sm:$0xff] %v3621
        %3686 = vst [vmem:[%s645 + $0x88] sm:$0xff] %v3622
        %3687 = vst [vmem:[%s645 + $0x90] sm:$0xff] %v3623
        %3688 = vst [vmem:[%s645 + $0x98] sm:$0xff] %v3624
        %3689 = vst [vmem:[%s645 + $0xa0] sm:$0xff] %v3625
        %3690 = vst [vmem:[%s645 + $0xa8] sm:$0xff] %v3626
        %3691 = vst [vmem:[%s645 + $0xb0] sm:$0xff] %v3627
        %3692 = vst [vmem:[%s645 + $0xb8] sm:$0xff] %v3628
        %3693 = vst [vmem:[%s645 + $0xc0] sm:$0xff] %v3629
        %3694 = vst [vmem:[%s645 + $0xc8] sm:$0xff] %v3630
        %3695 = vst [vmem:[%s645 + $0xd0] sm:$0xff] %v3631
        %3696 = vst [vmem:[%s645 + $0xd8] sm:$0xff] %v3632
        %3697 = vst [vmem:[%s645 + $0xe0] sm:$0xff] %v3633
        %3698 = vst [vmem:[%s645 + $0xe8] sm:$0xff] %v3634
        %3699 = vst [vmem:[%s645 + $0xf0] sm:$0xff] %v3635
        %3700 = vst [vmem:[%s645 + $0xf8] sm:$0xff] %v3636
        %3701 = vst [vmem:[%s645 + $0x100] sm:$0xff] %v3637
        %3702 = vst [vmem:[%s645 + $0x108] sm:$0xff] %v3638
        %3703 = vst [vmem:[%s645 + $0x110] sm:$0xff] %v3639
        %3704 = vst [vmem:[%s645 + $0x118] sm:$0xff] %v3640
        %3705 = vst [vmem:[%s645 + $0x120] sm:$0xff] %v3641
        %3706 = vst [vmem:[%s645 + $0x128] sm:$0xff] %v3642
        %3707 = vst [vmem:[%s645 + $0x130] sm:$0xff] %v3643
        %3708 = vst [vmem:[%s645 + $0x138] sm:$0xff] %v3644
        %3709 = vst [vmem:[%s645 + $0x140] sm:$0xff] %v3645
        %3710 = vst [vmem:[%s645 + $0x148] sm:$0xff] %v3646
        %3711 = vst [vmem:[%s645 + $0x150] sm:$0xff] %v3647
        %3712 = vst [vmem:[%s645 + $0x158] sm:$0xff] %v3648
        %3713 = vst [vmem:[%s645 + $0x160] sm:$0xff] %v3649
        %3714 = vst [vmem:[%s645 + $0x168] sm:$0xff] %v3650
        %3715 = vst [vmem:[%s645 + $0x170] sm:$0xff] %v3651
        %3716 = vst [vmem:[%s645 + $0x178] sm:$0xff] %v3652
        %3717 = vst [vmem:[%s645 + $0x180] sm:$0xff] %v3653
        %3718 = vst [vmem:[%s645 + $0x188] sm:$0xff] %v3654
        %3719 = vst [vmem:[%s645 + $0x190] sm:$0xff] %v3655
        %3720 = vst [vmem:[%s645 + $0x198] sm:$0xff] %v3656
        %3721 = vst [vmem:[%s645 + $0x1a0] sm:$0xff] %v3657
        %3722 = vst [vmem:[%s645 + $0x1a8] sm:$0xff] %v3658
        %3723 = vst [vmem:[%s645 + $0x1b0] sm:$0xff] %v3659
        %3724 = vst [vmem:[%s645 + $0x1b8] sm:$0xff] %v3660
        %3725 = vst [vmem:[%s645 + $0x1c0] sm:$0xff] %v3661
        %3726 = vst [vmem:[%s645 + $0x1c8] sm:$0xff] %v3662
        %3727 = vst [vmem:[%s645 + $0x1d0] sm:$0xff] %v3663
        %3728 = vst [vmem:[%s645 + $0x1d8] sm:$0xff] %v3664
        %3729 = vst [vmem:[%s645 + $0x1e0] sm:$0xff] %v3665
        %3730 = vst [vmem:[%s645 + $0x1e8] sm:$0xff] %v3666
        %3731 = vst [vmem:[%s645 + $0x1f0] sm:$0xff] %v3667
        %3732 = vst [vmem:[%s645 + $0x1f8] sm:$0xff] %v3668
        %3733 = vst [vmem:[%s652] sm:$0xff] %v1942
        %3734 = vst [vmem:[%s652 + $0x8] sm:$0xff] %v1944
        %3735 = vst [vmem:[%s652 + $0x10] sm:$0xff] %v1947
        %3736 = vst [vmem:[%s652 + $0x18] sm:$0xff] %v1949
        %3737 = vst [vmem:[%s652 + $0x20] sm:$0xff] %v1952
        %3738 = vst [vmem:[%s652 + $0x28] sm:$0xff] %v1954
        %3739 = vst [vmem:[%s652 + $0x30] sm:$0xff] %v1957
        %3740 = vst [vmem:[%s652 + $0x38] sm:$0xff] %v1959
        %3741 = vst [vmem:[%s652 + $0x40] sm:$0xff] %v1962
        %3742 = vst [vmem:[%s652 + $0x48] sm:$0xff] %v1964
        %3743 = vst [vmem:[%s652 + $0x50] sm:$0xff] %v1967
        %3744 = vst [vmem:[%s652 + $0x58] sm:$0xff] %v1969
        %3745 = vst [vmem:[%s652 + $0x60] sm:$0xff] %v1972
        %3746 = vst [vmem:[%s652 + $0x68] sm:$0xff] %v1974
        %3747 = vst [vmem:[%s652 + $0x70] sm:$0xff] %v1977
        %3748 = vst [vmem:[%s652 + $0x78] sm:$0xff] %v1979
        %3749 = vst [vmem:[%s659] sm:$0xff] %v2172
        %3750 = vst [vmem:[%s659 + $0x8] sm:$0xff] %v2174
        %3751 = vst [vmem:[%s659 + $0x10] sm:$0xff] %v2177
        %3752 = vst [vmem:[%s659 + $0x18] sm:$0xff] %v2179
        %3753 = vst [vmem:[%s659 + $0x20] sm:$0xff] %v2182
        %3754 = vst [vmem:[%s659 + $0x28] sm:$0xff] %v2184
        %3755 = vst [vmem:[%s659 + $0x30] sm:$0xff] %v2187
        %3756 = vst [vmem:[%s659 + $0x38] sm:$0xff] %v2189
        %3757 = vst [vmem:[%s659 + $0x40] sm:$0xff] %v2192
        %3758 = vst [vmem:[%s659 + $0x48] sm:$0xff] %v2194
        %3759 = vst [vmem:[%s659 + $0x50] sm:$0xff] %v2197
        %3760 = vst [vmem:[%s659 + $0x58] sm:$0xff] %v2199
        %3761 = vst [vmem:[%s659 + $0x60] sm:$0xff] %v2202
        %3762 = vst [vmem:[%s659 + $0x68] sm:$0xff] %v2204
        %3763 = vst [vmem:[%s659 + $0x70] sm:$0xff] %v2207
        %3764 = vst [vmem:[%s659 + $0x78] sm:$0xff] %v2209
        %s3765 = sand.u32 %s311, 1
        %s3766 = scalar_lea.sflag [#allocation4], %s3765
        %s3767 = sand.u32 %s311, 1
        %s3768 = smul.addr %s3767, 512
        %s3769 = scalar_lea.vmem [#allocation17], %s3768
        %s3770 = sand.u32 %s41, 1
        %s3771 = scalar_lea.sflag [#allocation19], %s3770
        %s3772 = sand.u32 %s337, 1
        %s3773 = smul.addr %s3772, 128
        %s3774 = scalar_lea.vmem [#allocation18], %s3773
        %s3775 = sand.u32 %s41, 1
        %s3776 = scalar_lea.sflag [#allocation19], %s3775
        %s3777 = sand.u32 %s363, 1
        %s3778 = smul.addr %s3777, 128
        %s3779 = scalar_lea.vmem [#allocation20], %s3778
        // Predicated region
        $region105: #{tpu_custom_call.1} parent=67 // pred_check
          %p3780 = pneg %p321
        $region106: #{tpu_custom_call.1} parent=67 // pred_check_branch
          %3782 = sbr.rel (%p3780) target = $region108
        $region107: #{tpu_custom_call.1} parent=67 // pred_region
          %s3783 = smul.u32 16, %s41
          %3785 = vsyncadd %s3766, 0
          %s3786 = smul.addr %s3783, 4
          %s3787 = smul.addr %s3786, 8
          %s3788 = scalar_lea.hbm %s12, %s3787
          %s3789 = sshll.u32 %s3769, 4
          %s3790 = int_to_ptr.vmem [resolvable:$true] %s3789
          %s3791 = sshll.u32 %s3788, 4
          %s3792 = int_to_ptr.hbm [resolvable:$true] %s3791
          %3797 = dma.vmem_to_hbm [thread:$0]  %s3790, 8192, %s3792, %s3766, 512, 512, 32
        $region108: #{tpu_custom_call.1} parent=67 // pred_fallthru
          _
        // Predicated region
        $region109: #{tpu_custom_call.1} parent=67 // pred_check
          %p3798 = pneg %p347
        $region110: #{tpu_custom_call.1} parent=67 // pred_check_branch
          %3800 = sbr.rel (%p3798) target = $region112
        $region111: #{tpu_custom_call.1} parent=67 // pred_region
          %s3801 = smul.u32 16, %s41
          %3803 = vsyncadd %s3771, 0
          %s3804 = smul.addr %s3801, 8
          %s3805 = scalar_lea.hbm %s13, %s3804
          %s3806 = sshll.u32 %s3774, 4
          %s3807 = int_to_ptr.vmem [resolvable:$true] %s3806
          %s3808 = sshll.u32 %s3805, 4
          %s3809 = int_to_ptr.hbm [resolvable:$true] %s3808
          %3814 = dma.vmem_to_hbm [thread:$0]  %s3807, 2048, %s3809, %s3771, 128, 128, 8
        $region112: #{tpu_custom_call.1} parent=67 // pred_fallthru
          _
        // Predicated region
        $region113: #{tpu_custom_call.1} parent=67 // pred_check
          %p3815 = pneg %p373
        $region114: #{tpu_custom_call.1} parent=67 // pred_check_branch
          %3817 = sbr.rel (%p3815) target = $region116
        $region115: #{tpu_custom_call.1} parent=67 // pred_region
          %s3818 = smul.u32 16, %s41
          %3820 = vsyncadd %s3776, 0
          %s3821 = smul.addr %s3818, 8
          %s3822 = scalar_lea.hbm %s14, %s3821
          %s3823 = sshll.u32 %s3779, 4
          %s3824 = int_to_ptr.vmem [resolvable:$true] %s3823
          %s3825 = sshll.u32 %s3822, 4
          %s3826 = int_to_ptr.hbm [resolvable:$true] %s3825
          %3831 = dma.vmem_to_hbm [thread:$0]  %s3824, 2048, %s3826, %s3776, 128, 128, 8
        $region116: #{tpu_custom_call.1} parent=67 // pred_fallthru
          _
      $region68: #{tpu_custom_call.1} parent=5 // pred_fallthru
        _
      %p3832 = scmp.le.s32.totalorder 2, %s36
      // Predicated region
      $region117: #{tpu_custom_call.1} parent=5 // pred_check
        %p3833 = pneg %p3832
      $region118: #{tpu_custom_call.1} parent=5 // pred_check_branch
        %3835 = sbr.rel (%p3833) target = $region120
      $region119: #{tpu_custom_call.1} parent=5 // pred_region
        %s3836 = ssub.s32 %s36, 2
        // Predicated region
        $region121: #{tpu_custom_call.1} parent=119 // pred_check
          %p3837 = pneg %p327
        $region122: #{tpu_custom_call.1} parent=119 // pred_check_branch
          %3839 = sbr.rel (%p3837) target = $region124
        $region123: #{tpu_custom_call.1} parent=119 // pred_region
          %s3840 = sand.u32 %s312, 1
          %s3841 = scalar_lea.sflag [#allocation4], %s3840
          %s3842 = sand.u32 %s312, 1
          %s3843 = smul.addr %s3842, 512
          %s3844 = scalar_lea.vmem [#allocation17], %s3843
          %3846 = dma.done %s3841, 8192
        $region124: #{tpu_custom_call.1} parent=119 // pred_fallthru
          _
        // Predicated region
        $region125: #{tpu_custom_call.1} parent=119 // pred_check
          %p3847 = pneg %p353
        $region126: #{tpu_custom_call.1} parent=119 // pred_check_branch
          %3849 = sbr.rel (%p3847) target = $region128
        $region127: #{tpu_custom_call.1} parent=119 // pred_region
          %s3850 = sand.u32 %s42, 1
          %s3851 = scalar_lea.sflag [#allocation19], %s3850
          %s3852 = sand.u32 %s338, 1
          %s3853 = smul.addr %s3852, 128
          %s3854 = scalar_lea.vmem [#allocation18], %s3853
          %3856 = dma.done %s3851, 2048
        $region128: #{tpu_custom_call.1} parent=119 // pred_fallthru
          _
        // Predicated region
        $region129: #{tpu_custom_call.1} parent=119 // pred_check
          %p3857 = pneg %p379
        $region130: #{tpu_custom_call.1} parent=119 // pred_check_branch
          %3859 = sbr.rel (%p3857) target = $region132
        $region131: #{tpu_custom_call.1} parent=119 // pred_region
          %s3860 = sand.u32 %s42, 1
          %s3861 = scalar_lea.sflag [#allocation19], %s3860
          %s3862 = sand.u32 %s364, 1
          %s3863 = smul.addr %s3862, 128
          %s3864 = scalar_lea.vmem [#allocation20], %s3863
          %3866 = dma.done %s3861, 2048
        $region132: #{tpu_custom_call.1} parent=119 // pred_fallthru
          _
      $region120: #{tpu_custom_call.1} parent=5 // pred_fallthru
        _
    $region6: #{tpu_custom_call.1} parent=1 // loop_footer
      %s40 = sadd.s32 1, %s36
    $region7: #{tpu_custom_call.1} parent=1 // loop_footer_branch
      %35 = sbr.rel target = $region3
    $region8: #{tpu_custom_call.1} parent=1 // loop_exit
      _
    %3867 = vsyncpa [#allocation3], 1
    %s3868 = scalar_lea.sflag [#allocation3], 1
    %3869 = vsyncpa %s3868, 1
    %3870 = vsyncpa [#allocation6], 1
    %s3871 = scalar_lea.sflag [#allocation6], 1
    %3872 = vsyncpa %s3871, 1
    %3873 = vsyncpa [#allocation9], 1
    %3874 = vsyncpa [#allocation12], 1
    %3875 = vsyncpa [#allocation15], 1
    %3876 = vsyncpa [#allocation4], 1
    %s3877 = scalar_lea.sflag [#allocation4], 1
    %3878 = vsyncpa %s3877, 1
    %3879 = vsyncpa [#allocation19], 1
    %s3880 = scalar_lea.sflag [#allocation19], 1
    %3881 = vsyncpa %s3880, 1

</llo_original>
